<compile_context>
chip_gen: v7x
topology: tpu7x:2x2x1
jax: 0.10.0
libtpu: 0.0.40
codegen_flags: <defaults>
</compile_context>

<pallas_src>
import functools
import math

import jax
import jax.numpy as jnp
from jax.experimental import pallas as pl
from jax.experimental.pallas import tpu as pltpu  # noqa: F401  (kept for parity)

# ----------------------------- tiny ViT config ------------------------------
IMG = 16          # image height/width
IN_CH = 3         # RGB, like the PyTorch backbone
PATCH = 8         # patch size  -> 2x2 = 4 patches
HIDDEN = 32       # vit hidden_size
NUM_HEADS = 4     # head_dim = 8
HEAD_DIM = HIDDEN // NUM_HEADS
MLP = 64          # intermediate size
NUM_LAYERS = 2
OUTPUT_DIM = 32   # ViTEncoder(output_dim=32)
LN_EPS = 1e-12    # HF ViT layer_norm_eps
NUM_PATCHES = (IMG // PATCH) ** 2
SEQ = NUM_PATCHES + 1        # +1 CLS token (= 5 real rows)
SEQ_PAD = 8                  # padded to one full sublane tile per sequence
PATCH_DIM = IN_CH * PATCH * PATCH   # 192

# ---- static row offsets inside the two parameter slabs ----
SLAB_W = 3 * HIDDEN                 # 96 lanes (max needed width)
LAYER_W_ROWS = 3 * HIDDEN + MLP     # wqkv(32) + wo(32) + wfc1(32) + wfc2(64) = 160
LAYER_W_BASE = PATCH_DIM            # 192
CLS_W_ROW = LAYER_W_BASE + NUM_LAYERS * LAYER_W_ROWS  # 512
W_SLAB_ROWS = CLS_W_ROW + HIDDEN    # 544

B_POS_ROW = 8                       # pos embedding rows 8..15
LAYER_B_BASE = 16                   # per-layer bias/LN rows start
LAYER_B_ROWS = 8
B_SLAB_ROWS = LAYER_B_BASE + NUM_LAYERS * LAYER_B_ROWS  # 32


# ------------------------------ fused ViT kernel ----------------------------
def _vit_kernel(patches_ref, w_ref, b_ref, o_ref, *, batch):
    f32 = jnp.float32
    scale = 1.0 / math.sqrt(HEAD_DIM)

    def ln(x, g, b):
        mu = jnp.mean(x, axis=-1, keepdims=True)
        var = jnp.mean((x - mu) ** 2, axis=-1, keepdims=True)
        return (x - mu) * jax.lax.rsqrt(var + LN_EPS) * g + b

    # ---- patch embedding (conv-as-matmul) ----
    patch_w = w_ref[0:PATCH_DIM, 0:HIDDEN]                      # (192, 32)
    patch_b = b_ref[0:1, 0:HIDDEN]                              # (1, 32)
    emb = jnp.dot(patches_ref[...], patch_w,
                  preferred_element_type=f32) + patch_b         # (B*NP, 32)

    # ---- CLS token + positional embedding, assembled as a register value ----
    cls_tok = b_ref[1:2, 0:HIDDEN]                              # (1, 32)
    pos = b_ref[B_POS_ROW:B_POS_ROW + SEQ_PAD, 0:HIDDEN]        # (8, 32), pad rows 0
    cls_row = cls_tok + pos[0:1, :]                             # (1, 32)
    pad_rows = jnp.zeros((SEQ_PAD - SEQ, HIDDEN), f32)
    parts = []
    for b in range(batch):
        parts.append(cls_row)
        parts.append(emb[b * NUM_PATCHES:(b + 1) * NUM_PATCHES, :] + pos[1:SEQ, :])
        parts.append(pad_rows)
    h = jnp.concatenate(parts, axis=0)                          # (B*8, 32)

    # key-padding mask: pad key positions (>= SEQ) pushed to -1e30 before softmax
    kmask = jnp.concatenate(
        [jnp.zeros((1, 1, SEQ), f32),
         jnp.full((1, 1, SEQ_PAD - SEQ), -1e30, f32)], axis=-1)  # (1, 1, 8)

    # ---- transformer encoder layers (all weights resident in VMEM) ----
    for l in range(NUM_LAYERS):
        lb = LAYER_W_BASE + l * LAYER_W_ROWS
        bb = LAYER_B_BASE + l * LAYER_B_ROWS
        ln1g = b_ref[bb + 0:bb + 1, 0:HIDDEN]
        ln1b = b_ref[bb + 1:bb + 2, 0:HIDDEN]
        bqkv = b_ref[bb + 2:bb + 3, 0:3 * HIDDEN]
        bo = b_ref[bb + 3:bb + 4, 0:HIDDEN]
        ln2g = b_ref[bb + 4:bb + 5, 0:HIDDEN]
        ln2b = b_ref[bb + 5:bb + 6, 0:HIDDEN]
        bfc1 = b_ref[bb + 6:bb + 7, 0:MLP]
        bfc2 = b_ref[bb + 7:bb + 8, 0:HIDDEN]
        wqkv = w_ref[lb:lb + HIDDEN, 0:3 * HIDDEN]
        wo = w_ref[lb + HIDDEN:lb + 2 * HIDDEN, 0:HIDDEN]
        wfc1 = w_ref[lb + 2 * HIDDEN:lb + 3 * HIDDEN, 0:MLP]
        wfc2 = w_ref[lb + 3 * HIDDEN:lb + 3 * HIDDEN + MLP, 0:HIDDEN]

        # ---- self-attention block (pre-LN), fused QKV projection ----
        x1 = ln(h, ln1g, ln1b)
        qkv = jnp.dot(x1, wqkv, preferred_element_type=f32) + bqkv     # (B*8, 96)
        q = qkv[:, 0:HIDDEN] * scale          # fold 1/sqrt(Dh) into Q
        k = qkv[:, HIDDEN:2 * HIDDEN]
        v = qkv[:, 2 * HIDDEN:3 * HIDDEN]

        ctx_parts = []
        for hh in range(NUM_HEADS):
            c0 = hh * HEAD_DIM
            qh = q[:, c0:c0 + HEAD_DIM].reshape(batch, SEQ_PAD, HEAD_DIM)
            kh = k[:, c0:c0 + HEAD_DIM].reshape(batch, SEQ_PAD, HEAD_DIM)
            vh = v[:, c0:c0 + HEAD_DIM].reshape(batch, SEQ_PAD, HEAD_DIM)
            s = jnp.einsum('bqd,bkd->bqk', qh, kh,
                           preferred_element_type=f32) + kmask          # (B, 8, 8)
            s = s - jnp.max(s, axis=-1, keepdims=True)
            p = jnp.exp(s)
            p = p / jnp.sum(p, axis=-1, keepdims=True)
            ch = jnp.einsum('bqk,bkd->bqd', p, vh,
                            preferred_element_type=f32)                 # (B, 8, 8)
            ctx_parts.append(ch.reshape(batch * SEQ_PAD, HEAD_DIM))
        ctx = jnp.concatenate(ctx_parts, axis=1)                        # (B*8, 32)

        h = h + jnp.dot(ctx, wo, preferred_element_type=f32) + bo

        # ---- MLP block (pre-LN) ----
        x2 = ln(h, ln2g, ln2b)
        # TODO(synk): HF ViT uses exact erf-GELU; tanh-approx GELU here for robust Mosaic lowering.
        m = jax.nn.gelu(jnp.dot(x2, wfc1, preferred_element_type=f32) + bfc1)
        h = h + jnp.dot(m, wfc2, preferred_element_type=f32) + bfc2

    # ---- final LN + replaced classifier: Linear(hidden, output_dim) + ReLU ----
    lnfg = b_ref[2:3, 0:HIDDEN]
    lnfb = b_ref[3:4, 0:HIDDEN]
    hf = ln(h, lnfg, lnfb)
    # CLS rows sit at sublane offsets b*8 -> cheap aligned gather, one batched matmul
    cls_rows = jnp.concatenate(
        [hf[b * SEQ_PAD:b * SEQ_PAD + 1, :] for b in range(batch)], axis=0)  # (B, 32)
    cw = w_ref[CLS_W_ROW:CLS_W_ROW + HIDDEN, 0:OUTPUT_DIM]
    cb = b_ref[4:5, 0:OUTPUT_DIM]
    o_ref[...] = jnp.maximum(
        jnp.dot(cls_rows, cw, preferred_element_type=f32) + cb, 0.0)


# ------------------------------- parameters ---------------------------------
def init_params(key):
    keys = iter(jax.random.split(key, 64))
    nrm = lambda shape, s=0.02: (jax.random.normal(next(keys), shape, jnp.float32) * s)
    params = {
        # patch conv as matmul: flattened conv weight, (C*P*P, HIDDEN)
        "patch_w": nrm((PATCH_DIM, HIDDEN)),
        "patch_b": jnp.zeros((HIDDEN,), jnp.float32),
        "cls_token": nrm((1, 1, HIDDEN)),
        "pos_emb": nrm((1, SEQ, HIDDEN)),
        "ln_f_g": jnp.ones((HIDDEN,), jnp.float32),
        "ln_f_b": jnp.zeros((HIDDEN,), jnp.float32),
        "cls_w": nrm((HIDDEN, OUTPUT_DIM)),
        "cls_b": jnp.zeros((OUTPUT_DIM,), jnp.float32),
        "layers": [],
    }
    for _ in range(NUM_LAYERS):
        params["layers"].append({
            "ln1_g": jnp.ones((HIDDEN,), jnp.float32),
            "ln1_b": jnp.zeros((HIDDEN,), jnp.float32),
            "wq": nrm((HIDDEN, HIDDEN)), "bq": jnp.zeros((HIDDEN,), jnp.float32),
            "wk": nrm((HIDDEN, HIDDEN)), "bk": jnp.zeros((HIDDEN,), jnp.float32),
            "wv": nrm((HIDDEN, HIDDEN)), "bv": jnp.zeros((HIDDEN,), jnp.float32),
            "wo": nrm((HIDDEN, HIDDEN)), "bo": jnp.zeros((HIDDEN,), jnp.float32),
            "ln2_g": jnp.ones((HIDDEN,), jnp.float32),
            "ln2_b": jnp.zeros((HIDDEN,), jnp.float32),
            "w_fc1": nrm((HIDDEN, MLP)), "b_fc1": jnp.zeros((MLP,), jnp.float32),
            "w_fc2": nrm((MLP, HIDDEN)), "b_fc2": jnp.zeros((HIDDEN,), jnp.float32),
        })
    return params


# -------------------- parameter packing: 2 slabs, 2 DMAs --------------------
def _pack_params(params):
    L = params["layers"]

    def padw(w):  # pad weight columns to the common slab width
        return jnp.pad(w, ((0, 0), (0, SLAB_W - w.shape[1])))

    def padv(v):  # vector -> one padded row
        return jnp.pad(v, (0, SLAB_W - v.shape[0]))[None, :]

    # weight slab: patch_w | per-layer [wqkv, wo, wfc1, wfc2] | cls_w
    w_rows = [padw(params["patch_w"])]
    for lp in L:
        w_rows.append(jnp.concatenate([lp["wq"], lp["wk"], lp["wv"]], axis=1))  # (32,96)
        w_rows.append(padw(lp["wo"]))
        w_rows.append(padw(lp["w_fc1"]))
        w_rows.append(padw(lp["w_fc2"]))
    w_rows.append(padw(params["cls_w"]))
    w_slab = jnp.concatenate(w_rows, axis=0)          # (544, 96)

    # bias/LN/embedding slab
    zero_row = jnp.zeros((1, SLAB_W), jnp.float32)
    b_rows = [
        padv(params["patch_b"]),                      # row 0
        padv(params["cls_token"].reshape(HIDDEN)),    # row 1
        padv(params["ln_f_g"]),                       # row 2
        padv(params["ln_f_b"]),                       # row 3
        padv(params["cls_b"]),                        # row 4
        zero_row, zero_row, zero_row,                 # rows 5-7
        jnp.pad(params["pos_emb"].reshape(SEQ, HIDDEN),
                ((0, SEQ_PAD - SEQ), (0, SLAB_W - HIDDEN))),   # rows 8-15
    ]
    for lp in L:                                      # rows 16+ (8 per layer)
        b_rows += [padv(lp["ln1_g"]), padv(lp["ln1_b"]),
                   padv(jnp.concatenate([lp["bq"], lp["bk"], lp["bv"]])),
                   padv(lp["bo"]),
                   padv(lp["ln2_g"]), padv(lp["ln2_b"]),
                   padv(lp["b_fc1"]), padv(lp["b_fc2"])]
    b_slab = jnp.concatenate(b_rows, axis=0)          # (32, 96)
    return w_slab, b_slab


# ------------------------------- forward pass -------------------------------
def vit_encoder_forward(x_nchw, params):
    B, C, H, W = x_nchw.shape
    nH, nW = H // PATCH, W // PATCH
    # patch extraction (== Conv2d stride=kernel=PATCH), flatten in (C, P, P) order
    patches = (x_nchw.reshape(B, C, nH, PATCH, nW, PATCH)
               .transpose(0, 2, 4, 1, 3, 5)
               .reshape(B * nH * nW, C * PATCH * PATCH))

    w_slab, b_slab = _pack_params(params)

    return pl.pallas_call(
        functools.partial(_vit_kernel, batch=B),
        out_shape=jax.ShapeDtypeStruct((B, OUTPUT_DIM), jnp.float32),
    )(patches, w_slab, b_slab)


# ---------------------------------- main -------------------------------------
if __name__ == "__main__":
    key = jax.random.PRNGKey(0)
    kx, kp = jax.random.split(key)
    x = jax.random.normal(kx, (2, IN_CH, IMG, IMG), dtype=jnp.float32)  # NCHW like PyTorch
    params = init_params(kp)

    logits = jax.jit(vit_encoder_forward)(x, params)
    logits = jax.block_until_ready(logits)

    assert logits.shape == (2, OUTPUT_DIM), logits.shape
    assert bool(jnp.all(logits >= 0.0))  # ReLU head
    assert bool(jnp.all(jnp.isfinite(logits)))
    print("KERNEL_OK")
</pallas_src>

<mosaic_0001>
module attributes {stable_mosaic.version = 11 : i64} {
  func.func @_vit_kernel(%arg0: memref<8x192xf32, #tpu.memory_space<vmem>>, %arg1: memref<544x96xf32, #tpu.memory_space<vmem>>, %arg2: memref<32x96xf32, #tpu.memory_space<vmem>>, %arg3: memref<2x32xf32, #tpu.memory_space<vmem>>) attributes {dimension_semantics = [], scalar_prefetch = 0 : i64, scratch_operands = 0 : i64, tpu.core_type = #tpu.core_type<tc>} {
    %c0 = arith.constant 0 : index
    %c0_0 = arith.constant 0 : index
    %0 = vector.load %arg1[%c0, %c0_0] : memref<544x96xf32, #tpu.memory_space<vmem>>, vector<192x32xf32>
    %c0_1 = arith.constant 0 : index
    %c0_2 = arith.constant 0 : index
    %1 = vector.load %arg2[%c0_1, %c0_2] : memref<32x96xf32, #tpu.memory_space<vmem>>, vector<1x32xf32>
    %c0_3 = arith.constant 0 : index
    %c0_4 = arith.constant 0 : index
    %2 = vector.load %arg0[%c0_3, %c0_4] : memref<8x192xf32, #tpu.memory_space<vmem>>, vector<8x192xf32>
    %cst = arith.constant dense<0.000000e+00> : vector<8x32xf32>
    %3 = tpu.matmul %2, %0, %cst {dimension_numbers = #tpu.dot_dimension_numbers<[1], [0], [0], [1], [0, 0, 1, 1], [], []>} : vector<8x192xf32>, vector<192x32xf32>, vector<8x32xf32> -> vector<8x32xf32>
    %4 = vector.broadcast %1 : vector<1x32xf32> to vector<8x32xf32>
    %5 = arith.addf %3, %4 : vector<8x32xf32>
    %c1 = arith.constant 1 : index
    %c0_5 = arith.constant 0 : index
    %6 = vector.load %arg2[%c1, %c0_5] : memref<32x96xf32, #tpu.memory_space<vmem>>, vector<1x32xf32>
    %c8 = arith.constant 8 : index
    %c0_6 = arith.constant 0 : index
    %7 = vector.load %arg2[%c8, %c0_6] : memref<32x96xf32, #tpu.memory_space<vmem>>, vector<8x32xf32>
    %8 = vector.extract_strided_slice %7 {offsets = [0, 0], sizes = [1, 32], strides = [1, 1]} : vector<8x32xf32> to vector<1x32xf32>
    %9 = arith.addf %6, %8 : vector<1x32xf32>
    %cst_7 = arith.constant 0.000000e+00 : f32
    %10 = vector.broadcast %cst_7 : f32 to vector<3x32xf32>
    %11 = vector.extract_strided_slice %5 {offsets = [0, 0], sizes = [4, 32], strides = [1, 1]} : vector<8x32xf32> to vector<4x32xf32>
    %12 = vector.extract_strided_slice %7 {offsets = [1, 0], sizes = [4, 32], strides = [1, 1]} : vector<8x32xf32> to vector<4x32xf32>
    %13 = arith.addf %11, %12 : vector<4x32xf32>
    %14 = vector.extract_strided_slice %5 {offsets = [4, 0], sizes = [4, 32], strides = [1, 1]} : vector<8x32xf32> to vector<4x32xf32>
    %15 = vector.extract_strided_slice %7 {offsets = [1, 0], sizes = [4, 32], strides = [1, 1]} : vector<8x32xf32> to vector<4x32xf32>
    %16 = arith.addf %14, %15 : vector<4x32xf32>
    %17 = tpu.concatenate %9, %13, %10, %9, %16, %10 in 0 : vector<1x32xf32>, vector<4x32xf32>, vector<3x32xf32>, vector<1x32xf32>, vector<4x32xf32>, vector<3x32xf32> -> vector<16x32xf32>
    %cst_8 = arith.constant 0.000000e+00 : f32
    %18 = vector.broadcast %cst_8 : f32 to vector<1x1x5xf32>
    %cst_9 = arith.constant -1.000000e+30 : f32
    %19 = vector.broadcast %cst_9 : f32 to vector<1x1x3xf32>
    %20 = tpu.concatenate %18, %19 in 2 : vector<1x1x5xf32>, vector<1x1x3xf32> -> vector<1x1x8xf32>
    %c16 = arith.constant 16 : index
    %c0_10 = arith.constant 0 : index
    %21 = vector.load %arg2[%c16, %c0_10] : memref<32x96xf32, #tpu.memory_space<vmem>>, vector<1x32xf32>
    %c17 = arith.constant 17 : index
    %c0_11 = arith.constant 0 : index
    %22 = vector.load %arg2[%c17, %c0_11] : memref<32x96xf32, #tpu.memory_space<vmem>>, vector<1x32xf32>
    %c18 = arith.constant 18 : index
    %c0_12 = arith.constant 0 : index
    %23 = vector.load %arg2[%c18, %c0_12] : memref<32x96xf32, #tpu.memory_space<vmem>>, vector<1x96xf32>
    %c19 = arith.constant 19 : index
    %c0_13 = arith.constant 0 : index
    %24 = vector.load %arg2[%c19, %c0_13] : memref<32x96xf32, #tpu.memory_space<vmem>>, vector<1x32xf32>
    %c20 = arith.constant 20 : index
    %c0_14 = arith.constant 0 : index
    %25 = vector.load %arg2[%c20, %c0_14] : memref<32x96xf32, #tpu.memory_space<vmem>>, vector<1x32xf32>
    %c21 = arith.constant 21 : index
    %c0_15 = arith.constant 0 : index
    %26 = vector.load %arg2[%c21, %c0_15] : memref<32x96xf32, #tpu.memory_space<vmem>>, vector<1x32xf32>
    %c22 = arith.constant 22 : index
    %c0_16 = arith.constant 0 : index
    %27 = vector.load %arg2[%c22, %c0_16] : memref<32x96xf32, #tpu.memory_space<vmem>>, vector<1x64xf32>
    %c23 = arith.constant 23 : index
    %c0_17 = arith.constant 0 : index
    %28 = vector.load %arg2[%c23, %c0_17] : memref<32x96xf32, #tpu.memory_space<vmem>>, vector<1x32xf32>
    %c192 = arith.constant 192 : index
    %c0_18 = arith.constant 0 : index
    %29 = vector.load %arg1[%c192, %c0_18] : memref<544x96xf32, #tpu.memory_space<vmem>>, vector<32x96xf32>
    %c224 = arith.constant 224 : index
    %c0_19 = arith.constant 0 : index
    %30 = vector.load %arg1[%c224, %c0_19] : memref<544x96xf32, #tpu.memory_space<vmem>>, vector<32x32xf32>
    %c256 = arith.constant 256 : index
    %c0_20 = arith.constant 0 : index
    %31 = vector.load %arg1[%c256, %c0_20] : memref<544x96xf32, #tpu.memory_space<vmem>>, vector<32x64xf32>
    %c288 = arith.constant 288 : index
    %c0_21 = arith.constant 0 : index
    %32 = vector.load %arg1[%c288, %c0_21] : memref<544x96xf32, #tpu.memory_space<vmem>>, vector<64x32xf32>
    %cst_22 = arith.constant dense<0.000000e+00> : vector<16xf32>
    %33 = vector.multi_reduction <add>, %17, %cst_22 [1] : vector<16x32xf32> to vector<16xf32>
    %34 = vector.shape_cast %33 : vector<16xf32> to vector<16x1xf32>
    %cst_23 = arith.constant 3.200000e+01 : f32
    %35 = vector.broadcast %cst_23 : f32 to vector<16x1xf32>
    %36 = arith.divf %34, %35 : vector<16x1xf32>
    %37 = vector.broadcast %36 : vector<16x1xf32> to vector<16x32xf32>
    %38 = arith.subf %17, %37 : vector<16x32xf32>
    %39 = arith.mulf %38, %38 : vector<16x32xf32>
    %cst_24 = arith.constant dense<0.000000e+00> : vector<16xf32>
    %40 = vector.multi_reduction <add>, %39, %cst_24 [1] : vector<16x32xf32> to vector<16xf32>
    %41 = vector.shape_cast %40 : vector<16xf32> to vector<16x1xf32>
    %cst_25 = arith.constant 3.200000e+01 : f32
    %42 = vector.broadcast %cst_25 : f32 to vector<16x1xf32>
    %43 = arith.divf %41, %42 : vector<16x1xf32>
    %44 = vector.broadcast %36 : vector<16x1xf32> to vector<16x32xf32>
    %45 = arith.subf %17, %44 : vector<16x32xf32>
    %cst_26 = arith.constant 9.99999996E-13 : f32
    %46 = vector.broadcast %cst_26 : f32 to vector<16x1xf32>
    %47 = arith.addf %43, %46 : vector<16x1xf32>
    %48 = math.rsqrt %47 : vector<16x1xf32>
    %49 = vector.broadcast %48 : vector<16x1xf32> to vector<16x32xf32>
    %50 = arith.mulf %45, %49 : vector<16x32xf32>
    %51 = vector.broadcast %21 : vector<1x32xf32> to vector<16x32xf32>
    %52 = arith.mulf %50, %51 : vector<16x32xf32>
    %53 = vector.broadcast %22 : vector<1x32xf32> to vector<16x32xf32>
    %54 = arith.addf %52, %53 : vector<16x32xf32>
    %cst_27 = arith.constant dense<0.000000e+00> : vector<16x96xf32>
    %55 = tpu.matmul %54, %29, %cst_27 {dimension_numbers = #tpu.dot_dimension_numbers<[1], [0], [0], [1], [0, 0, 1, 1], [], []>} : vector<16x32xf32>, vector<32x96xf32>, vector<16x96xf32> -> vector<16x96xf32>
    %56 = vector.broadcast %23 : vector<1x96xf32> to vector<16x96xf32>
    %57 = arith.addf %55, %56 : vector<16x96xf32>
    %58 = vector.extract_strided_slice %57 {offsets = [0, 0], sizes = [16, 32], strides = [1, 1]} : vector<16x96xf32> to vector<16x32xf32>
    %cst_28 = arith.constant 0.353553385 : f32
    %59 = vector.broadcast %cst_28 : f32 to vector<16x32xf32>
    %60 = arith.mulf %58, %59 : vector<16x32xf32>
    %61 = vector.extract_strided_slice %57 {offsets = [0, 32], sizes = [16, 32], strides = [1, 1]} : vector<16x96xf32> to vector<16x32xf32>
    %62 = vector.extract_strided_slice %57 {offsets = [0, 64], sizes = [16, 32], strides = [1, 1]} : vector<16x96xf32> to vector<16x32xf32>
    %63 = vector.extract_strided_slice %60 {offsets = [0, 0], sizes = [16, 8], strides = [1, 1]} : vector<16x32xf32> to vector<16x8xf32>
    %64 = vector.shape_cast %63 : vector<16x8xf32> to vector<2x8x8xf32>
    %65 = vector.extract_strided_slice %61 {offsets = [0, 0], sizes = [16, 8], strides = [1, 1]} : vector<16x32xf32> to vector<16x8xf32>
    %66 = vector.shape_cast %65 : vector<16x8xf32> to vector<2x8x8xf32>
    %67 = vector.extract_strided_slice %62 {offsets = [0, 0], sizes = [16, 8], strides = [1, 1]} : vector<16x32xf32> to vector<16x8xf32>
    %68 = vector.shape_cast %67 : vector<16x8xf32> to vector<2x8x8xf32>
    "tpu.trace_start"() <{level = 10 : i32, message = "bqd,bkd->bqk"}> : () -> ()
    %cst_29 = arith.constant dense<0.000000e+00> : vector<2x8x8xf32>
    %69 = tpu.matmul %64, %66, %cst_29 {dimension_numbers = #tpu.dot_dimension_numbers<[2], [2], [1], [1], [0, 0, 0, 1, 1, 1], [0], [0]>} : vector<2x8x8xf32>, vector<2x8x8xf32>, vector<2x8x8xf32> -> vector<2x8x8xf32>
    "tpu.trace_stop"() : () -> ()
    %70 = vector.broadcast %20 : vector<1x1x8xf32> to vector<2x8x8xf32>
    %71 = arith.addf %69, %70 : vector<2x8x8xf32>
    %cst_30 = arith.constant dense<0xFF800000> : vector<2x8xf32>
    %72 = vector.multi_reduction <maximumf>, %71, %cst_30 [2] : vector<2x8x8xf32> to vector<2x8xf32>
    %73 = vector.shape_cast %72 : vector<2x8xf32> to vector<2x8x1xf32>
    %74 = vector.broadcast %73 : vector<2x8x1xf32> to vector<2x8x8xf32>
    %75 = arith.subf %71, %74 : vector<2x8x8xf32>
    %76 = math.exp %75 : vector<2x8x8xf32>
    %cst_31 = arith.constant dense<0.000000e+00> : vector<2x8xf32>
    %77 = vector.multi_reduction <add>, %76, %cst_31 [2] : vector<2x8x8xf32> to vector<2x8xf32>
    %78 = vector.shape_cast %77 : vector<2x8xf32> to vector<2x8x1xf32>
    %79 = vector.broadcast %78 : vector<2x8x1xf32> to vector<2x8x8xf32>
    %80 = arith.divf %76, %79 : vector<2x8x8xf32>
    "tpu.trace_start"() <{level = 10 : i32, message = "bqk,bkd->bqd"}> : () -> ()
    %cst_32 = arith.constant dense<0.000000e+00> : vector<2x8x8xf32>
    %81 = tpu.matmul %80, %68, %cst_32 {dimension_numbers = #tpu.dot_dimension_numbers<[2], [1], [1], [2], [0, 0, 0, 1, 1, 2], [0], [0]>} : vector<2x8x8xf32>, vector<2x8x8xf32>, vector<2x8x8xf32> -> vector<2x8x8xf32>
    "tpu.trace_stop"() : () -> ()
    %82 = vector.shape_cast %81 : vector<2x8x8xf32> to vector<16x8xf32>
    %83 = vector.extract_strided_slice %60 {offsets = [0, 8], sizes = [16, 8], strides = [1, 1]} : vector<16x32xf32> to vector<16x8xf32>
    %84 = vector.shape_cast %83 : vector<16x8xf32> to vector<2x8x8xf32>
    %85 = vector.extract_strided_slice %61 {offsets = [0, 8], sizes = [16, 8], strides = [1, 1]} : vector<16x32xf32> to vector<16x8xf32>
    %86 = vector.shape_cast %85 : vector<16x8xf32> to vector<2x8x8xf32>
    %87 = vector.extract_strided_slice %62 {offsets = [0, 8], sizes = [16, 8], strides = [1, 1]} : vector<16x32xf32> to vector<16x8xf32>
    %88 = vector.shape_cast %87 : vector<16x8xf32> to vector<2x8x8xf32>
    "tpu.trace_start"() <{level = 10 : i32, message = "bqd,bkd->bqk"}> : () -> ()
    %cst_33 = arith.constant dense<0.000000e+00> : vector<2x8x8xf32>
    %89 = tpu.matmul %84, %86, %cst_33 {dimension_numbers = #tpu.dot_dimension_numbers<[2], [2], [1], [1], [0, 0, 0, 1, 1, 1], [0], [0]>} : vector<2x8x8xf32>, vector<2x8x8xf32>, vector<2x8x8xf32> -> vector<2x8x8xf32>
    "tpu.trace_stop"() : () -> ()
    %90 = vector.broadcast %20 : vector<1x1x8xf32> to vector<2x8x8xf32>
    %91 = arith.addf %89, %90 : vector<2x8x8xf32>
    %cst_34 = arith.constant dense<0xFF800000> : vector<2x8xf32>
    %92 = vector.multi_reduction <maximumf>, %91, %cst_34 [2] : vector<2x8x8xf32> to vector<2x8xf32>
    %93 = vector.shape_cast %92 : vector<2x8xf32> to vector<2x8x1xf32>
    %94 = vector.broadcast %93 : vector<2x8x1xf32> to vector<2x8x8xf32>
    %95 = arith.subf %91, %94 : vector<2x8x8xf32>
    %96 = math.exp %95 : vector<2x8x8xf32>
    %cst_35 = arith.constant dense<0.000000e+00> : vector<2x8xf32>
    %97 = vector.multi_reduction <add>, %96, %cst_35 [2] : vector<2x8x8xf32> to vector<2x8xf32>
    %98 = vector.shape_cast %97 : vector<2x8xf32> to vector<2x8x1xf32>
    %99 = vector.broadcast %98 : vector<2x8x1xf32> to vector<2x8x8xf32>
    %100 = arith.divf %96, %99 : vector<2x8x8xf32>
    "tpu.trace_start"() <{level = 10 : i32, message = "bqk,bkd->bqd"}> : () -> ()
    %cst_36 = arith.constant dense<0.000000e+00> : vector<2x8x8xf32>
    %101 = tpu.matmul %100, %88, %cst_36 {dimension_numbers = #tpu.dot_dimension_numbers<[2], [1], [1], [2], [0, 0, 0, 1, 1, 2], [0], [0]>} : vector<2x8x8xf32>, vector<2x8x8xf32>, vector<2x8x8xf32> -> vector<2x8x8xf32>
    "tpu.trace_stop"() : () -> ()
    %102 = vector.shape_cast %101 : vector<2x8x8xf32> to vector<16x8xf32>
    %103 = vector.extract_strided_slice %60 {offsets = [0, 16], sizes = [16, 8], strides = [1, 1]} : vector<16x32xf32> to vector<16x8xf32>
    %104 = vector.shape_cast %103 : vector<16x8xf32> to vector<2x8x8xf32>
    %105 = vector.extract_strided_slice %61 {offsets = [0, 16], sizes = [16, 8], strides = [1, 1]} : vector<16x32xf32> to vector<16x8xf32>
    %106 = vector.shape_cast %105 : vector<16x8xf32> to vector<2x8x8xf32>
    %107 = vector.extract_strided_slice %62 {offsets = [0, 16], sizes = [16, 8], strides = [1, 1]} : vector<16x32xf32> to vector<16x8xf32>
    %108 = vector.shape_cast %107 : vector<16x8xf32> to vector<2x8x8xf32>
    "tpu.trace_start"() <{level = 10 : i32, message = "bqd,bkd->bqk"}> : () -> ()
    %cst_37 = arith.constant dense<0.000000e+00> : vector<2x8x8xf32>
    %109 = tpu.matmul %104, %106, %cst_37 {dimension_numbers = #tpu.dot_dimension_numbers<[2], [2], [1], [1], [0, 0, 0, 1, 1, 1], [0], [0]>} : vector<2x8x8xf32>, vector<2x8x8xf32>, vector<2x8x8xf32> -> vector<2x8x8xf32>
    "tpu.trace_stop"() : () -> ()
    %110 = vector.broadcast %20 : vector<1x1x8xf32> to vector<2x8x8xf32>
    %111 = arith.addf %109, %110 : vector<2x8x8xf32>
    %cst_38 = arith.constant dense<0xFF800000> : vector<2x8xf32>
    %112 = vector.multi_reduction <maximumf>, %111, %cst_38 [2] : vector<2x8x8xf32> to vector<2x8xf32>
    %113 = vector.shape_cast %112 : vector<2x8xf32> to vector<2x8x1xf32>
    %114 = vector.broadcast %113 : vector<2x8x1xf32> to vector<2x8x8xf32>
    %115 = arith.subf %111, %114 : vector<2x8x8xf32>
    %116 = math.exp %115 : vector<2x8x8xf32>
    %cst_39 = arith.constant dense<0.000000e+00> : vector<2x8xf32>
    %117 = vector.multi_reduction <add>, %116, %cst_39 [2] : vector<2x8x8xf32> to vector<2x8xf32>
    %118 = vector.shape_cast %117 : vector<2x8xf32> to vector<2x8x1xf32>
    %119 = vector.broadcast %118 : vector<2x8x1xf32> to vector<2x8x8xf32>
    %120 = arith.divf %116, %119 : vector<2x8x8xf32>
    "tpu.trace_start"() <{level = 10 : i32, message = "bqk,bkd->bqd"}> : () -> ()
    %cst_40 = arith.constant dense<0.000000e+00> : vector<2x8x8xf32>
    %121 = tpu.matmul %120, %108, %cst_40 {dimension_numbers = #tpu.dot_dimension_numbers<[2], [1], [1], [2], [0, 0, 0, 1, 1, 2], [0], [0]>} : vector<2x8x8xf32>, vector<2x8x8xf32>, vector<2x8x8xf32> -> vector<2x8x8xf32>
    "tpu.trace_stop"() : () -> ()
    %122 = vector.shape_cast %121 : vector<2x8x8xf32> to vector<16x8xf32>
    %123 = vector.extract_strided_slice %60 {offsets = [0, 24], sizes = [16, 8], strides = [1, 1]} : vector<16x32xf32> to vector<16x8xf32>
    %124 = vector.shape_cast %123 : vector<16x8xf32> to vector<2x8x8xf32>
    %125 = vector.extract_strided_slice %61 {offsets = [0, 24], sizes = [16, 8], strides = [1, 1]} : vector<16x32xf32> to vector<16x8xf32>
    %126 = vector.shape_cast %125 : vector<16x8xf32> to vector<2x8x8xf32>
    %127 = vector.extract_strided_slice %62 {offsets = [0, 24], sizes = [16, 8], strides = [1, 1]} : vector<16x32xf32> to vector<16x8xf32>
    %128 = vector.shape_cast %127 : vector<16x8xf32> to vector<2x8x8xf32>
    "tpu.trace_start"() <{level = 10 : i32, message = "bqd,bkd->bqk"}> : () -> ()
    %cst_41 = arith.constant dense<0.000000e+00> : vector<2x8x8xf32>
    %129 = tpu.matmul %124, %126, %cst_41 {dimension_numbers = #tpu.dot_dimension_numbers<[2], [2], [1], [1], [0, 0, 0, 1, 1, 1], [0], [0]>} : vector<2x8x8xf32>, vector<2x8x8xf32>, vector<2x8x8xf32> -> vector<2x8x8xf32>
    "tpu.trace_stop"() : () -> ()
    %130 = vector.broadcast %20 : vector<1x1x8xf32> to vector<2x8x8xf32>
    %131 = arith.addf %129, %130 : vector<2x8x8xf32>
    %cst_42 = arith.constant dense<0xFF800000> : vector<2x8xf32>
    %132 = vector.multi_reduction <maximumf>, %131, %cst_42 [2] : vector<2x8x8xf32> to vector<2x8xf32>
    %133 = vector.shape_cast %132 : vector<2x8xf32> to vector<2x8x1xf32>
    %134 = vector.broadcast %133 : vector<2x8x1xf32> to vector<2x8x8xf32>
    %135 = arith.subf %131, %134 : vector<2x8x8xf32>
    %136 = math.exp %135 : vector<2x8x8xf32>
    %cst_43 = arith.constant dense<0.000000e+00> : vector<2x8xf32>
    %137 = vector.multi_reduction <add>, %136, %cst_43 [2] : vector<2x8x8xf32> to vector<2x8xf32>
    %138 = vector.shape_cast %137 : vector<2x8xf32> to vector<2x8x1xf32>
    %139 = vector.broadcast %138 : vector<2x8x1xf32> to vector<2x8x8xf32>
    %140 = arith.divf %136, %139 : vector<2x8x8xf32>
    "tpu.trace_start"() <{level = 10 : i32, message = "bqk,bkd->bqd"}> : () -> ()
    %cst_44 = arith.constant dense<0.000000e+00> : vector<2x8x8xf32>
    %141 = tpu.matmul %140, %128, %cst_44 {dimension_numbers = #tpu.dot_dimension_numbers<[2], [1], [1], [2], [0, 0, 0, 1, 1, 2], [0], [0]>} : vector<2x8x8xf32>, vector<2x8x8xf32>, vector<2x8x8xf32> -> vector<2x8x8xf32>
    "tpu.trace_stop"() : () -> ()
    %142 = vector.shape_cast %141 : vector<2x8x8xf32> to vector<16x8xf32>
    %143 = tpu.concatenate %82, %102, %122, %142 in 1 : vector<16x8xf32>, vector<16x8xf32>, vector<16x8xf32>, vector<16x8xf32> -> vector<16x32xf32>
    %cst_45 = arith.constant dense<0.000000e+00> : vector<16x32xf32>
    %144 = tpu.matmul %143, %30, %cst_45 {dimension_numbers = #tpu.dot_dimension_numbers<[1], [0], [0], [1], [0, 0, 1, 1], [], []>} : vector<16x32xf32>, vector<32x32xf32>, vector<16x32xf32> -> vector<16x32xf32>
    %145 = arith.addf %17, %144 : vector<16x32xf32>
    %146 = vector.broadcast %24 : vector<1x32xf32> to vector<16x32xf32>
    %147 = arith.addf %145, %146 : vector<16x32xf32>
    %cst_46 = arith.constant dense<0.000000e+00> : vector<16xf32>
    %148 = vector.multi_reduction <add>, %147, %cst_46 [1] : vector<16x32xf32> to vector<16xf32>
    %149 = vector.shape_cast %148 : vector<16xf32> to vector<16x1xf32>
    %cst_47 = arith.constant 3.200000e+01 : f32
    %150 = vector.broadcast %cst_47 : f32 to vector<16x1xf32>
    %151 = arith.divf %149, %150 : vector<16x1xf32>
    %152 = vector.broadcast %151 : vector<16x1xf32> to vector<16x32xf32>
    %153 = arith.subf %147, %152 : vector<16x32xf32>
    %154 = arith.mulf %153, %153 : vector<16x32xf32>
    %cst_48 = arith.constant dense<0.000000e+00> : vector<16xf32>
    %155 = vector.multi_reduction <add>, %154, %cst_48 [1] : vector<16x32xf32> to vector<16xf32>
    %156 = vector.shape_cast %155 : vector<16xf32> to vector<16x1xf32>
    %cst_49 = arith.constant 3.200000e+01 : f32
    %157 = vector.broadcast %cst_49 : f32 to vector<16x1xf32>
    %158 = arith.divf %156, %157 : vector<16x1xf32>
    %159 = vector.broadcast %151 : vector<16x1xf32> to vector<16x32xf32>
    %160 = arith.subf %147, %159 : vector<16x32xf32>
    %cst_50 = arith.constant 9.99999996E-13 : f32
    %161 = vector.broadcast %cst_50 : f32 to vector<16x1xf32>
    %162 = arith.addf %158, %161 : vector<16x1xf32>
    %163 = math.rsqrt %162 : vector<16x1xf32>
    %164 = vector.broadcast %163 : vector<16x1xf32> to vector<16x32xf32>
    %165 = arith.mulf %160, %164 : vector<16x32xf32>
    %166 = vector.broadcast %25 : vector<1x32xf32> to vector<16x32xf32>
    %167 = arith.mulf %165, %166 : vector<16x32xf32>
    %168 = vector.broadcast %26 : vector<1x32xf32> to vector<16x32xf32>
    %169 = arith.addf %167, %168 : vector<16x32xf32>
    %cst_51 = arith.constant dense<0.000000e+00> : vector<16x64xf32>
    %170 = tpu.matmul %169, %31, %cst_51 {dimension_numbers = #tpu.dot_dimension_numbers<[1], [0], [0], [1], [0, 0, 1, 1], [], []>} : vector<16x32xf32>, vector<32x64xf32>, vector<16x64xf32> -> vector<16x64xf32>
    %171 = vector.broadcast %27 : vector<1x64xf32> to vector<16x64xf32>
    %172 = arith.addf %170, %171 : vector<16x64xf32>
    %173 = arith.mulf %172, %172 : vector<16x64xf32>
    %174 = arith.mulf %172, %173 : vector<16x64xf32>
    %cst_52 = arith.constant 4.471500e-02 : f32
    %175 = vector.broadcast %cst_52 : f32 to vector<16x64xf32>
    %176 = arith.mulf %175, %174 : vector<16x64xf32>
    %177 = arith.addf %172, %176 : vector<16x64xf32>
    %cst_53 = arith.constant 0.797884583 : f32
    %178 = vector.broadcast %cst_53 : f32 to vector<16x64xf32>
    %179 = arith.mulf %178, %177 : vector<16x64xf32>
    %180 = math.tanh %179 : vector<16x64xf32>
    %cst_54 = arith.constant 1.000000e+00 : f32
    %181 = vector.broadcast %cst_54 : f32 to vector<16x64xf32>
    %182 = arith.addf %181, %180 : vector<16x64xf32>
    %cst_55 = arith.constant 5.000000e-01 : f32
    %183 = vector.broadcast %cst_55 : f32 to vector<16x64xf32>
    %184 = arith.mulf %183, %182 : vector<16x64xf32>
    %185 = arith.mulf %172, %184 : vector<16x64xf32>
    %cst_56 = arith.constant dense<0.000000e+00> : vector<16x32xf32>
    %186 = tpu.matmul %185, %32, %cst_56 {dimension_numbers = #tpu.dot_dimension_numbers<[1], [0], [0], [1], [0, 0, 1, 1], [], []>} : vector<16x64xf32>, vector<64x32xf32>, vector<16x32xf32> -> vector<16x32xf32>
    %187 = arith.addf %147, %186 : vector<16x32xf32>
    %188 = vector.broadcast %28 : vector<1x32xf32> to vector<16x32xf32>
    %189 = arith.addf %187, %188 : vector<16x32xf32>
    %c24 = arith.constant 24 : index
    %c0_57 = arith.constant 0 : index
    %190 = vector.load %arg2[%c24, %c0_57] : memref<32x96xf32, #tpu.memory_space<vmem>>, vector<1x32xf32>
    %c25 = arith.constant 25 : index
    %c0_58 = arith.constant 0 : index
    %191 = vector.load %arg2[%c25, %c0_58] : memref<32x96xf32, #tpu.memory_space<vmem>>, vector<1x32xf32>
    %c26 = arith.constant 26 : index
    %c0_59 = arith.constant 0 : index
    %192 = vector.load %arg2[%c26, %c0_59] : memref<32x96xf32, #tpu.memory_space<vmem>>, vector<1x96xf32>
    %c27 = arith.constant 27 : index
    %c0_60 = arith.constant 0 : index
    %193 = vector.load %arg2[%c27, %c0_60] : memref<32x96xf32, #tpu.memory_space<vmem>>, vector<1x32xf32>
    %c28 = arith.constant 28 : index
    %c0_61 = arith.constant 0 : index
    %194 = vector.load %arg2[%c28, %c0_61] : memref<32x96xf32, #tpu.memory_space<vmem>>, vector<1x32xf32>
    %c29 = arith.constant 29 : index
    %c0_62 = arith.constant 0 : index
    %195 = vector.load %arg2[%c29, %c0_62] : memref<32x96xf32, #tpu.memory_space<vmem>>, vector<1x32xf32>
    %c30 = arith.constant 30 : index
    %c0_63 = arith.constant 0 : index
    %196 = vector.load %arg2[%c30, %c0_63] : memref<32x96xf32, #tpu.memory_space<vmem>>, vector<1x64xf32>
    %c31 = arith.constant 31 : index
    %c0_64 = arith.constant 0 : index
    %197 = vector.load %arg2[%c31, %c0_64] : memref<32x96xf32, #tpu.memory_space<vmem>>, vector<1x32xf32>
    %c352 = arith.constant 352 : index
    %c0_65 = arith.constant 0 : index
    %198 = vector.load %arg1[%c352, %c0_65] : memref<544x96xf32, #tpu.memory_space<vmem>>, vector<32x96xf32>
    %c384 = arith.constant 384 : index
    %c0_66 = arith.constant 0 : index
    %199 = vector.load %arg1[%c384, %c0_66] : memref<544x96xf32, #tpu.memory_space<vmem>>, vector<32x32xf32>
    %c416 = arith.constant 416 : index
    %c0_67 = arith.constant 0 : index
    %200 = vector.load %arg1[%c416, %c0_67] : memref<544x96xf32, #tpu.memory_space<vmem>>, vector<32x64xf32>
    %c448 = arith.constant 448 : index
    %c0_68 = arith.constant 0 : index
    %201 = vector.load %arg1[%c448, %c0_68] : memref<544x96xf32, #tpu.memory_space<vmem>>, vector<64x32xf32>
    %cst_69 = arith.constant dense<0.000000e+00> : vector<16xf32>
    %202 = vector.multi_reduction <add>, %189, %cst_69 [1] : vector<16x32xf32> to vector<16xf32>
    %203 = vector.shape_cast %202 : vector<16xf32> to vector<16x1xf32>
    %cst_70 = arith.constant 3.200000e+01 : f32
    %204 = vector.broadcast %cst_70 : f32 to vector<16x1xf32>
    %205 = arith.divf %203, %204 : vector<16x1xf32>
    %206 = vector.broadcast %205 : vector<16x1xf32> to vector<16x32xf32>
    %207 = arith.subf %189, %206 : vector<16x32xf32>
    %208 = arith.mulf %207, %207 : vector<16x32xf32>
    %cst_71 = arith.constant dense<0.000000e+00> : vector<16xf32>
    %209 = vector.multi_reduction <add>, %208, %cst_71 [1] : vector<16x32xf32> to vector<16xf32>
    %210 = vector.shape_cast %209 : vector<16xf32> to vector<16x1xf32>
    %cst_72 = arith.constant 3.200000e+01 : f32
    %211 = vector.broadcast %cst_72 : f32 to vector<16x1xf32>
    %212 = arith.divf %210, %211 : vector<16x1xf32>
    %213 = vector.broadcast %205 : vector<16x1xf32> to vector<16x32xf32>
    %214 = arith.subf %189, %213 : vector<16x32xf32>
    %cst_73 = arith.constant 9.99999996E-13 : f32
    %215 = vector.broadcast %cst_73 : f32 to vector<16x1xf32>
    %216 = arith.addf %212, %215 : vector<16x1xf32>
    %217 = math.rsqrt %216 : vector<16x1xf32>
    %218 = vector.broadcast %217 : vector<16x1xf32> to vector<16x32xf32>
    %219 = arith.mulf %214, %218 : vector<16x32xf32>
    %220 = vector.broadcast %190 : vector<1x32xf32> to vector<16x32xf32>
    %221 = arith.mulf %219, %220 : vector<16x32xf32>
    %222 = vector.broadcast %191 : vector<1x32xf32> to vector<16x32xf32>
    %223 = arith.addf %221, %222 : vector<16x32xf32>
    %cst_74 = arith.constant dense<0.000000e+00> : vector<16x96xf32>
    %224 = tpu.matmul %223, %198, %cst_74 {dimension_numbers = #tpu.dot_dimension_numbers<[1], [0], [0], [1], [0, 0, 1, 1], [], []>} : vector<16x32xf32>, vector<32x96xf32>, vector<16x96xf32> -> vector<16x96xf32>
    %225 = vector.broadcast %192 : vector<1x96xf32> to vector<16x96xf32>
    %226 = arith.addf %224, %225 : vector<16x96xf32>
    %227 = vector.extract_strided_slice %226 {offsets = [0, 0], sizes = [16, 32], strides = [1, 1]} : vector<16x96xf32> to vector<16x32xf32>
    %cst_75 = arith.constant 0.353553385 : f32
    %228 = vector.broadcast %cst_75 : f32 to vector<16x32xf32>
    %229 = arith.mulf %227, %228 : vector<16x32xf32>
    %230 = vector.extract_strided_slice %226 {offsets = [0, 32], sizes = [16, 32], strides = [1, 1]} : vector<16x96xf32> to vector<16x32xf32>
    %231 = vector.extract_strided_slice %226 {offsets = [0, 64], sizes = [16, 32], strides = [1, 1]} : vector<16x96xf32> to vector<16x32xf32>
    %232 = vector.extract_strided_slice %229 {offsets = [0, 0], sizes = [16, 8], strides = [1, 1]} : vector<16x32xf32> to vector<16x8xf32>
    %233 = vector.shape_cast %232 : vector<16x8xf32> to vector<2x8x8xf32>
    %234 = vector.extract_strided_slice %230 {offsets = [0, 0], sizes = [16, 8], strides = [1, 1]} : vector<16x32xf32> to vector<16x8xf32>
    %235 = vector.shape_cast %234 : vector<16x8xf32> to vector<2x8x8xf32>
    %236 = vector.extract_strided_slice %231 {offsets = [0, 0], sizes = [16, 8], strides = [1, 1]} : vector<16x32xf32> to vector<16x8xf32>
    %237 = vector.shape_cast %236 : vector<16x8xf32> to vector<2x8x8xf32>
    "tpu.trace_start"() <{level = 10 : i32, message = "bqd,bkd->bqk"}> : () -> ()
    %cst_76 = arith.constant dense<0.000000e+00> : vector<2x8x8xf32>
    %238 = tpu.matmul %233, %235, %cst_76 {dimension_numbers = #tpu.dot_dimension_numbers<[2], [2], [1], [1], [0, 0, 0, 1, 1, 1], [0], [0]>} : vector<2x8x8xf32>, vector<2x8x8xf32>, vector<2x8x8xf32> -> vector<2x8x8xf32>
    "tpu.trace_stop"() : () -> ()
    %239 = vector.broadcast %20 : vector<1x1x8xf32> to vector<2x8x8xf32>
    %240 = arith.addf %238, %239 : vector<2x8x8xf32>
    %cst_77 = arith.constant dense<0xFF800000> : vector<2x8xf32>
    %241 = vector.multi_reduction <maximumf>, %240, %cst_77 [2] : vector<2x8x8xf32> to vector<2x8xf32>
    %242 = vector.shape_cast %241 : vector<2x8xf32> to vector<2x8x1xf32>
    %243 = vector.broadcast %242 : vector<2x8x1xf32> to vector<2x8x8xf32>
    %244 = arith.subf %240, %243 : vector<2x8x8xf32>
    %245 = math.exp %244 : vector<2x8x8xf32>
    %cst_78 = arith.constant dense<0.000000e+00> : vector<2x8xf32>
    %246 = vector.multi_reduction <add>, %245, %cst_78 [2] : vector<2x8x8xf32> to vector<2x8xf32>
    %247 = vector.shape_cast %246 : vector<2x8xf32> to vector<2x8x1xf32>
    %248 = vector.broadcast %247 : vector<2x8x1xf32> to vector<2x8x8xf32>
    %249 = arith.divf %245, %248 : vector<2x8x8xf32>
    "tpu.trace_start"() <{level = 10 : i32, message = "bqk,bkd->bqd"}> : () -> ()
    %cst_79 = arith.constant dense<0.000000e+00> : vector<2x8x8xf32>
    %250 = tpu.matmul %249, %237, %cst_79 {dimension_numbers = #tpu.dot_dimension_numbers<[2], [1], [1], [2], [0, 0, 0, 1, 1, 2], [0], [0]>} : vector<2x8x8xf32>, vector<2x8x8xf32>, vector<2x8x8xf32> -> vector<2x8x8xf32>
    "tpu.trace_stop"() : () -> ()
    %251 = vector.shape_cast %250 : vector<2x8x8xf32> to vector<16x8xf32>
    %252 = vector.extract_strided_slice %229 {offsets = [0, 8], sizes = [16, 8], strides = [1, 1]} : vector<16x32xf32> to vector<16x8xf32>
    %253 = vector.shape_cast %252 : vector<16x8xf32> to vector<2x8x8xf32>
    %254 = vector.extract_strided_slice %230 {offsets = [0, 8], sizes = [16, 8], strides = [1, 1]} : vector<16x32xf32> to vector<16x8xf32>
    %255 = vector.shape_cast %254 : vector<16x8xf32> to vector<2x8x8xf32>
    %256 = vector.extract_strided_slice %231 {offsets = [0, 8], sizes = [16, 8], strides = [1, 1]} : vector<16x32xf32> to vector<16x8xf32>
    %257 = vector.shape_cast %256 : vector<16x8xf32> to vector<2x8x8xf32>
    "tpu.trace_start"() <{level = 10 : i32, message = "bqd,bkd->bqk"}> : () -> ()
    %cst_80 = arith.constant dense<0.000000e+00> : vector<2x8x8xf32>
    %258 = tpu.matmul %253, %255, %cst_80 {dimension_numbers = #tpu.dot_dimension_numbers<[2], [2], [1], [1], [0, 0, 0, 1, 1, 1], [0], [0]>} : vector<2x8x8xf32>, vector<2x8x8xf32>, vector<2x8x8xf32> -> vector<2x8x8xf32>
    "tpu.trace_stop"() : () -> ()
    %259 = vector.broadcast %20 : vector<1x1x8xf32> to vector<2x8x8xf32>
    %260 = arith.addf %258, %259 : vector<2x8x8xf32>
    %cst_81 = arith.constant dense<0xFF800000> : vector<2x8xf32>
    %261 = vector.multi_reduction <maximumf>, %260, %cst_81 [2] : vector<2x8x8xf32> to vector<2x8xf32>
    %262 = vector.shape_cast %261 : vector<2x8xf32> to vector<2x8x1xf32>
    %263 = vector.broadcast %262 : vector<2x8x1xf32> to vector<2x8x8xf32>
    %264 = arith.subf %260, %263 : vector<2x8x8xf32>
    %265 = math.exp %264 : vector<2x8x8xf32>
    %cst_82 = arith.constant dense<0.000000e+00> : vector<2x8xf32>
    %266 = vector.multi_reduction <add>, %265, %cst_82 [2] : vector<2x8x8xf32> to vector<2x8xf32>
    %267 = vector.shape_cast %266 : vector<2x8xf32> to vector<2x8x1xf32>
    %268 = vector.broadcast %267 : vector<2x8x1xf32> to vector<2x8x8xf32>
    %269 = arith.divf %265, %268 : vector<2x8x8xf32>
    "tpu.trace_start"() <{level = 10 : i32, message = "bqk,bkd->bqd"}> : () -> ()
    %cst_83 = arith.constant dense<0.000000e+00> : vector<2x8x8xf32>
    %270 = tpu.matmul %269, %257, %cst_83 {dimension_numbers = #tpu.dot_dimension_numbers<[2], [1], [1], [2], [0, 0, 0, 1, 1, 2], [0], [0]>} : vector<2x8x8xf32>, vector<2x8x8xf32>, vector<2x8x8xf32> -> vector<2x8x8xf32>
    "tpu.trace_stop"() : () -> ()
    %271 = vector.shape_cast %270 : vector<2x8x8xf32> to vector<16x8xf32>
    %272 = vector.extract_strided_slice %229 {offsets = [0, 16], sizes = [16, 8], strides = [1, 1]} : vector<16x32xf32> to vector<16x8xf32>
    %273 = vector.shape_cast %272 : vector<16x8xf32> to vector<2x8x8xf32>
    %274 = vector.extract_strided_slice %230 {offsets = [0, 16], sizes = [16, 8], strides = [1, 1]} : vector<16x32xf32> to vector<16x8xf32>
    %275 = vector.shape_cast %274 : vector<16x8xf32> to vector<2x8x8xf32>
    %276 = vector.extract_strided_slice %231 {offsets = [0, 16], sizes = [16, 8], strides = [1, 1]} : vector<16x32xf32> to vector<16x8xf32>
    %277 = vector.shape_cast %276 : vector<16x8xf32> to vector<2x8x8xf32>
    "tpu.trace_start"() <{level = 10 : i32, message = "bqd,bkd->bqk"}> : () -> ()
    %cst_84 = arith.constant dense<0.000000e+00> : vector<2x8x8xf32>
    %278 = tpu.matmul %273, %275, %cst_84 {dimension_numbers = #tpu.dot_dimension_numbers<[2], [2], [1], [1], [0, 0, 0, 1, 1, 1], [0], [0]>} : vector<2x8x8xf32>, vector<2x8x8xf32>, vector<2x8x8xf32> -> vector<2x8x8xf32>
    "tpu.trace_stop"() : () -> ()
    %279 = vector.broadcast %20 : vector<1x1x8xf32> to vector<2x8x8xf32>
    %280 = arith.addf %278, %279 : vector<2x8x8xf32>
    %cst_85 = arith.constant dense<0xFF800000> : vector<2x8xf32>
    %281 = vector.multi_reduction <maximumf>, %280, %cst_85 [2] : vector<2x8x8xf32> to vector<2x8xf32>
    %282 = vector.shape_cast %281 : vector<2x8xf32> to vector<2x8x1xf32>
    %283 = vector.broadcast %282 : vector<2x8x1xf32> to vector<2x8x8xf32>
    %284 = arith.subf %280, %283 : vector<2x8x8xf32>
    %285 = math.exp %284 : vector<2x8x8xf32>
    %cst_86 = arith.constant dense<0.000000e+00> : vector<2x8xf32>
    %286 = vector.multi_reduction <add>, %285, %cst_86 [2] : vector<2x8x8xf32> to vector<2x8xf32>
    %287 = vector.shape_cast %286 : vector<2x8xf32> to vector<2x8x1xf32>
    %288 = vector.broadcast %287 : vector<2x8x1xf32> to vector<2x8x8xf32>
    %289 = arith.divf %285, %288 : vector<2x8x8xf32>
    "tpu.trace_start"() <{level = 10 : i32, message = "bqk,bkd->bqd"}> : () -> ()
    %cst_87 = arith.constant dense<0.000000e+00> : vector<2x8x8xf32>
    %290 = tpu.matmul %289, %277, %cst_87 {dimension_numbers = #tpu.dot_dimension_numbers<[2], [1], [1], [2], [0, 0, 0, 1, 1, 2], [0], [0]>} : vector<2x8x8xf32>, vector<2x8x8xf32>, vector<2x8x8xf32> -> vector<2x8x8xf32>
    "tpu.trace_stop"() : () -> ()
    %291 = vector.shape_cast %290 : vector<2x8x8xf32> to vector<16x8xf32>
    %292 = vector.extract_strided_slice %229 {offsets = [0, 24], sizes = [16, 8], strides = [1, 1]} : vector<16x32xf32> to vector<16x8xf32>
    %293 = vector.shape_cast %292 : vector<16x8xf32> to vector<2x8x8xf32>
    %294 = vector.extract_strided_slice %230 {offsets = [0, 24], sizes = [16, 8], strides = [1, 1]} : vector<16x32xf32> to vector<16x8xf32>
    %295 = vector.shape_cast %294 : vector<16x8xf32> to vector<2x8x8xf32>
    %296 = vector.extract_strided_slice %231 {offsets = [0, 24], sizes = [16, 8], strides = [1, 1]} : vector<16x32xf32> to vector<16x8xf32>
    %297 = vector.shape_cast %296 : vector<16x8xf32> to vector<2x8x8xf32>
    "tpu.trace_start"() <{level = 10 : i32, message = "bqd,bkd->bqk"}> : () -> ()
    %cst_88 = arith.constant dense<0.000000e+00> : vector<2x8x8xf32>
    %298 = tpu.matmul %293, %295, %cst_88 {dimension_numbers = #tpu.dot_dimension_numbers<[2], [2], [1], [1], [0, 0, 0, 1, 1, 1], [0], [0]>} : vector<2x8x8xf32>, vector<2x8x8xf32>, vector<2x8x8xf32> -> vector<2x8x8xf32>
    "tpu.trace_stop"() : () -> ()
    %299 = vector.broadcast %20 : vector<1x1x8xf32> to vector<2x8x8xf32>
    %300 = arith.addf %298, %299 : vector<2x8x8xf32>
    %cst_89 = arith.constant dense<0xFF800000> : vector<2x8xf32>
    %301 = vector.multi_reduction <maximumf>, %300, %cst_89 [2] : vector<2x8x8xf32> to vector<2x8xf32>
    %302 = vector.shape_cast %301 : vector<2x8xf32> to vector<2x8x1xf32>
    %303 = vector.broadcast %302 : vector<2x8x1xf32> to vector<2x8x8xf32>
    %304 = arith.subf %300, %303 : vector<2x8x8xf32>
    %305 = math.exp %304 : vector<2x8x8xf32>
    %cst_90 = arith.constant dense<0.000000e+00> : vector<2x8xf32>
    %306 = vector.multi_reduction <add>, %305, %cst_90 [2] : vector<2x8x8xf32> to vector<2x8xf32>
    %307 = vector.shape_cast %306 : vector<2x8xf32> to vector<2x8x1xf32>
    %308 = vector.broadcast %307 : vector<2x8x1xf32> to vector<2x8x8xf32>
    %309 = arith.divf %305, %308 : vector<2x8x8xf32>
    "tpu.trace_start"() <{level = 10 : i32, message = "bqk,bkd->bqd"}> : () -> ()
    %cst_91 = arith.constant dense<0.000000e+00> : vector<2x8x8xf32>
    %310 = tpu.matmul %309, %297, %cst_91 {dimension_numbers = #tpu.dot_dimension_numbers<[2], [1], [1], [2], [0, 0, 0, 1, 1, 2], [0], [0]>} : vector<2x8x8xf32>, vector<2x8x8xf32>, vector<2x8x8xf32> -> vector<2x8x8xf32>
    "tpu.trace_stop"() : () -> ()
    %311 = vector.shape_cast %310 : vector<2x8x8xf32> to vector<16x8xf32>
    %312 = tpu.concatenate %251, %271, %291, %311 in 1 : vector<16x8xf32>, vector<16x8xf32>, vector<16x8xf32>, vector<16x8xf32> -> vector<16x32xf32>
    %cst_92 = arith.constant dense<0.000000e+00> : vector<16x32xf32>
    %313 = tpu.matmul %312, %199, %cst_92 {dimension_numbers = #tpu.dot_dimension_numbers<[1], [0], [0], [1], [0, 0, 1, 1], [], []>} : vector<16x32xf32>, vector<32x32xf32>, vector<16x32xf32> -> vector<16x32xf32>
    %314 = arith.addf %189, %313 : vector<16x32xf32>
    %315 = vector.broadcast %193 : vector<1x32xf32> to vector<16x32xf32>
    %316 = arith.addf %314, %315 : vector<16x32xf32>
    %cst_93 = arith.constant dense<0.000000e+00> : vector<16xf32>
    %317 = vector.multi_reduction <add>, %316, %cst_93 [1] : vector<16x32xf32> to vector<16xf32>
    %318 = vector.shape_cast %317 : vector<16xf32> to vector<16x1xf32>
    %cst_94 = arith.constant 3.200000e+01 : f32
    %319 = vector.broadcast %cst_94 : f32 to vector<16x1xf32>
    %320 = arith.divf %318, %319 : vector<16x1xf32>
    %321 = vector.broadcast %320 : vector<16x1xf32> to vector<16x32xf32>
    %322 = arith.subf %316, %321 : vector<16x32xf32>
    %323 = arith.mulf %322, %322 : vector<16x32xf32>
    %cst_95 = arith.constant dense<0.000000e+00> : vector<16xf32>
    %324 = vector.multi_reduction <add>, %323, %cst_95 [1] : vector<16x32xf32> to vector<16xf32>
    %325 = vector.shape_cast %324 : vector<16xf32> to vector<16x1xf32>
    %cst_96 = arith.constant 3.200000e+01 : f32
    %326 = vector.broadcast %cst_96 : f32 to vector<16x1xf32>
    %327 = arith.divf %325, %326 : vector<16x1xf32>
    %328 = vector.broadcast %320 : vector<16x1xf32> to vector<16x32xf32>
    %329 = arith.subf %316, %328 : vector<16x32xf32>
    %cst_97 = arith.constant 9.99999996E-13 : f32
    %330 = vector.broadcast %cst_97 : f32 to vector<16x1xf32>
    %331 = arith.addf %327, %330 : vector<16x1xf32>
    %332 = math.rsqrt %331 : vector<16x1xf32>
    %333 = vector.broadcast %332 : vector<16x1xf32> to vector<16x32xf32>
    %334 = arith.mulf %329, %333 : vector<16x32xf32>
    %335 = vector.broadcast %194 : vector<1x32xf32> to vector<16x32xf32>
    %336 = arith.mulf %334, %335 : vector<16x32xf32>
    %337 = vector.broadcast %195 : vector<1x32xf32> to vector<16x32xf32>
    %338 = arith.addf %336, %337 : vector<16x32xf32>
    %cst_98 = arith.constant dense<0.000000e+00> : vector<16x64xf32>
    %339 = tpu.matmul %338, %200, %cst_98 {dimension_numbers = #tpu.dot_dimension_numbers<[1], [0], [0], [1], [0, 0, 1, 1], [], []>} : vector<16x32xf32>, vector<32x64xf32>, vector<16x64xf32> -> vector<16x64xf32>
    %340 = vector.broadcast %196 : vector<1x64xf32> to vector<16x64xf32>
    %341 = arith.addf %339, %340 : vector<16x64xf32>
    %342 = arith.mulf %341, %341 : vector<16x64xf32>
    %343 = arith.mulf %341, %342 : vector<16x64xf32>
    %cst_99 = arith.constant 4.471500e-02 : f32
    %344 = vector.broadcast %cst_99 : f32 to vector<16x64xf32>
    %345 = arith.mulf %344, %343 : vector<16x64xf32>
    %346 = arith.addf %341, %345 : vector<16x64xf32>
    %cst_100 = arith.constant 0.797884583 : f32
    %347 = vector.broadcast %cst_100 : f32 to vector<16x64xf32>
    %348 = arith.mulf %347, %346 : vector<16x64xf32>
    %349 = math.tanh %348 : vector<16x64xf32>
    %cst_101 = arith.constant 1.000000e+00 : f32
    %350 = vector.broadcast %cst_101 : f32 to vector<16x64xf32>
    %351 = arith.addf %350, %349 : vector<16x64xf32>
    %cst_102 = arith.constant 5.000000e-01 : f32
    %352 = vector.broadcast %cst_102 : f32 to vector<16x64xf32>
    %353 = arith.mulf %352, %351 : vector<16x64xf32>
    %354 = arith.mulf %341, %353 : vector<16x64xf32>
    %cst_103 = arith.constant dense<0.000000e+00> : vector<16x32xf32>
    %355 = tpu.matmul %354, %201, %cst_103 {dimension_numbers = #tpu.dot_dimension_numbers<[1], [0], [0], [1], [0, 0, 1, 1], [], []>} : vector<16x64xf32>, vector<64x32xf32>, vector<16x32xf32> -> vector<16x32xf32>
    %356 = arith.addf %316, %355 : vector<16x32xf32>
    %357 = vector.broadcast %197 : vector<1x32xf32> to vector<16x32xf32>
    %358 = arith.addf %356, %357 : vector<16x32xf32>
    %c2 = arith.constant 2 : index
    %c0_104 = arith.constant 0 : index
    %359 = vector.load %arg2[%c2, %c0_104] : memref<32x96xf32, #tpu.memory_space<vmem>>, vector<1x32xf32>
    %c3 = arith.constant 3 : index
    %c0_105 = arith.constant 0 : index
    %360 = vector.load %arg2[%c3, %c0_105] : memref<32x96xf32, #tpu.memory_space<vmem>>, vector<1x32xf32>
    %cst_106 = arith.constant dense<0.000000e+00> : vector<16xf32>
    %361 = vector.multi_reduction <add>, %358, %cst_106 [1] : vector<16x32xf32> to vector<16xf32>
    %362 = vector.shape_cast %361 : vector<16xf32> to vector<16x1xf32>
    %cst_107 = arith.constant 3.200000e+01 : f32
    %363 = vector.broadcast %cst_107 : f32 to vector<16x1xf32>
    %364 = arith.divf %362, %363 : vector<16x1xf32>
    %365 = vector.broadcast %364 : vector<16x1xf32> to vector<16x32xf32>
    %366 = arith.subf %358, %365 : vector<16x32xf32>
    %367 = arith.mulf %366, %366 : vector<16x32xf32>
    %cst_108 = arith.constant dense<0.000000e+00> : vector<16xf32>
    %368 = vector.multi_reduction <add>, %367, %cst_108 [1] : vector<16x32xf32> to vector<16xf32>
    %369 = vector.shape_cast %368 : vector<16xf32> to vector<16x1xf32>
    %cst_109 = arith.constant 3.200000e+01 : f32
    %370 = vector.broadcast %cst_109 : f32 to vector<16x1xf32>
    %371 = arith.divf %369, %370 : vector<16x1xf32>
    %372 = vector.broadcast %364 : vector<16x1xf32> to vector<16x32xf32>
    %373 = arith.subf %358, %372 : vector<16x32xf32>
    %cst_110 = arith.constant 9.99999996E-13 : f32
    %374 = vector.broadcast %cst_110 : f32 to vector<16x1xf32>
    %375 = arith.addf %371, %374 : vector<16x1xf32>
    %376 = math.rsqrt %375 : vector<16x1xf32>
    %377 = vector.broadcast %376 : vector<16x1xf32> to vector<16x32xf32>
    %378 = arith.mulf %373, %377 : vector<16x32xf32>
    %379 = vector.broadcast %359 : vector<1x32xf32> to vector<16x32xf32>
    %380 = arith.mulf %378, %379 : vector<16x32xf32>
    %381 = vector.broadcast %360 : vector<1x32xf32> to vector<16x32xf32>
    %382 = arith.addf %380, %381 : vector<16x32xf32>
    %383 = vector.extract_strided_slice %382 {offsets = [0, 0], sizes = [1, 32], strides = [1, 1]} : vector<16x32xf32> to vector<1x32xf32>
    %384 = vector.extract_strided_slice %382 {offsets = [8, 0], sizes = [1, 32], strides = [1, 1]} : vector<16x32xf32> to vector<1x32xf32>
    %385 = tpu.concatenate %383, %384 in 0 : vector<1x32xf32>, vector<1x32xf32> -> vector<2x32xf32>
    %c512 = arith.constant 512 : index
    %c0_111 = arith.constant 0 : index
    %386 = vector.load %arg1[%c512, %c0_111] : memref<544x96xf32, #tpu.memory_space<vmem>>, vector<32x32xf32>
    %c4 = arith.constant 4 : index
    %c0_112 = arith.constant 0 : index
    %387 = vector.load %arg2[%c4, %c0_112] : memref<32x96xf32, #tpu.memory_space<vmem>>, vector<1x32xf32>
    %cst_113 = arith.constant dense<0.000000e+00> : vector<2x32xf32>
    %388 = tpu.matmul %385, %386, %cst_113 {dimension_numbers = #tpu.dot_dimension_numbers<[1], [0], [0], [1], [0, 0, 1, 1], [], []>} : vector<2x32xf32>, vector<32x32xf32>, vector<2x32xf32> -> vector<2x32xf32>
    %389 = vector.broadcast %387 : vector<1x32xf32> to vector<2x32xf32>
    %390 = arith.addf %388, %389 : vector<2x32xf32>
    %cst_114 = arith.constant 0.000000e+00 : f32
    %391 = vector.broadcast %cst_114 : f32 to vector<2x32xf32>
    %392 = arith.maximumf %390, %391 : vector<2x32xf32>
    %c0_115 = arith.constant 0 : index
    %c0_116 = arith.constant 0 : index
    %393 = vector.load %arg3[%c0_115, %c0_116] : memref<2x32xf32, #tpu.memory_space<vmem>>, vector<2x32xf32>
    tpu.vector_store %arg3[%c0_115, %c0_116], %392 {strides = array<i32>} : memref<2x32xf32, #tpu.memory_space<vmem>>, vector<2x32xf32>,
    return
  }
}

</mosaic_0001>

<llo_original>
// kernel: vit_encoder_forward.1
$region0: #{vit_encoder_forward.1}
  #allocation0 [shape = 'u32[]', space=smem, size = 0x4, offset = 0x4, fixed_abs, tag = 'smem constant byte address 0x4 - core index']
  #allocation1 [shape = 'u32[144,128]{1,0:T(1,128)}', space=vmem, size = 0x12000, scoped, tag = 'internal scratch']
  %s0 = inlined_call_operand.vmem [shape: f32[8,192], index: 0, kind: input, shape index: {}]
  %s1 = inlined_call_operand.vmem [shape: f32[544,96], index: 1, kind: input, shape index: {}]
  %s2 = inlined_call_operand.vmem [shape: f32[32,96], index: 2, kind: input, shape index: {}]
  %s3 = inlined_call_operand.hbm [shape: f32[2,32], index: 3, kind: output, shape index: {}]
  %s4 = sld [smem:[#allocation0]]
  $region22: #{vit_encoder_forward.1} parent=0
    _
  %s6 = ssub.s32 1, %s4
  %s7 = scalar_select 0, %s6, %s4
  $region1: #{vit_encoder_forward.1} parent=0
    #allocation2 [shape = 'u8[1024]{0}', space=vmem, size = 0x400, scoped, tag = 'output window, operand 0, single buffered']
    #allocation3 [shape = 's32[1]{0}', space=sflag, size = 0x4, scoped, tag = 'scoped memory for vit_encoder_forward.1']
    %8 = vsyncpa [#allocation3], 0
    // Predicated region
    $region2: #{vit_encoder_forward.1} parent=1 // pred_check
      _
    $region3: #{vit_encoder_forward.1} parent=1 // pred_check_branch
      %10 = sbr.rel (0) target = $region5
    $region4: #{vit_encoder_forward.1} parent=1 // pred_region
      _
    $region5: #{vit_encoder_forward.1} parent=1 // pred_fallthru
      _
    // Predicated region
    $region6: #{vit_encoder_forward.1} parent=1 // pred_check
      _
    $region7: #{vit_encoder_forward.1} parent=1 // pred_check_branch
      %12 = sbr.rel (0) target = $region9
    $region8: #{vit_encoder_forward.1} parent=1 // pred_region
      _
    $region9: #{vit_encoder_forward.1} parent=1 // pred_fallthru
      _
    // Predicated region
    $region10: #{vit_encoder_forward.1} parent=1 // pred_check
      _
    $region11: #{vit_encoder_forward.1} parent=1 // pred_check_branch
      %14 = sbr.rel (0) target = $region13
    $region12: #{vit_encoder_forward.1} parent=1 // pred_region
      _
    $region13: #{vit_encoder_forward.1} parent=1 // pred_fallthru
      _
    %v15 = vld [vmem:[%s1] sm:$0xff]
    %v16 = vld [vmem:[%s1 + $0x8] sm:$0xff]
    %v17 = vld [vmem:[%s1 + $0x10] sm:$0xff]
    %v18 = vld [vmem:[%s1 + $0x18] sm:$0xff]
    %v19 = vld [vmem:[%s1 + $0x20] sm:$0xff]
    %v20 = vld [vmem:[%s1 + $0x28] sm:$0xff]
    %v21 = vld [vmem:[%s1 + $0x30] sm:$0xff]
    %v22 = vld [vmem:[%s1 + $0x38] sm:$0xff]
    %v23 = vld [vmem:[%s1 + $0x40] sm:$0xff]
    %v24 = vld [vmem:[%s1 + $0x48] sm:$0xff]
    %v25 = vld [vmem:[%s1 + $0x50] sm:$0xff]
    %v26 = vld [vmem:[%s1 + $0x58] sm:$0xff]
    %v27 = vld [vmem:[%s1 + $0x60] sm:$0xff]
    %v28 = vld [vmem:[%s1 + $0x68] sm:$0xff]
    %v29 = vld [vmem:[%s1 + $0x70] sm:$0xff]
    %v30 = vld [vmem:[%s1 + $0x78] sm:$0xff]
    %v31 = vld [vmem:[%s1 + $0x80] sm:$0xff]
    %v32 = vld [vmem:[%s1 + $0x88] sm:$0xff]
    %v33 = vld [vmem:[%s1 + $0x90] sm:$0xff]
    %v34 = vld [vmem:[%s1 + $0x98] sm:$0xff]
    %v35 = vld [vmem:[%s1 + $0xa0] sm:$0xff]
    %v36 = vld [vmem:[%s1 + $0xa8] sm:$0xff]
    %v37 = vld [vmem:[%s1 + $0xb0] sm:$0xff]
    %v38 = vld [vmem:[%s1 + $0xb8] sm:$0xff]
    %v39 = vld [vmem:[%s2] sm:$0x1]
    %v40 = vld [vmem:[%s0] sm:$0xff]
    %v41 = vld [vmem:[%s0 + $0x8] sm:$0xff]
    %v42 = vlaneseq
    %v43 = vshrl.u32 %v42, 7
    %v44 = vsub.s32 0, %v43
    %v45 = vrot.slane %v39, %v44
    %vm46 = vcmask 523264
    %v48 = vsel %vm46, %v41, 0
    %50 = vmatprep.subr.mxu0 0.0
    %51 = vmatpush1.msra.mxu0 %v15
    %52 = vmatprep.subr.mxu0 0.0
    %53 = vmatpush1.msra.mxu0 %v16
    %54 = vmatprep.subr.mxu0 0.0
    %55 = vmatpush1.msra.mxu0 %v17
    %56 = vmatprep.subr.mxu0 0.0
    %57 = vmatpush1.msra.mxu0 %v18
    %58 = vmatprep.subr.mxu0 0.0
    %59 = vmatpush1.msra.mxu0 %v19
    %60 = vmatprep.subr.mxu0 0.0
    %61 = vmatpush1.msra.mxu0 %v20
    %62 = vmatprep.subr.mxu0 0.0
    %63 = vmatpush1.msra.mxu0 %v21
    %64 = vmatprep.subr.mxu0 0.0
    %65 = vmatpush1.msra.mxu0 %v22
    %66 = vmatprep.subr.mxu0 0.0
    %67 = vmatpush1.msra.mxu0 %v23
    %68 = vmatprep.subr.mxu0 0.0
    %69 = vmatpush1.msra.mxu0 %v24
    %70 = vmatprep.subr.mxu0 0.0
    %71 = vmatpush1.msra.mxu0 %v25
    %72 = vmatprep.subr.mxu0 0.0
    %73 = vmatpush1.msra.mxu0 %v26
    %74 = vmatprep.subr.mxu0 0.0
    %75 = vmatpush1.msra.mxu0 %v27
    %76 = vmatprep.subr.mxu0 0.0
    %77 = vmatpush1.msra.mxu0 %v28
    %78 = vmatprep.subr.mxu0 0.0
    %79 = vmatpush1.msra.mxu0 %v29
    %80 = vmatprep.subr.mxu0 0.0
    %81 = vmatpush1.msra.mxu0 %v30
    %82 = vmatprep.subr.mxu0 0.0
    %83 = vmatpush1.msra.mxu0 %v31
    %84 = vmatprep.subr.mxu0 0.0
    %85 = vmatpush1.msra.mxu0 %v32
    %86 = vmatprep.subr.mxu0 0.0
    %87 = vmatpush1.msra.mxu0 %v33
    %88 = vmatprep.subr.mxu0 0.0
    %89 = vmatpush1.msra.mxu0 %v34
    %90 = vmatprep.subr.mxu0 0.0
    %91 = vmatpush1.msra.mxu0 %v35
    %92 = vmatprep.subr.mxu0 0.0
    %93 = vmatpush1.msra.mxu0 %v36
    %94 = vmatprep.subr.mxu0 0.0
    %95 = vmatpush1.msra.mxu0 %v37
    %96 = vmatprep.subr.mxu0 0.0
    %97 = vmatpush1.msra.mxu0 %v38
    %98 = vmatprep.subr.mxu0 0.0
    %99 = vmatpush1.msra.mxu0 0.0
    %100 = vmatprep.subr.mxu0 0.0
    %101 = vmatpush1.msra.mxu0 0.0
    %102 = vmatprep.subr.mxu0 0.0
    %103 = vmatpush1.msra.mxu0 0.0
    %104 = vmatprep.subr.mxu0 0.0
    %105 = vmatpush1.msra.mxu0 0.0
    %106 = vmatprep.subr.mxu0 0.0
    %107 = vmatpush1.msra.mxu0 0.0
    %108 = vmatprep.subr.mxu0 0.0
    %109 = vmatpush1.msra.mxu0 0.0
    %110 = vmatprep.subr.mxu0 0.0
    %111 = vmatpush1.msra.mxu0 0.0
    %112 = vmatprep.subr.mxu0 0.0
    %113 = vmatpush1.msra.mxu0 0.0
    %114 = vmatprep.mubr.f32.mxu0 %v48
    %115 = vmatmul.mubr.f32.gmra.mrb[0].mxu0 %v40
    %v116 = vpop.f32.mrb[0].mxu0
    %v117 = vadd.f32 %v45, %v116
    %v118 = vpop.f32.mrb[0].mxu0
    %119 = vdwg.mxu0
    %v120 = vld [vmem:[%s2 + $0x1] sm:$0x1]
    %v121 = vld [vmem:[%s2 + $0x8] sm:$0xff]
    %v122 = vadd.f32 %v120, %v121
    %v124 = vrot.slane %v121, 1
    %v126 = vadd.f32 %v117, %v124
    %v127 = vrot.slane %v121, 5
    %v129 = vadd.f32 %v117, %v127
    %v131 = vrot.slane %v126, 7
    %v134 = vrot.slane %v129, 3
    %vm136 = vcmask 1040384
    %v137 = vsel %vm136, %v122, %v131
    %vm138 = vcmask 1044480
    %v139 = vsel %vm138, %v137, 0.0
    %v140 = vsel %vm136, %v122, %v134
    %v141 = vsel %vm138, %v140, 0.0
    %vm142 = vcmask 39936
    %v143 = vsel %vm142, 0.0, -1e+30
    %v144 = vld [vmem:[%s2 + $0x10] sm:$0x1]
    %v145 = vld [vmem:[%s2 + $0x11] sm:$0x1]
    %v146 = vld [vmem:[%s2 + $0x12] sm:$0x1]
    %v147 = vld [vmem:[%s2 + $0x13] sm:$0x1]
    %v148 = vld [vmem:[%s2 + $0x14] sm:$0x1]
    %v149 = vld [vmem:[%s2 + $0x15] sm:$0x1]
    %v150 = vld [vmem:[%s2 + $0x16] sm:$0x1]
    %v151 = vld [vmem:[%s2 + $0x17] sm:$0x1]
    %v152 = vld [vmem:[%s1 + $0xc0] sm:$0xff]
    %v153 = vld [vmem:[%s1 + $0xc8] sm:$0xff]
    %v154 = vld [vmem:[%s1 + $0xd0] sm:$0xff]
    %v155 = vld [vmem:[%s1 + $0xd8] sm:$0xff]
    %v156 = vld [vmem:[%s1 + $0xe0] sm:$0xff]
    %v157 = vld [vmem:[%s1 + $0xe8] sm:$0xff]
    %v158 = vld [vmem:[%s1 + $0xf0] sm:$0xff]
    %v159 = vld [vmem:[%s1 + $0xf8] sm:$0xff]
    %v160 = vld [vmem:[%s1 + $0x100] sm:$0xff]
    %v161 = vld [vmem:[%s1 + $0x108] sm:$0xff]
    %v162 = vld [vmem:[%s1 + $0x110] sm:$0xff]
    %v163 = vld [vmem:[%s1 + $0x118] sm:$0xff]
    %v164 = vld [vmem:[%s1 + $0x120] sm:$0xff]
    %v165 = vld [vmem:[%s1 + $0x128] sm:$0xff]
    %v166 = vld [vmem:[%s1 + $0x130] sm:$0xff]
    %v167 = vld [vmem:[%s1 + $0x138] sm:$0xff]
    %v168 = vld [vmem:[%s1 + $0x140] sm:$0xff]
    %v169 = vld [vmem:[%s1 + $0x148] sm:$0xff]
    %v170 = vld [vmem:[%s1 + $0x150] sm:$0xff]
    %v171 = vld [vmem:[%s1 + $0x158] sm:$0xff]
    %vm172 = vcmask 261120
    %v173 = vsel %vm172, %v139, 0.0
    %174 = vadd.xlane.f32.xlu0 %v173
    %v175 = vpop.xlane.xlu0 %174
    %v176 = vsel %vm172, %v141, 0.0
    %177 = vadd.xlane.f32.xlu0 %v176
    %v178 = vpop.xlane.xlu0 %177
    %v179 = vrcp.pop 32.0
    %v180 = vmul.f32 %v175, %v179
    %v181 = vmul.f32 %v178, %v179
    %v182 = vsub.f32 %v139, %v180
    %v183 = vsub.f32 %v141, %v181
    %v184 = vmul.f32 %v182, %v182
    %v185 = vmul.f32 %v183, %v183
    %v186 = vsel %vm172, %v184, 0.0
    %187 = vadd.xlane.f32.xlu0 %v186
    %v188 = vpop.xlane.xlu0 %187
    %v189 = vsel %vm172, %v185, 0.0
    %190 = vadd.xlane.f32.xlu0 %v189
    %v191 = vpop.xlane.xlu0 %190
    %v192 = vmul.f32 %v188, %v179
    %v193 = vmul.f32 %v191, %v179
    %v194 = vadd.f32 %v192, 1e-12
    %v195 = vadd.f32 %v193, 1e-12
    %v196 = vrsqrt.pop %v194
    %v197 = vrsqrt.pop %v195
    %v198 = vmul.f32 %v182, %v196
    %v199 = vmul.f32 %v183, %v197
    %v200 = vlaneseq
    %v201 = vshrl.u32 %v200, 7
    %v202 = vsub.s32 0, %v201
    %v203 = vrot.slane %v144, %v202
    %v204 = vmul.f32 %v198, %v203
    %v205 = vmul.f32 %v199, %v203
    %v206 = vlaneseq
    %v207 = vshrl.u32 %v206, 7
    %v208 = vsub.s32 0, %v207
    %v209 = vrot.slane %v145, %v208
    %v210 = vadd.f32 %v204, %v209
    %v211 = vadd.f32 %v205, %v209
    %v212 = vlaneseq
    %v213 = vshrl.u32 %v212, 7
    %v214 = vsub.s32 0, %v213
    %v215 = vrot.slane %v146, %v214
    %v217 = vsel %vm172, %v210, 0
    %v220 = vsel %vm172, %v211, 0
    %222 = vmatprep.subr.mxu0 0.0
    %223 = vmatpush1.msra.mxu0 %v152
    %224 = vmatprep.subr.mxu0 0.0
    %225 = vmatpush1.msra.mxu0 %v153
    %226 = vmatprep.subr.mxu0 0.0
    %227 = vmatpush1.msra.mxu0 %v154
    %228 = vmatprep.subr.mxu0 0.0
    %229 = vmatpush1.msra.mxu0 %v155
    %230 = vmatprep.subr.mxu0 0.0
    %231 = vmatpush1.msra.mxu0 0.0
    %232 = vmatprep.subr.mxu0 0.0
    %233 = vmatpush1.msra.mxu0 0.0
    %234 = vmatprep.subr.mxu0 0.0
    %235 = vmatpush1.msra.mxu0 0.0
    %236 = vmatprep.subr.mxu0 0.0
    %237 = vmatpush1.msra.mxu0 0.0
    %238 = vmatprep.subr.mxu0 0.0
    %239 = vmatpush1.msra.mxu0 0.0
    %240 = vmatprep.subr.mxu0 0.0
    %241 = vmatpush1.msra.mxu0 0.0
    %242 = vmatprep.subr.mxu0 0.0
    %243 = vmatpush1.msra.mxu0 0.0
    %244 = vmatprep.subr.mxu0 0.0
    %245 = vmatpush1.msra.mxu0 0.0
    %246 = vmatprep.subr.mxu0 0.0
    %247 = vmatpush1.msra.mxu0 0.0
    %248 = vmatprep.subr.mxu0 0.0
    %249 = vmatpush1.msra.mxu0 0.0
    %250 = vmatprep.subr.mxu0 0.0
    %251 = vmatpush1.msra.mxu0 0.0
    %252 = vmatprep.subr.mxu0 0.0
    %253 = vmatpush1.msra.mxu0 0.0
    %254 = vmatprep.subr.mxu0 0.0
    %255 = vmatpush1.msra.mxu0 0.0
    %256 = vmatprep.subr.mxu0 0.0
    %257 = vmatpush1.msra.mxu0 0.0
    %258 = vmatprep.subr.mxu0 0.0
    %259 = vmatpush1.msra.mxu0 0.0
    %260 = vmatprep.subr.mxu0 0.0
    %261 = vmatpush1.msra.mxu0 0.0
    %262 = vmatprep.subr.mxu0 0.0
    %263 = vmatpush1.msra.mxu0 0.0
    %264 = vmatprep.subr.mxu0 0.0
    %265 = vmatpush1.msra.mxu0 0.0
    %266 = vmatprep.subr.mxu0 0.0
    %267 = vmatpush1.msra.mxu0 0.0
    %268 = vmatprep.subr.mxu0 0.0
    %269 = vmatpush1.msra.mxu0 0.0
    %270 = vmatprep.subr.mxu0 0.0
    %271 = vmatpush1.msra.mxu0 0.0
    %272 = vmatprep.subr.mxu0 0.0
    %273 = vmatpush1.msra.mxu0 0.0
    %274 = vmatprep.subr.mxu0 0.0
    %275 = vmatpush1.msra.mxu0 0.0
    %276 = vmatprep.subr.mxu0 0.0
    %277 = vmatpush1.msra.mxu0 0.0
    %278 = vmatprep.subr.mxu0 0.0
    %279 = vmatpush1.msra.mxu0 0.0
    %280 = vmatprep.subr.mxu0 0.0
    %281 = vmatpush1.msra.mxu0 0.0
    %282 = vmatprep.subr.mxu0 0.0
    %283 = vmatpush1.msra.mxu0 0.0
    %284 = vmatprep.subr.mxu0 0.0
    %285 = vmatpush1.msra.mxu0 0.0
    %286 = vmatprep.mubr.f32.mxu0 0.0
    %287 = vmatmul.mubr.f32.gmra.mrb[0].mxu0 %v217
    %v288 = vpop.f32.mrb[0].mxu0
    %v289 = vadd.f32 %v215, %v288
    %v290 = vpop.f32.mrb[0].mxu0
    %291 = vmatprep.mubr.f32.mxu0 0.0
    %292 = vmatmul.mubr.f32.gmra.mrb[0].mxu0 %v220
    %v293 = vpop.f32.mrb[0].mxu0
    %v294 = vadd.f32 %v215, %v293
    %v295 = vpop.f32.mrb[0].mxu0
    %296 = vdwg.mxu0
    %v297 = vmul.f32 %v289, 0.35355338
    %v298 = vmul.f32 %v294, 0.35355338
    %v299 = vlaneseq
    %v300 = vshrl.u32 %v299, 7
    %v301 = vsub.s32 0, %v300
    %v302 = vrot.slane %v143, %v301
    %304 = vrot.lane.b32.xlu0 %v289, 96
    %v305 = vpop.permute.xlu0 %304
    %vm306 = vcmask 64512
    %v308 = vsel %vm306, %v297, 0
    %v310 = vsel %vm306, %v305, 0
    %312 = vmatprep.subr.mxu0 0.0
    %313 = vmatpush1.xpose.msra.mxu0 %v310
    %314 = vmatprep.subr.mxu0 0.0
    %315 = vmatpush1.xpose.msra.mxu0 0.0
    %316 = vmatprep.subr.mxu0 0.0
    %317 = vmatpush1.xpose.msra.mxu0 0.0
    %318 = vmatprep.subr.mxu0 0.0
    %319 = vmatpush1.xpose.msra.mxu0 0.0
    %320 = vmatprep.subr.mxu0 0.0
    %321 = vmatpush1.xpose.msra.mxu0 0.0
    %322 = vmatprep.subr.mxu0 0.0
    %323 = vmatpush1.xpose.msra.mxu0 0.0
    %324 = vmatprep.subr.mxu0 0.0
    %325 = vmatpush1.xpose.msra.mxu0 0.0
    %326 = vmatprep.subr.mxu0 0.0
    %327 = vmatpush1.xpose.msra.mxu0 0.0
    %328 = vmatprep.subr.mxu0 0.0
    %329 = vmatpush1.xpose.msra.mxu0 0.0
    %330 = vmatprep.subr.mxu0 0.0
    %331 = vmatpush1.xpose.msra.mxu0 0.0
    %332 = vmatprep.subr.mxu0 0.0
    %333 = vmatpush1.xpose.msra.mxu0 0.0
    %334 = vmatprep.subr.mxu0 0.0
    %335 = vmatpush1.xpose.msra.mxu0 0.0
    %336 = vmatprep.subr.mxu0 0.0
    %337 = vmatpush1.xpose.msra.mxu0 0.0
    %338 = vmatprep.subr.mxu0 0.0
    %339 = vmatpush1.xpose.msra.mxu0 0.0
    %340 = vmatprep.subr.mxu0 0.0
    %341 = vmatpush1.xpose.msra.mxu0 0.0
    %342 = vmatprep.subr.mxu0 0.0
    %343 = vmatpush1.xpose.msra.mxu0 0.0
    %344 = vmatprep.subr.mxu0 0.0
    %345 = vmatpush1.xpose.msra.mxu0 0.0
    %346 = vmatprep.subr.mxu0 0.0
    %347 = vmatpush1.xpose.msra.mxu0 0.0
    %348 = vmatprep.subr.mxu0 0.0
    %349 = vmatpush1.xpose.msra.mxu0 0.0
    %350 = vmatprep.subr.mxu0 0.0
    %351 = vmatpush1.xpose.msra.mxu0 0.0
    %352 = vmatprep.subr.mxu0 0.0
    %353 = vmatpush1.xpose.msra.mxu0 0.0
    %354 = vmatprep.subr.mxu0 0.0
    %355 = vmatpush1.xpose.msra.mxu0 0.0
    %356 = vmatprep.subr.mxu0 0.0
    %357 = vmatpush1.xpose.msra.mxu0 0.0
    %358 = vmatprep.subr.mxu0 0.0
    %359 = vmatpush1.xpose.msra.mxu0 0.0
    %360 = vmatprep.subr.mxu0 0.0
    %361 = vmatpush1.xpose.msra.mxu0 0.0
    %362 = vmatprep.subr.mxu0 0.0
    %363 = vmatpush1.xpose.msra.mxu0 0.0
    %364 = vmatprep.subr.mxu0 0.0
    %365 = vmatpush1.xpose.msra.mxu0 0.0
    %366 = vmatprep.subr.mxu0 0.0
    %367 = vmatpush1.xpose.msra.mxu0 0.0
    %368 = vmatprep.subr.mxu0 0.0
    %369 = vmatpush1.xpose.msra.mxu0 0.0
    %370 = vmatprep.subr.mxu0 0.0
    %371 = vmatpush1.xpose.msra.mxu0 0.0
    %372 = vmatprep.subr.mxu0 0.0
    %373 = vmatpush1.xpose.msra.mxu0 0.0
    %374 = vmatprep.subr.mxu0 0.0
    %375 = vmatpush1.xpose.msra.mxu0 0.0
    %376 = vmatprep.mubr.f32.mxu0 0.0
    %377 = vmatmul.mubr.f32.gmra.mrb[0].mxu0 %v308
    %v378 = vpop.f32.mrb[0].mxu0
    %v379 = vadd.f32 %v302, %v378
    %v380 = vpop.f32.mrb[0].mxu0
    %381 = vdwg.mxu0
    %383 = vrot.lane.b32.xlu0 %v294, 96
    %v384 = vpop.permute.xlu0 %383
    %v386 = vsel %vm306, %v298, 0
    %v388 = vsel %vm306, %v384, 0
    %390 = vmatprep.subr.mxu0 0.0
    %391 = vmatpush1.xpose.msra.mxu0 %v388
    %392 = vmatprep.subr.mxu0 0.0
    %393 = vmatpush1.xpose.msra.mxu0 0.0
    %394 = vmatprep.subr.mxu0 0.0
    %395 = vmatpush1.xpose.msra.mxu0 0.0
    %396 = vmatprep.subr.mxu0 0.0
    %397 = vmatpush1.xpose.msra.mxu0 0.0
    %398 = vmatprep.subr.mxu0 0.0
    %399 = vmatpush1.xpose.msra.mxu0 0.0
    %400 = vmatprep.subr.mxu0 0.0
    %401 = vmatpush1.xpose.msra.mxu0 0.0
    %402 = vmatprep.subr.mxu0 0.0
    %403 = vmatpush1.xpose.msra.mxu0 0.0
    %404 = vmatprep.subr.mxu0 0.0
    %405 = vmatpush1.xpose.msra.mxu0 0.0
    %406 = vmatprep.subr.mxu0 0.0
    %407 = vmatpush1.xpose.msra.mxu0 0.0
    %408 = vmatprep.subr.mxu0 0.0
    %409 = vmatpush1.xpose.msra.mxu0 0.0
    %410 = vmatprep.subr.mxu0 0.0
    %411 = vmatpush1.xpose.msra.mxu0 0.0
    %412 = vmatprep.subr.mxu0 0.0
    %413 = vmatpush1.xpose.msra.mxu0 0.0
    %414 = vmatprep.subr.mxu0 0.0
    %415 = vmatpush1.xpose.msra.mxu0 0.0
    %416 = vmatprep.subr.mxu0 0.0
    %417 = vmatpush1.xpose.msra.mxu0 0.0
    %418 = vmatprep.subr.mxu0 0.0
    %419 = vmatpush1.xpose.msra.mxu0 0.0
    %420 = vmatprep.subr.mxu0 0.0
    %421 = vmatpush1.xpose.msra.mxu0 0.0
    %422 = vmatprep.subr.mxu0 0.0
    %423 = vmatpush1.xpose.msra.mxu0 0.0
    %424 = vmatprep.subr.mxu0 0.0
    %425 = vmatpush1.xpose.msra.mxu0 0.0
    %426 = vmatprep.subr.mxu0 0.0
    %427 = vmatpush1.xpose.msra.mxu0 0.0
    %428 = vmatprep.subr.mxu0 0.0
    %429 = vmatpush1.xpose.msra.mxu0 0.0
    %430 = vmatprep.subr.mxu0 0.0
    %431 = vmatpush1.xpose.msra.mxu0 0.0
    %432 = vmatprep.subr.mxu0 0.0
    %433 = vmatpush1.xpose.msra.mxu0 0.0
    %434 = vmatprep.subr.mxu0 0.0
    %435 = vmatpush1.xpose.msra.mxu0 0.0
    %436 = vmatprep.subr.mxu0 0.0
    %437 = vmatpush1.xpose.msra.mxu0 0.0
    %438 = vmatprep.subr.mxu0 0.0
    %439 = vmatpush1.xpose.msra.mxu0 0.0
    %440 = vmatprep.subr.mxu0 0.0
    %441 = vmatpush1.xpose.msra.mxu0 0.0
    %442 = vmatprep.subr.mxu0 0.0
    %443 = vmatpush1.xpose.msra.mxu0 0.0
    %444 = vmatprep.subr.mxu0 0.0
    %445 = vmatpush1.xpose.msra.mxu0 0.0
    %446 = vmatprep.subr.mxu0 0.0
    %447 = vmatpush1.xpose.msra.mxu0 0.0
    %448 = vmatprep.subr.mxu0 0.0
    %449 = vmatpush1.xpose.msra.mxu0 0.0
    %450 = vmatprep.subr.mxu0 0.0
    %451 = vmatpush1.xpose.msra.mxu0 0.0
    %452 = vmatprep.subr.mxu0 0.0
    %453 = vmatpush1.xpose.msra.mxu0 0.0
    %454 = vmatprep.mubr.f32.mxu0 0.0
    %455 = vmatmul.mubr.f32.gmra.mrb[0].mxu0 %v386
    %v456 = vpop.f32.mrb[0].mxu0
    %v457 = vadd.f32 %v302, %v456
    %v458 = vpop.f32.mrb[0].mxu0
    %459 = vdwg.mxu0
    %v460 = vsel %vm306, %v379, -inf
    %461 = vmax.xlane.f32.xlu0 %v460
    %v462 = vpop.xlane.xlu0 %461
    %v463 = vsel %vm306, %v457, -inf
    %464 = vmax.xlane.f32.xlu0 %v463
    %v465 = vpop.xlane.xlu0 %464
    %v466 = vsub.f32 %v379, %v462
    %v467 = vsub.f32 %v457, %v465
    %v468 = vmul.f32 %v466, 1.442695
    %v469 = vpow.pop %v468
    %v470 = vmul.f32 %v467, 1.442695
    %v471 = vpow.pop %v470
    %v472 = vsel %vm306, %v469, 0.0
    %473 = vadd.xlane.f32.xlu0 %v472
    %v474 = vpop.xlane.xlu0 %473
    %v475 = vsel %vm306, %v471, 0.0
    %476 = vadd.xlane.f32.xlu0 %v475
    %v477 = vpop.xlane.xlu0 %476
    %v478 = vrcp.pop %v474
    %v479 = vmul.f32 %v469, %v478
    %v480 = vrcp.pop %v477
    %v481 = vmul.f32 %v471, %v480
    %482 = vrot.lane.b32.xlu0 %v289, 64
    %v483 = vpop.permute.xlu0 %482
    %v486 = vsel %vm306, %v479, 0
    %488 = vmatprep.subr.mxu0 0.0
    %489 = vmatpush1.msra.mxu0 %v483
    %490 = vmatprep.subr.mxu0 0.0
    %491 = vmatpush1.msra.mxu0 0.0
    %492 = vmatprep.subr.mxu0 0.0
    %493 = vmatpush1.msra.mxu0 0.0
    %494 = vmatprep.subr.mxu0 0.0
    %495 = vmatpush1.msra.mxu0 0.0
    %496 = vmatprep.subr.mxu0 0.0
    %497 = vmatpush1.msra.mxu0 0.0
    %498 = vmatprep.subr.mxu0 0.0
    %499 = vmatpush1.msra.mxu0 0.0
    %500 = vmatprep.subr.mxu0 0.0
    %501 = vmatpush1.msra.mxu0 0.0
    %502 = vmatprep.subr.mxu0 0.0
    %503 = vmatpush1.msra.mxu0 0.0
    %504 = vmatprep.subr.mxu0 0.0
    %505 = vmatpush1.msra.mxu0 0.0
    %506 = vmatprep.subr.mxu0 0.0
    %507 = vmatpush1.msra.mxu0 0.0
    %508 = vmatprep.subr.mxu0 0.0
    %509 = vmatpush1.msra.mxu0 0.0
    %510 = vmatprep.subr.mxu0 0.0
    %511 = vmatpush1.msra.mxu0 0.0
    %512 = vmatprep.subr.mxu0 0.0
    %513 = vmatpush1.msra.mxu0 0.0
    %514 = vmatprep.subr.mxu0 0.0
    %515 = vmatpush1.msra.mxu0 0.0
    %516 = vmatprep.subr.mxu0 0.0
    %517 = vmatpush1.msra.mxu0 0.0
    %518 = vmatprep.subr.mxu0 0.0
    %519 = vmatpush1.msra.mxu0 0.0
    %520 = vmatprep.subr.mxu0 0.0
    %521 = vmatpush1.msra.mxu0 0.0
    %522 = vmatprep.subr.mxu0 0.0
    %523 = vmatpush1.msra.mxu0 0.0
    %524 = vmatprep.subr.mxu0 0.0
    %525 = vmatpush1.msra.mxu0 0.0
    %526 = vmatprep.subr.mxu0 0.0
    %527 = vmatpush1.msra.mxu0 0.0
    %528 = vmatprep.subr.mxu0 0.0
    %529 = vmatpush1.msra.mxu0 0.0
    %530 = vmatprep.subr.mxu0 0.0
    %531 = vmatpush1.msra.mxu0 0.0
    %532 = vmatprep.subr.mxu0 0.0
    %533 = vmatpush1.msra.mxu0 0.0
    %534 = vmatprep.subr.mxu0 0.0
    %535 = vmatpush1.msra.mxu0 0.0
    %536 = vmatprep.subr.mxu0 0.0
    %537 = vmatpush1.msra.mxu0 0.0
    %538 = vmatprep.subr.mxu0 0.0
    %539 = vmatpush1.msra.mxu0 0.0
    %540 = vmatprep.subr.mxu0 0.0
    %541 = vmatpush1.msra.mxu0 0.0
    %542 = vmatprep.subr.mxu0 0.0
    %543 = vmatpush1.msra.mxu0 0.0
    %544 = vmatprep.subr.mxu0 0.0
    %545 = vmatpush1.msra.mxu0 0.0
    %546 = vmatprep.subr.mxu0 0.0
    %547 = vmatpush1.msra.mxu0 0.0
    %548 = vmatprep.subr.mxu0 0.0
    %549 = vmatpush1.msra.mxu0 0.0
    %550 = vmatprep.subr.mxu0 0.0
    %551 = vmatpush1.msra.mxu0 0.0
    %552 = vmatprep.mubr.f32.mxu0 0.0
    %553 = vmatmul.mubr.f32.gmra.mrb[0].mxu0 %v486
    %v554 = vpop.f32.mrb[0].mxu0
    %v555 = vadd.f32 0.0, %v554
    %v556 = vpop.f32.mrb[0].mxu0
    %557 = vdwg.mxu0
    %558 = vrot.lane.b32.xlu0 %v294, 64
    %v559 = vpop.permute.xlu0 %558
    %v562 = vsel %vm306, %v481, 0
    %564 = vmatprep.subr.mxu0 0.0
    %565 = vmatpush1.msra.mxu0 %v559
    %566 = vmatprep.subr.mxu0 0.0
    %567 = vmatpush1.msra.mxu0 0.0
    %568 = vmatprep.subr.mxu0 0.0
    %569 = vmatpush1.msra.mxu0 0.0
    %570 = vmatprep.subr.mxu0 0.0
    %571 = vmatpush1.msra.mxu0 0.0
    %572 = vmatprep.subr.mxu0 0.0
    %573 = vmatpush1.msra.mxu0 0.0
    %574 = vmatprep.subr.mxu0 0.0
    %575 = vmatpush1.msra.mxu0 0.0
    %576 = vmatprep.subr.mxu0 0.0
    %577 = vmatpush1.msra.mxu0 0.0
    %578 = vmatprep.subr.mxu0 0.0
    %579 = vmatpush1.msra.mxu0 0.0
    %580 = vmatprep.subr.mxu0 0.0
    %581 = vmatpush1.msra.mxu0 0.0
    %582 = vmatprep.subr.mxu0 0.0
    %583 = vmatpush1.msra.mxu0 0.0
    %584 = vmatprep.subr.mxu0 0.0
    %585 = vmatpush1.msra.mxu0 0.0
    %586 = vmatprep.subr.mxu0 0.0
    %587 = vmatpush1.msra.mxu0 0.0
    %588 = vmatprep.subr.mxu0 0.0
    %589 = vmatpush1.msra.mxu0 0.0
    %590 = vmatprep.subr.mxu0 0.0
    %591 = vmatpush1.msra.mxu0 0.0
    %592 = vmatprep.subr.mxu0 0.0
    %593 = vmatpush1.msra.mxu0 0.0
    %594 = vmatprep.subr.mxu0 0.0
    %595 = vmatpush1.msra.mxu0 0.0
    %596 = vmatprep.subr.mxu0 0.0
    %597 = vmatpush1.msra.mxu0 0.0
    %598 = vmatprep.subr.mxu0 0.0
    %599 = vmatpush1.msra.mxu0 0.0
    %600 = vmatprep.subr.mxu0 0.0
    %601 = vmatpush1.msra.mxu0 0.0
    %602 = vmatprep.subr.mxu0 0.0
    %603 = vmatpush1.msra.mxu0 0.0
    %604 = vmatprep.subr.mxu0 0.0
    %605 = vmatpush1.msra.mxu0 0.0
    %606 = vmatprep.subr.mxu0 0.0
    %607 = vmatpush1.msra.mxu0 0.0
    %608 = vmatprep.subr.mxu0 0.0
    %609 = vmatpush1.msra.mxu0 0.0
    %610 = vmatprep.subr.mxu0 0.0
    %611 = vmatpush1.msra.mxu0 0.0
    %612 = vmatprep.subr.mxu0 0.0
    %613 = vmatpush1.msra.mxu0 0.0
    %614 = vmatprep.subr.mxu0 0.0
    %615 = vmatpush1.msra.mxu0 0.0
    %616 = vmatprep.subr.mxu0 0.0
    %617 = vmatpush1.msra.mxu0 0.0
    %618 = vmatprep.subr.mxu0 0.0
    %619 = vmatpush1.msra.mxu0 0.0
    %620 = vmatprep.subr.mxu0 0.0
    %621 = vmatpush1.msra.mxu0 0.0
    %622 = vmatprep.subr.mxu0 0.0
    %623 = vmatpush1.msra.mxu0 0.0
    %624 = vmatprep.subr.mxu0 0.0
    %625 = vmatpush1.msra.mxu0 0.0
    %626 = vmatprep.subr.mxu0 0.0
    %627 = vmatpush1.msra.mxu0 0.0
    %628 = vmatprep.mubr.f32.mxu0 0.0
    %629 = vmatmul.mubr.f32.gmra.mrb[0].mxu0 %v562
    %v630 = vpop.f32.mrb[0].mxu0
    %v631 = vadd.f32 0.0, %v630
    %v632 = vpop.f32.mrb[0].mxu0
    %633 = vdwg.mxu0
    %634 = vrot.lane.b32.xlu0 %v297, 120
    %v635 = vpop.permute.xlu0 %634
    %636 = vrot.lane.b32.xlu0 %v289, 88
    %v637 = vpop.permute.xlu0 %636
    %v638 = vsel %vm306, %v635, 0
    %v640 = vsel %vm306, %v637, 0
    %642 = vmatprep.subr.mxu0 0.0
    %643 = vmatpush1.xpose.msra.mxu0 %v640
    %644 = vmatprep.subr.mxu0 0.0
    %645 = vmatpush1.xpose.msra.mxu0 0.0
    %646 = vmatprep.subr.mxu0 0.0
    %647 = vmatpush1.xpose.msra.mxu0 0.0
    %648 = vmatprep.subr.mxu0 0.0
    %649 = vmatpush1.xpose.msra.mxu0 0.0
    %650 = vmatprep.subr.mxu0 0.0
    %651 = vmatpush1.xpose.msra.mxu0 0.0
    %652 = vmatprep.subr.mxu0 0.0
    %653 = vmatpush1.xpose.msra.mxu0 0.0
    %654 = vmatprep.subr.mxu0 0.0
    %655 = vmatpush1.xpose.msra.mxu0 0.0
    %656 = vmatprep.subr.mxu0 0.0
    %657 = vmatpush1.xpose.msra.mxu0 0.0
    %658 = vmatprep.subr.mxu0 0.0
    %659 = vmatpush1.xpose.msra.mxu0 0.0
    %660 = vmatprep.subr.mxu0 0.0
    %661 = vmatpush1.xpose.msra.mxu0 0.0
    %662 = vmatprep.subr.mxu0 0.0
    %663 = vmatpush1.xpose.msra.mxu0 0.0
    %664 = vmatprep.subr.mxu0 0.0
    %665 = vmatpush1.xpose.msra.mxu0 0.0
    %666 = vmatprep.subr.mxu0 0.0
    %667 = vmatpush1.xpose.msra.mxu0 0.0
    %668 = vmatprep.subr.mxu0 0.0
    %669 = vmatpush1.xpose.msra.mxu0 0.0
    %670 = vmatprep.subr.mxu0 0.0
    %671 = vmatpush1.xpose.msra.mxu0 0.0
    %672 = vmatprep.subr.mxu0 0.0
    %673 = vmatpush1.xpose.msra.mxu0 0.0
    %674 = vmatprep.subr.mxu0 0.0
    %675 = vmatpush1.xpose.msra.mxu0 0.0
    %676 = vmatprep.subr.mxu0 0.0
    %677 = vmatpush1.xpose.msra.mxu0 0.0
    %678 = vmatprep.subr.mxu0 0.0
    %679 = vmatpush1.xpose.msra.mxu0 0.0
    %680 = vmatprep.subr.mxu0 0.0
    %681 = vmatpush1.xpose.msra.mxu0 0.0
    %682 = vmatprep.subr.mxu0 0.0
    %683 = vmatpush1.xpose.msra.mxu0 0.0
    %684 = vmatprep.subr.mxu0 0.0
    %685 = vmatpush1.xpose.msra.mxu0 0.0
    %686 = vmatprep.subr.mxu0 0.0
    %687 = vmatpush1.xpose.msra.mxu0 0.0
    %688 = vmatprep.subr.mxu0 0.0
    %689 = vmatpush1.xpose.msra.mxu0 0.0
    %690 = vmatprep.subr.mxu0 0.0
    %691 = vmatpush1.xpose.msra.mxu0 0.0
    %692 = vmatprep.subr.mxu0 0.0
    %693 = vmatpush1.xpose.msra.mxu0 0.0
    %694 = vmatprep.subr.mxu0 0.0
    %695 = vmatpush1.xpose.msra.mxu0 0.0
    %696 = vmatprep.subr.mxu0 0.0
    %697 = vmatpush1.xpose.msra.mxu0 0.0
    %698 = vmatprep.subr.mxu0 0.0
    %699 = vmatpush1.xpose.msra.mxu0 0.0
    %700 = vmatprep.subr.mxu0 0.0
    %701 = vmatpush1.xpose.msra.mxu0 0.0
    %702 = vmatprep.subr.mxu0 0.0
    %703 = vmatpush1.xpose.msra.mxu0 0.0
    %704 = vmatprep.subr.mxu0 0.0
    %705 = vmatpush1.xpose.msra.mxu0 0.0
    %706 = vmatprep.mubr.f32.mxu0 0.0
    %707 = vmatmul.mubr.f32.gmra.mrb[0].mxu0 %v638
    %v708 = vpop.f32.mrb[0].mxu0
    %v709 = vadd.f32 %v302, %v708
    %v710 = vpop.f32.mrb[0].mxu0
    %711 = vdwg.mxu0
    %712 = vrot.lane.b32.xlu0 %v298, 120
    %v713 = vpop.permute.xlu0 %712
    %714 = vrot.lane.b32.xlu0 %v294, 88
    %v715 = vpop.permute.xlu0 %714
    %v716 = vsel %vm306, %v713, 0
    %v718 = vsel %vm306, %v715, 0
    %720 = vmatprep.subr.mxu0 0.0
    %721 = vmatpush1.xpose.msra.mxu0 %v718
    %722 = vmatprep.subr.mxu0 0.0
    %723 = vmatpush1.xpose.msra.mxu0 0.0
    %724 = vmatprep.subr.mxu0 0.0
    %725 = vmatpush1.xpose.msra.mxu0 0.0
    %726 = vmatprep.subr.mxu0 0.0
    %727 = vmatpush1.xpose.msra.mxu0 0.0
    %728 = vmatprep.subr.mxu0 0.0
    %729 = vmatpush1.xpose.msra.mxu0 0.0
    %730 = vmatprep.subr.mxu0 0.0
    %731 = vmatpush1.xpose.msra.mxu0 0.0
    %732 = vmatprep.subr.mxu0 0.0
    %733 = vmatpush1.xpose.msra.mxu0 0.0
    %734 = vmatprep.subr.mxu0 0.0
    %735 = vmatpush1.xpose.msra.mxu0 0.0
    %736 = vmatprep.subr.mxu0 0.0
    %737 = vmatpush1.xpose.msra.mxu0 0.0
    %738 = vmatprep.subr.mxu0 0.0
    %739 = vmatpush1.xpose.msra.mxu0 0.0
    %740 = vmatprep.subr.mxu0 0.0
    %741 = vmatpush1.xpose.msra.mxu0 0.0
    %742 = vmatprep.subr.mxu0 0.0
    %743 = vmatpush1.xpose.msra.mxu0 0.0
    %744 = vmatprep.subr.mxu0 0.0
    %745 = vmatpush1.xpose.msra.mxu0 0.0
    %746 = vmatprep.subr.mxu0 0.0
    %747 = vmatpush1.xpose.msra.mxu0 0.0
    %748 = vmatprep.subr.mxu0 0.0
    %749 = vmatpush1.xpose.msra.mxu0 0.0
    %750 = vmatprep.subr.mxu0 0.0
    %751 = vmatpush1.xpose.msra.mxu0 0.0
    %752 = vmatprep.subr.mxu0 0.0
    %753 = vmatpush1.xpose.msra.mxu0 0.0
    %754 = vmatprep.subr.mxu0 0.0
    %755 = vmatpush1.xpose.msra.mxu0 0.0
    %756 = vmatprep.subr.mxu0 0.0
    %757 = vmatpush1.xpose.msra.mxu0 0.0
    %758 = vmatprep.subr.mxu0 0.0
    %759 = vmatpush1.xpose.msra.mxu0 0.0
    %760 = vmatprep.subr.mxu0 0.0
    %761 = vmatpush1.xpose.msra.mxu0 0.0
    %762 = vmatprep.subr.mxu0 0.0
    %763 = vmatpush1.xpose.msra.mxu0 0.0
    %764 = vmatprep.subr.mxu0 0.0
    %765 = vmatpush1.xpose.msra.mxu0 0.0
    %766 = vmatprep.subr.mxu0 0.0
    %767 = vmatpush1.xpose.msra.mxu0 0.0
    %768 = vmatprep.subr.mxu0 0.0
    %769 = vmatpush1.xpose.msra.mxu0 0.0
    %770 = vmatprep.subr.mxu0 0.0
    %771 = vmatpush1.xpose.msra.mxu0 0.0
    %772 = vmatprep.subr.mxu0 0.0
    %773 = vmatpush1.xpose.msra.mxu0 0.0
    %774 = vmatprep.subr.mxu0 0.0
    %775 = vmatpush1.xpose.msra.mxu0 0.0
    %776 = vmatprep.subr.mxu0 0.0
    %777 = vmatpush1.xpose.msra.mxu0 0.0
    %778 = vmatprep.subr.mxu0 0.0
    %779 = vmatpush1.xpose.msra.mxu0 0.0
    %780 = vmatprep.subr.mxu0 0.0
    %781 = vmatpush1.xpose.msra.mxu0 0.0
    %782 = vmatprep.subr.mxu0 0.0
    %783 = vmatpush1.xpose.msra.mxu0 0.0
    %784 = vmatprep.mubr.f32.mxu0 0.0
    %785 = vmatmul.mubr.f32.gmra.mrb[0].mxu0 %v716
    %v786 = vpop.f32.mrb[0].mxu0
    %v787 = vadd.f32 %v302, %v786
    %v788 = vpop.f32.mrb[0].mxu0
    %789 = vdwg.mxu0
    %v790 = vsel %vm306, %v709, -inf
    %791 = vmax.xlane.f32.xlu0 %v790
    %v792 = vpop.xlane.xlu0 %791
    %v793 = vsel %vm306, %v787, -inf
    %794 = vmax.xlane.f32.xlu0 %v793
    %v795 = vpop.xlane.xlu0 %794
    %v796 = vsub.f32 %v709, %v792
    %v797 = vsub.f32 %v787, %v795
    %v798 = vmul.f32 %v796, 1.442695
    %v799 = vpow.pop %v798
    %v800 = vmul.f32 %v797, 1.442695
    %v801 = vpow.pop %v800
    %v802 = vsel %vm306, %v799, 0.0
    %803 = vadd.xlane.f32.xlu0 %v802
    %v804 = vpop.xlane.xlu0 %803
    %v805 = vsel %vm306, %v801, 0.0
    %806 = vadd.xlane.f32.xlu0 %v805
    %v807 = vpop.xlane.xlu0 %806
    %v808 = vrcp.pop %v804
    %v809 = vmul.f32 %v799, %v808
    %v810 = vrcp.pop %v807
    %v811 = vmul.f32 %v801, %v810
    %812 = vrot.lane.b32.xlu0 %v289, 56
    %v813 = vpop.permute.xlu0 %812
    %v816 = vsel %vm306, %v809, 0
    %818 = vmatprep.subr.mxu0 0.0
    %819 = vmatpush1.msra.mxu0 %v813
    %820 = vmatprep.subr.mxu0 0.0
    %821 = vmatpush1.msra.mxu0 0.0
    %822 = vmatprep.subr.mxu0 0.0
    %823 = vmatpush1.msra.mxu0 0.0
    %824 = vmatprep.subr.mxu0 0.0
    %825 = vmatpush1.msra.mxu0 0.0
    %826 = vmatprep.subr.mxu0 0.0
    %827 = vmatpush1.msra.mxu0 0.0
    %828 = vmatprep.subr.mxu0 0.0
    %829 = vmatpush1.msra.mxu0 0.0
    %830 = vmatprep.subr.mxu0 0.0
    %831 = vmatpush1.msra.mxu0 0.0
    %832 = vmatprep.subr.mxu0 0.0
    %833 = vmatpush1.msra.mxu0 0.0
    %834 = vmatprep.subr.mxu0 0.0
    %835 = vmatpush1.msra.mxu0 0.0
    %836 = vmatprep.subr.mxu0 0.0
    %837 = vmatpush1.msra.mxu0 0.0
    %838 = vmatprep.subr.mxu0 0.0
    %839 = vmatpush1.msra.mxu0 0.0
    %840 = vmatprep.subr.mxu0 0.0
    %841 = vmatpush1.msra.mxu0 0.0
    %842 = vmatprep.subr.mxu0 0.0
    %843 = vmatpush1.msra.mxu0 0.0
    %844 = vmatprep.subr.mxu0 0.0
    %845 = vmatpush1.msra.mxu0 0.0
    %846 = vmatprep.subr.mxu0 0.0
    %847 = vmatpush1.msra.mxu0 0.0
    %848 = vmatprep.subr.mxu0 0.0
    %849 = vmatpush1.msra.mxu0 0.0
    %850 = vmatprep.subr.mxu0 0.0
    %851 = vmatpush1.msra.mxu0 0.0
    %852 = vmatprep.subr.mxu0 0.0
    %853 = vmatpush1.msra.mxu0 0.0
    %854 = vmatprep.subr.mxu0 0.0
    %855 = vmatpush1.msra.mxu0 0.0
    %856 = vmatprep.subr.mxu0 0.0
    %857 = vmatpush1.msra.mxu0 0.0
    %858 = vmatprep.subr.mxu0 0.0
    %859 = vmatpush1.msra.mxu0 0.0
    %860 = vmatprep.subr.mxu0 0.0
    %861 = vmatpush1.msra.mxu0 0.0
    %862 = vmatprep.subr.mxu0 0.0
    %863 = vmatpush1.msra.mxu0 0.0
    %864 = vmatprep.subr.mxu0 0.0
    %865 = vmatpush1.msra.mxu0 0.0
    %866 = vmatprep.subr.mxu0 0.0
    %867 = vmatpush1.msra.mxu0 0.0
    %868 = vmatprep.subr.mxu0 0.0
    %869 = vmatpush1.msra.mxu0 0.0
    %870 = vmatprep.subr.mxu0 0.0
    %871 = vmatpush1.msra.mxu0 0.0
    %872 = vmatprep.subr.mxu0 0.0
    %873 = vmatpush1.msra.mxu0 0.0
    %874 = vmatprep.subr.mxu0 0.0
    %875 = vmatpush1.msra.mxu0 0.0
    %876 = vmatprep.subr.mxu0 0.0
    %877 = vmatpush1.msra.mxu0 0.0
    %878 = vmatprep.subr.mxu0 0.0
    %879 = vmatpush1.msra.mxu0 0.0
    %880 = vmatprep.subr.mxu0 0.0
    %881 = vmatpush1.msra.mxu0 0.0
    %882 = vmatprep.mubr.f32.mxu0 0.0
    %883 = vmatmul.mubr.f32.gmra.mrb[0].mxu0 %v816
    %v884 = vpop.f32.mrb[0].mxu0
    %v885 = vadd.f32 0.0, %v884
    %v886 = vpop.f32.mrb[0].mxu0
    %887 = vdwg.mxu0
    %888 = vrot.lane.b32.xlu0 %v294, 56
    %v889 = vpop.permute.xlu0 %888
    %v892 = vsel %vm306, %v811, 0
    %894 = vmatprep.subr.mxu0 0.0
    %895 = vmatpush1.msra.mxu0 %v889
    %896 = vmatprep.subr.mxu0 0.0
    %897 = vmatpush1.msra.mxu0 0.0
    %898 = vmatprep.subr.mxu0 0.0
    %899 = vmatpush1.msra.mxu0 0.0
    %900 = vmatprep.subr.mxu0 0.0
    %901 = vmatpush1.msra.mxu0 0.0
    %902 = vmatprep.subr.mxu0 0.0
    %903 = vmatpush1.msra.mxu0 0.0
    %904 = vmatprep.subr.mxu0 0.0
    %905 = vmatpush1.msra.mxu0 0.0
    %906 = vmatprep.subr.mxu0 0.0
    %907 = vmatpush1.msra.mxu0 0.0
    %908 = vmatprep.subr.mxu0 0.0
    %909 = vmatpush1.msra.mxu0 0.0
    %910 = vmatprep.subr.mxu0 0.0
    %911 = vmatpush1.msra.mxu0 0.0
    %912 = vmatprep.subr.mxu0 0.0
    %913 = vmatpush1.msra.mxu0 0.0
    %914 = vmatprep.subr.mxu0 0.0
    %915 = vmatpush1.msra.mxu0 0.0
    %916 = vmatprep.subr.mxu0 0.0
    %917 = vmatpush1.msra.mxu0 0.0
    %918 = vmatprep.subr.mxu0 0.0
    %919 = vmatpush1.msra.mxu0 0.0
    %920 = vmatprep.subr.mxu0 0.0
    %921 = vmatpush1.msra.mxu0 0.0
    %922 = vmatprep.subr.mxu0 0.0
    %923 = vmatpush1.msra.mxu0 0.0
    %924 = vmatprep.subr.mxu0 0.0
    %925 = vmatpush1.msra.mxu0 0.0
    %926 = vmatprep.subr.mxu0 0.0
    %927 = vmatpush1.msra.mxu0 0.0
    %928 = vmatprep.subr.mxu0 0.0
    %929 = vmatpush1.msra.mxu0 0.0
    %930 = vmatprep.subr.mxu0 0.0
    %931 = vmatpush1.msra.mxu0 0.0
    %932 = vmatprep.subr.mxu0 0.0
    %933 = vmatpush1.msra.mxu0 0.0
    %934 = vmatprep.subr.mxu0 0.0
    %935 = vmatpush1.msra.mxu0 0.0
    %936 = vmatprep.subr.mxu0 0.0
    %937 = vmatpush1.msra.mxu0 0.0
    %938 = vmatprep.subr.mxu0 0.0
    %939 = vmatpush1.msra.mxu0 0.0
    %940 = vmatprep.subr.mxu0 0.0
    %941 = vmatpush1.msra.mxu0 0.0
    %942 = vmatprep.subr.mxu0 0.0
    %943 = vmatpush1.msra.mxu0 0.0
    %944 = vmatprep.subr.mxu0 0.0
    %945 = vmatpush1.msra.mxu0 0.0
    %946 = vmatprep.subr.mxu0 0.0
    %947 = vmatpush1.msra.mxu0 0.0
    %948 = vmatprep.subr.mxu0 0.0
    %949 = vmatpush1.msra.mxu0 0.0
    %950 = vmatprep.subr.mxu0 0.0
    %951 = vmatpush1.msra.mxu0 0.0
    %952 = vmatprep.subr.mxu0 0.0
    %953 = vmatpush1.msra.mxu0 0.0
    %954 = vmatprep.subr.mxu0 0.0
    %955 = vmatpush1.msra.mxu0 0.0
    %956 = vmatprep.subr.mxu0 0.0
    %957 = vmatpush1.msra.mxu0 0.0
    %958 = vmatprep.mubr.f32.mxu0 0.0
    %959 = vmatmul.mubr.f32.gmra.mrb[0].mxu0 %v892
    %v960 = vpop.f32.mrb[0].mxu0
    %v961 = vadd.f32 0.0, %v960
    %v962 = vpop.f32.mrb[0].mxu0
    %963 = vdwg.mxu0
    %964 = vrot.lane.b32.xlu0 %v297, 112
    %v965 = vpop.permute.xlu0 %964
    %966 = vrot.lane.b32.xlu0 %v289, 80
    %v967 = vpop.permute.xlu0 %966
    %v968 = vsel %vm306, %v965, 0
    %v970 = vsel %vm306, %v967, 0
    %972 = vmatprep.subr.mxu0 0.0
    %973 = vmatpush1.xpose.msra.mxu0 %v970
    %974 = vmatprep.subr.mxu0 0.0
    %975 = vmatpush1.xpose.msra.mxu0 0.0
    %976 = vmatprep.subr.mxu0 0.0
    %977 = vmatpush1.xpose.msra.mxu0 0.0
    %978 = vmatprep.subr.mxu0 0.0
    %979 = vmatpush1.xpose.msra.mxu0 0.0
    %980 = vmatprep.subr.mxu0 0.0
    %981 = vmatpush1.xpose.msra.mxu0 0.0
    %982 = vmatprep.subr.mxu0 0.0
    %983 = vmatpush1.xpose.msra.mxu0 0.0
    %984 = vmatprep.subr.mxu0 0.0
    %985 = vmatpush1.xpose.msra.mxu0 0.0
    %986 = vmatprep.subr.mxu0 0.0
    %987 = vmatpush1.xpose.msra.mxu0 0.0
    %988 = vmatprep.subr.mxu0 0.0
    %989 = vmatpush1.xpose.msra.mxu0 0.0
    %990 = vmatprep.subr.mxu0 0.0
    %991 = vmatpush1.xpose.msra.mxu0 0.0
    %992 = vmatprep.subr.mxu0 0.0
    %993 = vmatpush1.xpose.msra.mxu0 0.0
    %994 = vmatprep.subr.mxu0 0.0
    %995 = vmatpush1.xpose.msra.mxu0 0.0
    %996 = vmatprep.subr.mxu0 0.0
    %997 = vmatpush1.xpose.msra.mxu0 0.0
    %998 = vmatprep.subr.mxu0 0.0
    %999 = vmatpush1.xpose.msra.mxu0 0.0
    %1000 = vmatprep.subr.mxu0 0.0
    %1001 = vmatpush1.xpose.msra.mxu0 0.0
    %1002 = vmatprep.subr.mxu0 0.0
    %1003 = vmatpush1.xpose.msra.mxu0 0.0
    %1004 = vmatprep.subr.mxu0 0.0
    %1005 = vmatpush1.xpose.msra.mxu0 0.0
    %1006 = vmatprep.subr.mxu0 0.0
    %1007 = vmatpush1.xpose.msra.mxu0 0.0
    %1008 = vmatprep.subr.mxu0 0.0
    %1009 = vmatpush1.xpose.msra.mxu0 0.0
    %1010 = vmatprep.subr.mxu0 0.0
    %1011 = vmatpush1.xpose.msra.mxu0 0.0
    %1012 = vmatprep.subr.mxu0 0.0
    %1013 = vmatpush1.xpose.msra.mxu0 0.0
    %1014 = vmatprep.subr.mxu0 0.0
    %1015 = vmatpush1.xpose.msra.mxu0 0.0
    %1016 = vmatprep.subr.mxu0 0.0
    %1017 = vmatpush1.xpose.msra.mxu0 0.0
    %1018 = vmatprep.subr.mxu0 0.0
    %1019 = vmatpush1.xpose.msra.mxu0 0.0
    %1020 = vmatprep.subr.mxu0 0.0
    %1021 = vmatpush1.xpose.msra.mxu0 0.0
    %1022 = vmatprep.subr.mxu0 0.0
    %1023 = vmatpush1.xpose.msra.mxu0 0.0
    %1024 = vmatprep.subr.mxu0 0.0
    %1025 = vmatpush1.xpose.msra.mxu0 0.0
    %1026 = vmatprep.subr.mxu0 0.0
    %1027 = vmatpush1.xpose.msra.mxu0 0.0
    %1028 = vmatprep.subr.mxu0 0.0
    %1029 = vmatpush1.xpose.msra.mxu0 0.0
    %1030 = vmatprep.subr.mxu0 0.0
    %1031 = vmatpush1.xpose.msra.mxu0 0.0
    %1032 = vmatprep.subr.mxu0 0.0
    %1033 = vmatpush1.xpose.msra.mxu0 0.0
    %1034 = vmatprep.subr.mxu0 0.0
    %1035 = vmatpush1.xpose.msra.mxu0 0.0
    %1036 = vmatprep.mubr.f32.mxu0 0.0
    %1037 = vmatmul.mubr.f32.gmra.mrb[0].mxu0 %v968
    %v1038 = vpop.f32.mrb[0].mxu0
    %v1039 = vadd.f32 %v302, %v1038
    %v1040 = vpop.f32.mrb[0].mxu0
    %1041 = vdwg.mxu0
    %1042 = vrot.lane.b32.xlu0 %v298, 112
    %v1043 = vpop.permute.xlu0 %1042
    %1044 = vrot.lane.b32.xlu0 %v294, 80
    %v1045 = vpop.permute.xlu0 %1044
    %v1046 = vsel %vm306, %v1043, 0
    %v1048 = vsel %vm306, %v1045, 0
    %1050 = vmatprep.subr.mxu0 0.0
    %1051 = vmatpush1.xpose.msra.mxu0 %v1048
    %1052 = vmatprep.subr.mxu0 0.0
    %1053 = vmatpush1.xpose.msra.mxu0 0.0
    %1054 = vmatprep.subr.mxu0 0.0
    %1055 = vmatpush1.xpose.msra.mxu0 0.0
    %1056 = vmatprep.subr.mxu0 0.0
    %1057 = vmatpush1.xpose.msra.mxu0 0.0
    %1058 = vmatprep.subr.mxu0 0.0
    %1059 = vmatpush1.xpose.msra.mxu0 0.0
    %1060 = vmatprep.subr.mxu0 0.0
    %1061 = vmatpush1.xpose.msra.mxu0 0.0
    %1062 = vmatprep.subr.mxu0 0.0
    %1063 = vmatpush1.xpose.msra.mxu0 0.0
    %1064 = vmatprep.subr.mxu0 0.0
    %1065 = vmatpush1.xpose.msra.mxu0 0.0
    %1066 = vmatprep.subr.mxu0 0.0
    %1067 = vmatpush1.xpose.msra.mxu0 0.0
    %1068 = vmatprep.subr.mxu0 0.0
    %1069 = vmatpush1.xpose.msra.mxu0 0.0
    %1070 = vmatprep.subr.mxu0 0.0
    %1071 = vmatpush1.xpose.msra.mxu0 0.0
    %1072 = vmatprep.subr.mxu0 0.0
    %1073 = vmatpush1.xpose.msra.mxu0 0.0
    %1074 = vmatprep.subr.mxu0 0.0
    %1075 = vmatpush1.xpose.msra.mxu0 0.0
    %1076 = vmatprep.subr.mxu0 0.0
    %1077 = vmatpush1.xpose.msra.mxu0 0.0
    %1078 = vmatprep.subr.mxu0 0.0
    %1079 = vmatpush1.xpose.msra.mxu0 0.0
    %1080 = vmatprep.subr.mxu0 0.0
    %1081 = vmatpush1.xpose.msra.mxu0 0.0
    %1082 = vmatprep.subr.mxu0 0.0
    %1083 = vmatpush1.xpose.msra.mxu0 0.0
    %1084 = vmatprep.subr.mxu0 0.0
    %1085 = vmatpush1.xpose.msra.mxu0 0.0
    %1086 = vmatprep.subr.mxu0 0.0
    %1087 = vmatpush1.xpose.msra.mxu0 0.0
    %1088 = vmatprep.subr.mxu0 0.0
    %1089 = vmatpush1.xpose.msra.mxu0 0.0
    %1090 = vmatprep.subr.mxu0 0.0
    %1091 = vmatpush1.xpose.msra.mxu0 0.0
    %1092 = vmatprep.subr.mxu0 0.0
    %1093 = vmatpush1.xpose.msra.mxu0 0.0
    %1094 = vmatprep.subr.mxu0 0.0
    %1095 = vmatpush1.xpose.msra.mxu0 0.0
    %1096 = vmatprep.subr.mxu0 0.0
    %1097 = vmatpush1.xpose.msra.mxu0 0.0
    %1098 = vmatprep.subr.mxu0 0.0
    %1099 = vmatpush1.xpose.msra.mxu0 0.0
    %1100 = vmatprep.subr.mxu0 0.0
    %1101 = vmatpush1.xpose.msra.mxu0 0.0
    %1102 = vmatprep.subr.mxu0 0.0
    %1103 = vmatpush1.xpose.msra.mxu0 0.0
    %1104 = vmatprep.subr.mxu0 0.0
    %1105 = vmatpush1.xpose.msra.mxu0 0.0
    %1106 = vmatprep.subr.mxu0 0.0
    %1107 = vmatpush1.xpose.msra.mxu0 0.0
    %1108 = vmatprep.subr.mxu0 0.0
    %1109 = vmatpush1.xpose.msra.mxu0 0.0
    %1110 = vmatprep.subr.mxu0 0.0
    %1111 = vmatpush1.xpose.msra.mxu0 0.0
    %1112 = vmatprep.subr.mxu0 0.0
    %1113 = vmatpush1.xpose.msra.mxu0 0.0
    %1114 = vmatprep.mubr.f32.mxu0 0.0
    %1115 = vmatmul.mubr.f32.gmra.mrb[0].mxu0 %v1046
    %v1116 = vpop.f32.mrb[0].mxu0
    %v1117 = vadd.f32 %v302, %v1116
    %v1118 = vpop.f32.mrb[0].mxu0
    %1119 = vdwg.mxu0
    %v1120 = vsel %vm306, %v1039, -inf
    %1121 = vmax.xlane.f32.xlu0 %v1120
    %v1122 = vpop.xlane.xlu0 %1121
    %v1123 = vsel %vm306, %v1117, -inf
    %1124 = vmax.xlane.f32.xlu0 %v1123
    %v1125 = vpop.xlane.xlu0 %1124
    %v1126 = vsub.f32 %v1039, %v1122
    %v1127 = vsub.f32 %v1117, %v1125
    %v1128 = vmul.f32 %v1126, 1.442695
    %v1129 = vpow.pop %v1128
    %v1130 = vmul.f32 %v1127, 1.442695
    %v1131 = vpow.pop %v1130
    %v1132 = vsel %vm306, %v1129, 0.0
    %1133 = vadd.xlane.f32.xlu0 %v1132
    %v1134 = vpop.xlane.xlu0 %1133
    %v1135 = vsel %vm306, %v1131, 0.0
    %1136 = vadd.xlane.f32.xlu0 %v1135
    %v1137 = vpop.xlane.xlu0 %1136
    %v1138 = vrcp.pop %v1134
    %v1139 = vmul.f32 %v1129, %v1138
    %v1140 = vrcp.pop %v1137
    %v1141 = vmul.f32 %v1131, %v1140
    %1142 = vrot.lane.b32.xlu0 %v289, 48
    %v1143 = vpop.permute.xlu0 %1142
    %v1146 = vsel %vm306, %v1139, 0
    %1148 = vmatprep.subr.mxu0 0.0
    %1149 = vmatpush1.msra.mxu0 %v1143
    %1150 = vmatprep.subr.mxu0 0.0
    %1151 = vmatpush1.msra.mxu0 0.0
    %1152 = vmatprep.subr.mxu0 0.0
    %1153 = vmatpush1.msra.mxu0 0.0
    %1154 = vmatprep.subr.mxu0 0.0
    %1155 = vmatpush1.msra.mxu0 0.0
    %1156 = vmatprep.subr.mxu0 0.0
    %1157 = vmatpush1.msra.mxu0 0.0
    %1158 = vmatprep.subr.mxu0 0.0
    %1159 = vmatpush1.msra.mxu0 0.0
    %1160 = vmatprep.subr.mxu0 0.0
    %1161 = vmatpush1.msra.mxu0 0.0
    %1162 = vmatprep.subr.mxu0 0.0
    %1163 = vmatpush1.msra.mxu0 0.0
    %1164 = vmatprep.subr.mxu0 0.0
    %1165 = vmatpush1.msra.mxu0 0.0
    %1166 = vmatprep.subr.mxu0 0.0
    %1167 = vmatpush1.msra.mxu0 0.0
    %1168 = vmatprep.subr.mxu0 0.0
    %1169 = vmatpush1.msra.mxu0 0.0
    %1170 = vmatprep.subr.mxu0 0.0
    %1171 = vmatpush1.msra.mxu0 0.0
    %1172 = vmatprep.subr.mxu0 0.0
    %1173 = vmatpush1.msra.mxu0 0.0
    %1174 = vmatprep.subr.mxu0 0.0
    %1175 = vmatpush1.msra.mxu0 0.0
    %1176 = vmatprep.subr.mxu0 0.0
    %1177 = vmatpush1.msra.mxu0 0.0
    %1178 = vmatprep.subr.mxu0 0.0
    %1179 = vmatpush1.msra.mxu0 0.0
    %1180 = vmatprep.subr.mxu0 0.0
    %1181 = vmatpush1.msra.mxu0 0.0
    %1182 = vmatprep.subr.mxu0 0.0
    %1183 = vmatpush1.msra.mxu0 0.0
    %1184 = vmatprep.subr.mxu0 0.0
    %1185 = vmatpush1.msra.mxu0 0.0
    %1186 = vmatprep.subr.mxu0 0.0
    %1187 = vmatpush1.msra.mxu0 0.0
    %1188 = vmatprep.subr.mxu0 0.0
    %1189 = vmatpush1.msra.mxu0 0.0
    %1190 = vmatprep.subr.mxu0 0.0
    %1191 = vmatpush1.msra.mxu0 0.0
    %1192 = vmatprep.subr.mxu0 0.0
    %1193 = vmatpush1.msra.mxu0 0.0
    %1194 = vmatprep.subr.mxu0 0.0
    %1195 = vmatpush1.msra.mxu0 0.0
    %1196 = vmatprep.subr.mxu0 0.0
    %1197 = vmatpush1.msra.mxu0 0.0
    %1198 = vmatprep.subr.mxu0 0.0
    %1199 = vmatpush1.msra.mxu0 0.0
    %1200 = vmatprep.subr.mxu0 0.0
    %1201 = vmatpush1.msra.mxu0 0.0
    %1202 = vmatprep.subr.mxu0 0.0
    %1203 = vmatpush1.msra.mxu0 0.0
    %1204 = vmatprep.subr.mxu0 0.0
    %1205 = vmatpush1.msra.mxu0 0.0
    %1206 = vmatprep.subr.mxu0 0.0
    %1207 = vmatpush1.msra.mxu0 0.0
    %1208 = vmatprep.subr.mxu0 0.0
    %1209 = vmatpush1.msra.mxu0 0.0
    %1210 = vmatprep.subr.mxu0 0.0
    %1211 = vmatpush1.msra.mxu0 0.0
    %1212 = vmatprep.mubr.f32.mxu0 0.0
    %1213 = vmatmul.mubr.f32.gmra.mrb[0].mxu0 %v1146
    %v1214 = vpop.f32.mrb[0].mxu0
    %v1215 = vadd.f32 0.0, %v1214
    %v1216 = vpop.f32.mrb[0].mxu0
    %1217 = vdwg.mxu0
    %1218 = vrot.lane.b32.xlu0 %v294, 48
    %v1219 = vpop.permute.xlu0 %1218
    %v1222 = vsel %vm306, %v1141, 0
    %1224 = vmatprep.subr.mxu0 0.0
    %1225 = vmatpush1.msra.mxu0 %v1219
    %1226 = vmatprep.subr.mxu0 0.0
    %1227 = vmatpush1.msra.mxu0 0.0
    %1228 = vmatprep.subr.mxu0 0.0
    %1229 = vmatpush1.msra.mxu0 0.0
    %1230 = vmatprep.subr.mxu0 0.0
    %1231 = vmatpush1.msra.mxu0 0.0
    %1232 = vmatprep.subr.mxu0 0.0
    %1233 = vmatpush1.msra.mxu0 0.0
    %1234 = vmatprep.subr.mxu0 0.0
    %1235 = vmatpush1.msra.mxu0 0.0
    %1236 = vmatprep.subr.mxu0 0.0
    %1237 = vmatpush1.msra.mxu0 0.0
    %1238 = vmatprep.subr.mxu0 0.0
    %1239 = vmatpush1.msra.mxu0 0.0
    %1240 = vmatprep.subr.mxu0 0.0
    %1241 = vmatpush1.msra.mxu0 0.0
    %1242 = vmatprep.subr.mxu0 0.0
    %1243 = vmatpush1.msra.mxu0 0.0
    %1244 = vmatprep.subr.mxu0 0.0
    %1245 = vmatpush1.msra.mxu0 0.0
    %1246 = vmatprep.subr.mxu0 0.0
    %1247 = vmatpush1.msra.mxu0 0.0
    %1248 = vmatprep.subr.mxu0 0.0
    %1249 = vmatpush1.msra.mxu0 0.0
    %1250 = vmatprep.subr.mxu0 0.0
    %1251 = vmatpush1.msra.mxu0 0.0
    %1252 = vmatprep.subr.mxu0 0.0
    %1253 = vmatpush1.msra.mxu0 0.0
    %1254 = vmatprep.subr.mxu0 0.0
    %1255 = vmatpush1.msra.mxu0 0.0
    %1256 = vmatprep.subr.mxu0 0.0
    %1257 = vmatpush1.msra.mxu0 0.0
    %1258 = vmatprep.subr.mxu0 0.0
    %1259 = vmatpush1.msra.mxu0 0.0
    %1260 = vmatprep.subr.mxu0 0.0
    %1261 = vmatpush1.msra.mxu0 0.0
    %1262 = vmatprep.subr.mxu0 0.0
    %1263 = vmatpush1.msra.mxu0 0.0
    %1264 = vmatprep.subr.mxu0 0.0
    %1265 = vmatpush1.msra.mxu0 0.0
    %1266 = vmatprep.subr.mxu0 0.0
    %1267 = vmatpush1.msra.mxu0 0.0
    %1268 = vmatprep.subr.mxu0 0.0
    %1269 = vmatpush1.msra.mxu0 0.0
    %1270 = vmatprep.subr.mxu0 0.0
    %1271 = vmatpush1.msra.mxu0 0.0
    %1272 = vmatprep.subr.mxu0 0.0
    %1273 = vmatpush1.msra.mxu0 0.0
    %1274 = vmatprep.subr.mxu0 0.0
    %1275 = vmatpush1.msra.mxu0 0.0
    %1276 = vmatprep.subr.mxu0 0.0
    %1277 = vmatpush1.msra.mxu0 0.0
    %1278 = vmatprep.subr.mxu0 0.0
    %1279 = vmatpush1.msra.mxu0 0.0
    %1280 = vmatprep.subr.mxu0 0.0
    %1281 = vmatpush1.msra.mxu0 0.0
    %1282 = vmatprep.subr.mxu0 0.0
    %1283 = vmatpush1.msra.mxu0 0.0
    %1284 = vmatprep.subr.mxu0 0.0
    %1285 = vmatpush1.msra.mxu0 0.0
    %1286 = vmatprep.subr.mxu0 0.0
    %1287 = vmatpush1.msra.mxu0 0.0
    %1288 = vmatprep.mubr.f32.mxu0 0.0
    %1289 = vmatmul.mubr.f32.gmra.mrb[0].mxu0 %v1222
    %v1290 = vpop.f32.mrb[0].mxu0
    %v1291 = vadd.f32 0.0, %v1290
    %v1292 = vpop.f32.mrb[0].mxu0
    %1293 = vdwg.mxu0
    %1294 = vrot.lane.b32.xlu0 %v297, 104
    %v1295 = vpop.permute.xlu0 %1294
    %1296 = vrot.lane.b32.xlu0 %v289, 72
    %v1297 = vpop.permute.xlu0 %1296
    %v1298 = vsel %vm306, %v1295, 0
    %v1300 = vsel %vm306, %v1297, 0
    %1302 = vmatprep.subr.mxu0 0.0
    %1303 = vmatpush1.xpose.msra.mxu0 %v1300
    %1304 = vmatprep.subr.mxu0 0.0
    %1305 = vmatpush1.xpose.msra.mxu0 0.0
    %1306 = vmatprep.subr.mxu0 0.0
    %1307 = vmatpush1.xpose.msra.mxu0 0.0
    %1308 = vmatprep.subr.mxu0 0.0
    %1309 = vmatpush1.xpose.msra.mxu0 0.0
    %1310 = vmatprep.subr.mxu0 0.0
    %1311 = vmatpush1.xpose.msra.mxu0 0.0
    %1312 = vmatprep.subr.mxu0 0.0
    %1313 = vmatpush1.xpose.msra.mxu0 0.0
    %1314 = vmatprep.subr.mxu0 0.0
    %1315 = vmatpush1.xpose.msra.mxu0 0.0
    %1316 = vmatprep.subr.mxu0 0.0
    %1317 = vmatpush1.xpose.msra.mxu0 0.0
    %1318 = vmatprep.subr.mxu0 0.0
    %1319 = vmatpush1.xpose.msra.mxu0 0.0
    %1320 = vmatprep.subr.mxu0 0.0
    %1321 = vmatpush1.xpose.msra.mxu0 0.0
    %1322 = vmatprep.subr.mxu0 0.0
    %1323 = vmatpush1.xpose.msra.mxu0 0.0
    %1324 = vmatprep.subr.mxu0 0.0
    %1325 = vmatpush1.xpose.msra.mxu0 0.0
    %1326 = vmatprep.subr.mxu0 0.0
    %1327 = vmatpush1.xpose.msra.mxu0 0.0
    %1328 = vmatprep.subr.mxu0 0.0
    %1329 = vmatpush1.xpose.msra.mxu0 0.0
    %1330 = vmatprep.subr.mxu0 0.0
    %1331 = vmatpush1.xpose.msra.mxu0 0.0
    %1332 = vmatprep.subr.mxu0 0.0
    %1333 = vmatpush1.xpose.msra.mxu0 0.0
    %1334 = vmatprep.subr.mxu0 0.0
    %1335 = vmatpush1.xpose.msra.mxu0 0.0
    %1336 = vmatprep.subr.mxu0 0.0
    %1337 = vmatpush1.xpose.msra.mxu0 0.0
    %1338 = vmatprep.subr.mxu0 0.0
    %1339 = vmatpush1.xpose.msra.mxu0 0.0
    %1340 = vmatprep.subr.mxu0 0.0
    %1341 = vmatpush1.xpose.msra.mxu0 0.0
    %1342 = vmatprep.subr.mxu0 0.0
    %1343 = vmatpush1.xpose.msra.mxu0 0.0
    %1344 = vmatprep.subr.mxu0 0.0
    %1345 = vmatpush1.xpose.msra.mxu0 0.0
    %1346 = vmatprep.subr.mxu0 0.0
    %1347 = vmatpush1.xpose.msra.mxu0 0.0
    %1348 = vmatprep.subr.mxu0 0.0
    %1349 = vmatpush1.xpose.msra.mxu0 0.0
    %1350 = vmatprep.subr.mxu0 0.0
    %1351 = vmatpush1.xpose.msra.mxu0 0.0
    %1352 = vmatprep.subr.mxu0 0.0
    %1353 = vmatpush1.xpose.msra.mxu0 0.0
    %1354 = vmatprep.subr.mxu0 0.0
    %1355 = vmatpush1.xpose.msra.mxu0 0.0
    %1356 = vmatprep.subr.mxu0 0.0
    %1357 = vmatpush1.xpose.msra.mxu0 0.0
    %1358 = vmatprep.subr.mxu0 0.0
    %1359 = vmatpush1.xpose.msra.mxu0 0.0
    %1360 = vmatprep.subr.mxu0 0.0
    %1361 = vmatpush1.xpose.msra.mxu0 0.0
    %1362 = vmatprep.subr.mxu0 0.0
    %1363 = vmatpush1.xpose.msra.mxu0 0.0
    %1364 = vmatprep.subr.mxu0 0.0
    %1365 = vmatpush1.xpose.msra.mxu0 0.0
    %1366 = vmatprep.mubr.f32.mxu0 0.0
    %1367 = vmatmul.mubr.f32.gmra.mrb[0].mxu0 %v1298
    %v1368 = vpop.f32.mrb[0].mxu0
    %v1369 = vadd.f32 %v302, %v1368
    %v1370 = vpop.f32.mrb[0].mxu0
    %1371 = vdwg.mxu0
    %1372 = vrot.lane.b32.xlu0 %v298, 104
    %v1373 = vpop.permute.xlu0 %1372
    %1374 = vrot.lane.b32.xlu0 %v294, 72
    %v1375 = vpop.permute.xlu0 %1374
    %v1376 = vsel %vm306, %v1373, 0
    %v1378 = vsel %vm306, %v1375, 0
    %1380 = vmatprep.subr.mxu0 0.0
    %1381 = vmatpush1.xpose.msra.mxu0 %v1378
    %1382 = vmatprep.subr.mxu0 0.0
    %1383 = vmatpush1.xpose.msra.mxu0 0.0
    %1384 = vmatprep.subr.mxu0 0.0
    %1385 = vmatpush1.xpose.msra.mxu0 0.0
    %1386 = vmatprep.subr.mxu0 0.0
    %1387 = vmatpush1.xpose.msra.mxu0 0.0
    %1388 = vmatprep.subr.mxu0 0.0
    %1389 = vmatpush1.xpose.msra.mxu0 0.0
    %1390 = vmatprep.subr.mxu0 0.0
    %1391 = vmatpush1.xpose.msra.mxu0 0.0
    %1392 = vmatprep.subr.mxu0 0.0
    %1393 = vmatpush1.xpose.msra.mxu0 0.0
    %1394 = vmatprep.subr.mxu0 0.0
    %1395 = vmatpush1.xpose.msra.mxu0 0.0
    %1396 = vmatprep.subr.mxu0 0.0
    %1397 = vmatpush1.xpose.msra.mxu0 0.0
    %1398 = vmatprep.subr.mxu0 0.0
    %1399 = vmatpush1.xpose.msra.mxu0 0.0
    %1400 = vmatprep.subr.mxu0 0.0
    %1401 = vmatpush1.xpose.msra.mxu0 0.0
    %1402 = vmatprep.subr.mxu0 0.0
    %1403 = vmatpush1.xpose.msra.mxu0 0.0
    %1404 = vmatprep.subr.mxu0 0.0
    %1405 = vmatpush1.xpose.msra.mxu0 0.0
    %1406 = vmatprep.subr.mxu0 0.0
    %1407 = vmatpush1.xpose.msra.mxu0 0.0
    %1408 = vmatprep.subr.mxu0 0.0
    %1409 = vmatpush1.xpose.msra.mxu0 0.0
    %1410 = vmatprep.subr.mxu0 0.0
    %1411 = vmatpush1.xpose.msra.mxu0 0.0
    %1412 = vmatprep.subr.mxu0 0.0
    %1413 = vmatpush1.xpose.msra.mxu0 0.0
    %1414 = vmatprep.subr.mxu0 0.0
    %1415 = vmatpush1.xpose.msra.mxu0 0.0
    %1416 = vmatprep.subr.mxu0 0.0
    %1417 = vmatpush1.xpose.msra.mxu0 0.0
    %1418 = vmatprep.subr.mxu0 0.0
    %1419 = vmatpush1.xpose.msra.mxu0 0.0
    %1420 = vmatprep.subr.mxu0 0.0
    %1421 = vmatpush1.xpose.msra.mxu0 0.0
    %1422 = vmatprep.subr.mxu0 0.0
    %1423 = vmatpush1.xpose.msra.mxu0 0.0
    %1424 = vmatprep.subr.mxu0 0.0
    %1425 = vmatpush1.xpose.msra.mxu0 0.0
    %1426 = vmatprep.subr.mxu0 0.0
    %1427 = vmatpush1.xpose.msra.mxu0 0.0
    %1428 = vmatprep.subr.mxu0 0.0
    %1429 = vmatpush1.xpose.msra.mxu0 0.0
    %1430 = vmatprep.subr.mxu0 0.0
    %1431 = vmatpush1.xpose.msra.mxu0 0.0
    %1432 = vmatprep.subr.mxu0 0.0
    %1433 = vmatpush1.xpose.msra.mxu0 0.0
    %1434 = vmatprep.subr.mxu0 0.0
    %1435 = vmatpush1.xpose.msra.mxu0 0.0
    %1436 = vmatprep.subr.mxu0 0.0
    %1437 = vmatpush1.xpose.msra.mxu0 0.0
    %1438 = vmatprep.subr.mxu0 0.0
    %1439 = vmatpush1.xpose.msra.mxu0 0.0
    %1440 = vmatprep.subr.mxu0 0.0
    %1441 = vmatpush1.xpose.msra.mxu0 0.0
    %1442 = vmatprep.subr.mxu0 0.0
    %1443 = vmatpush1.xpose.msra.mxu0 0.0
    %1444 = vmatprep.mubr.f32.mxu0 0.0
    %1445 = vmatmul.mubr.f32.gmra.mrb[0].mxu0 %v1376
    %v1446 = vpop.f32.mrb[0].mxu0
    %v1447 = vadd.f32 %v302, %v1446
    %v1448 = vpop.f32.mrb[0].mxu0
    %1449 = vdwg.mxu0
    %v1450 = vsel %vm306, %v1369, -inf
    %1451 = vmax.xlane.f32.xlu0 %v1450
    %v1452 = vpop.xlane.xlu0 %1451
    %v1453 = vsel %vm306, %v1447, -inf
    %1454 = vmax.xlane.f32.xlu0 %v1453
    %v1455 = vpop.xlane.xlu0 %1454
    %v1456 = vsub.f32 %v1369, %v1452
    %v1457 = vsub.f32 %v1447, %v1455
    %v1458 = vmul.f32 %v1456, 1.442695
    %v1459 = vpow.pop %v1458
    %v1460 = vmul.f32 %v1457, 1.442695
    %v1461 = vpow.pop %v1460
    %v1462 = vsel %vm306, %v1459, 0.0
    %1463 = vadd.xlane.f32.xlu0 %v1462
    %v1464 = vpop.xlane.xlu0 %1463
    %v1465 = vsel %vm306, %v1461, 0.0
    %1466 = vadd.xlane.f32.xlu0 %v1465
    %v1467 = vpop.xlane.xlu0 %1466
    %v1468 = vrcp.pop %v1464
    %v1469 = vmul.f32 %v1459, %v1468
    %v1470 = vrcp.pop %v1467
    %v1471 = vmul.f32 %v1461, %v1470
    %1472 = vrot.lane.b32.xlu0 %v289, 40
    %v1473 = vpop.permute.xlu0 %1472
    %v1476 = vsel %vm306, %v1469, 0
    %1478 = vmatprep.subr.mxu0 0.0
    %1479 = vmatpush1.msra.mxu0 %v1473
    %1480 = vmatprep.subr.mxu0 0.0
    %1481 = vmatpush1.msra.mxu0 0.0
    %1482 = vmatprep.subr.mxu0 0.0
    %1483 = vmatpush1.msra.mxu0 0.0
    %1484 = vmatprep.subr.mxu0 0.0
    %1485 = vmatpush1.msra.mxu0 0.0
    %1486 = vmatprep.subr.mxu0 0.0
    %1487 = vmatpush1.msra.mxu0 0.0
    %1488 = vmatprep.subr.mxu0 0.0
    %1489 = vmatpush1.msra.mxu0 0.0
    %1490 = vmatprep.subr.mxu0 0.0
    %1491 = vmatpush1.msra.mxu0 0.0
    %1492 = vmatprep.subr.mxu0 0.0
    %1493 = vmatpush1.msra.mxu0 0.0
    %1494 = vmatprep.subr.mxu0 0.0
    %1495 = vmatpush1.msra.mxu0 0.0
    %1496 = vmatprep.subr.mxu0 0.0
    %1497 = vmatpush1.msra.mxu0 0.0
    %1498 = vmatprep.subr.mxu0 0.0
    %1499 = vmatpush1.msra.mxu0 0.0
    %1500 = vmatprep.subr.mxu0 0.0
    %1501 = vmatpush1.msra.mxu0 0.0
    %1502 = vmatprep.subr.mxu0 0.0
    %1503 = vmatpush1.msra.mxu0 0.0
    %1504 = vmatprep.subr.mxu0 0.0
    %1505 = vmatpush1.msra.mxu0 0.0
    %1506 = vmatprep.subr.mxu0 0.0
    %1507 = vmatpush1.msra.mxu0 0.0
    %1508 = vmatprep.subr.mxu0 0.0
    %1509 = vmatpush1.msra.mxu0 0.0
    %1510 = vmatprep.subr.mxu0 0.0
    %1511 = vmatpush1.msra.mxu0 0.0
    %1512 = vmatprep.subr.mxu0 0.0
    %1513 = vmatpush1.msra.mxu0 0.0
    %1514 = vmatprep.subr.mxu0 0.0
    %1515 = vmatpush1.msra.mxu0 0.0
    %1516 = vmatprep.subr.mxu0 0.0
    %1517 = vmatpush1.msra.mxu0 0.0
    %1518 = vmatprep.subr.mxu0 0.0
    %1519 = vmatpush1.msra.mxu0 0.0
    %1520 = vmatprep.subr.mxu0 0.0
    %1521 = vmatpush1.msra.mxu0 0.0
    %1522 = vmatprep.subr.mxu0 0.0
    %1523 = vmatpush1.msra.mxu0 0.0
    %1524 = vmatprep.subr.mxu0 0.0
    %1525 = vmatpush1.msra.mxu0 0.0
    %1526 = vmatprep.subr.mxu0 0.0
    %1527 = vmatpush1.msra.mxu0 0.0
    %1528 = vmatprep.subr.mxu0 0.0
    %1529 = vmatpush1.msra.mxu0 0.0
    %1530 = vmatprep.subr.mxu0 0.0
    %1531 = vmatpush1.msra.mxu0 0.0
    %1532 = vmatprep.subr.mxu0 0.0
    %1533 = vmatpush1.msra.mxu0 0.0
    %1534 = vmatprep.subr.mxu0 0.0
    %1535 = vmatpush1.msra.mxu0 0.0
    %1536 = vmatprep.subr.mxu0 0.0
    %1537 = vmatpush1.msra.mxu0 0.0
    %1538 = vmatprep.subr.mxu0 0.0
    %1539 = vmatpush1.msra.mxu0 0.0
    %1540 = vmatprep.subr.mxu0 0.0
    %1541 = vmatpush1.msra.mxu0 0.0
    %1542 = vmatprep.mubr.f32.mxu0 0.0
    %1543 = vmatmul.mubr.f32.gmra.mrb[0].mxu0 %v1476
    %v1544 = vpop.f32.mrb[0].mxu0
    %v1545 = vadd.f32 0.0, %v1544
    %v1546 = vpop.f32.mrb[0].mxu0
    %1547 = vdwg.mxu0
    %1548 = vrot.lane.b32.xlu0 %v294, 40
    %v1549 = vpop.permute.xlu0 %1548
    %v1552 = vsel %vm306, %v1471, 0
    %1554 = vmatprep.subr.mxu0 0.0
    %1555 = vmatpush1.msra.mxu0 %v1549
    %1556 = vmatprep.subr.mxu0 0.0
    %1557 = vmatpush1.msra.mxu0 0.0
    %1558 = vmatprep.subr.mxu0 0.0
    %1559 = vmatpush1.msra.mxu0 0.0
    %1560 = vmatprep.subr.mxu0 0.0
    %1561 = vmatpush1.msra.mxu0 0.0
    %1562 = vmatprep.subr.mxu0 0.0
    %1563 = vmatpush1.msra.mxu0 0.0
    %1564 = vmatprep.subr.mxu0 0.0
    %1565 = vmatpush1.msra.mxu0 0.0
    %1566 = vmatprep.subr.mxu0 0.0
    %1567 = vmatpush1.msra.mxu0 0.0
    %1568 = vmatprep.subr.mxu0 0.0
    %1569 = vmatpush1.msra.mxu0 0.0
    %1570 = vmatprep.subr.mxu0 0.0
    %1571 = vmatpush1.msra.mxu0 0.0
    %1572 = vmatprep.subr.mxu0 0.0
    %1573 = vmatpush1.msra.mxu0 0.0
    %1574 = vmatprep.subr.mxu0 0.0
    %1575 = vmatpush1.msra.mxu0 0.0
    %1576 = vmatprep.subr.mxu0 0.0
    %1577 = vmatpush1.msra.mxu0 0.0
    %1578 = vmatprep.subr.mxu0 0.0
    %1579 = vmatpush1.msra.mxu0 0.0
    %1580 = vmatprep.subr.mxu0 0.0
    %1581 = vmatpush1.msra.mxu0 0.0
    %1582 = vmatprep.subr.mxu0 0.0
    %1583 = vmatpush1.msra.mxu0 0.0
    %1584 = vmatprep.subr.mxu0 0.0
    %1585 = vmatpush1.msra.mxu0 0.0
    %1586 = vmatprep.subr.mxu0 0.0
    %1587 = vmatpush1.msra.mxu0 0.0
    %1588 = vmatprep.subr.mxu0 0.0
    %1589 = vmatpush1.msra.mxu0 0.0
    %1590 = vmatprep.subr.mxu0 0.0
    %1591 = vmatpush1.msra.mxu0 0.0
    %1592 = vmatprep.subr.mxu0 0.0
    %1593 = vmatpush1.msra.mxu0 0.0
    %1594 = vmatprep.subr.mxu0 0.0
    %1595 = vmatpush1.msra.mxu0 0.0
    %1596 = vmatprep.subr.mxu0 0.0
    %1597 = vmatpush1.msra.mxu0 0.0
    %1598 = vmatprep.subr.mxu0 0.0
    %1599 = vmatpush1.msra.mxu0 0.0
    %1600 = vmatprep.subr.mxu0 0.0
    %1601 = vmatpush1.msra.mxu0 0.0
    %1602 = vmatprep.subr.mxu0 0.0
    %1603 = vmatpush1.msra.mxu0 0.0
    %1604 = vmatprep.subr.mxu0 0.0
    %1605 = vmatpush1.msra.mxu0 0.0
    %1606 = vmatprep.subr.mxu0 0.0
    %1607 = vmatpush1.msra.mxu0 0.0
    %1608 = vmatprep.subr.mxu0 0.0
    %1609 = vmatpush1.msra.mxu0 0.0
    %1610 = vmatprep.subr.mxu0 0.0
    %1611 = vmatpush1.msra.mxu0 0.0
    %1612 = vmatprep.subr.mxu0 0.0
    %1613 = vmatpush1.msra.mxu0 0.0
    %1614 = vmatprep.subr.mxu0 0.0
    %1615 = vmatpush1.msra.mxu0 0.0
    %1616 = vmatprep.subr.mxu0 0.0
    %1617 = vmatpush1.msra.mxu0 0.0
    %1618 = vmatprep.mubr.f32.mxu0 0.0
    %1619 = vmatmul.mubr.f32.gmra.mrb[0].mxu0 %v1552
    %v1620 = vpop.f32.mrb[0].mxu0
    %v1621 = vadd.f32 0.0, %v1620
    %v1622 = vpop.f32.mrb[0].mxu0
    %1623 = vdwg.mxu0
    %1626 = vrot.lane.b32.xlu0 %v885, 8
    %v1627 = vpop.permute.xlu0 %1626
    %1628 = vrot.lane.b32.xlu0 %v961, 8
    %v1629 = vpop.permute.xlu0 %1628
    %1634 = vrot.lane.b32.xlu0 %v1215, 16
    %v1635 = vpop.permute.xlu0 %1634
    %1636 = vrot.lane.b32.xlu0 %v1291, 16
    %v1637 = vpop.permute.xlu0 %1636
    %1642 = vrot.lane.b32.xlu0 %v1545, 24
    %v1643 = vpop.permute.xlu0 %1642
    %1644 = vrot.lane.b32.xlu0 %v1621, 24
    %v1645 = vpop.permute.xlu0 %1644
    %v1648 = vsel %vm306, %v555, %v1627
    %v1649 = vsel %vm306, %v631, %v1629
    %vm1650 = vcmask 130048
    %v1651 = vsel %vm1650, %v1648, %v1635
    %v1652 = vsel %vm1650, %v1649, %v1637
    %vm1653 = vcmask 195584
    %v1654 = vsel %vm1653, %v1651, %v1643
    %v1655 = vsel %vm1653, %v1652, %v1645
    %v1657 = vsel %vm172, %v1654, 0
    %v1660 = vsel %vm172, %v1655, 0
    %1662 = vmatprep.subr.mxu0 0.0
    %1663 = vmatpush1.msra.mxu0 %v156
    %1664 = vmatprep.subr.mxu0 0.0
    %1665 = vmatpush1.msra.mxu0 %v157
    %1666 = vmatprep.subr.mxu0 0.0
    %1667 = vmatpush1.msra.mxu0 %v158
    %1668 = vmatprep.subr.mxu0 0.0
    %1669 = vmatpush1.msra.mxu0 %v159
    %1670 = vmatprep.subr.mxu0 0.0
    %1671 = vmatpush1.msra.mxu0 0.0
    %1672 = vmatprep.subr.mxu0 0.0
    %1673 = vmatpush1.msra.mxu0 0.0
    %1674 = vmatprep.subr.mxu0 0.0
    %1675 = vmatpush1.msra.mxu0 0.0
    %1676 = vmatprep.subr.mxu0 0.0
    %1677 = vmatpush1.msra.mxu0 0.0
    %1678 = vmatprep.subr.mxu0 0.0
    %1679 = vmatpush1.msra.mxu0 0.0
    %1680 = vmatprep.subr.mxu0 0.0
    %1681 = vmatpush1.msra.mxu0 0.0
    %1682 = vmatprep.subr.mxu0 0.0
    %1683 = vmatpush1.msra.mxu0 0.0
    %1684 = vmatprep.subr.mxu0 0.0
    %1685 = vmatpush1.msra.mxu0 0.0
    %1686 = vmatprep.subr.mxu0 0.0
    %1687 = vmatpush1.msra.mxu0 0.0
    %1688 = vmatprep.subr.mxu0 0.0
    %1689 = vmatpush1.msra.mxu0 0.0
    %1690 = vmatprep.subr.mxu0 0.0
    %1691 = vmatpush1.msra.mxu0 0.0
    %1692 = vmatprep.subr.mxu0 0.0
    %1693 = vmatpush1.msra.mxu0 0.0
    %1694 = vmatprep.subr.mxu0 0.0
    %1695 = vmatpush1.msra.mxu0 0.0
    %1696 = vmatprep.subr.mxu0 0.0
    %1697 = vmatpush1.msra.mxu0 0.0
    %1698 = vmatprep.subr.mxu0 0.0
    %1699 = vmatpush1.msra.mxu0 0.0
    %1700 = vmatprep.subr.mxu0 0.0
    %1701 = vmatpush1.msra.mxu0 0.0
    %1702 = vmatprep.subr.mxu0 0.0
    %1703 = vmatpush1.msra.mxu0 0.0
    %1704 = vmatprep.subr.mxu0 0.0
    %1705 = vmatpush1.msra.mxu0 0.0
    %1706 = vmatprep.subr.mxu0 0.0
    %1707 = vmatpush1.msra.mxu0 0.0
    %1708 = vmatprep.subr.mxu0 0.0
    %1709 = vmatpush1.msra.mxu0 0.0
    %1710 = vmatprep.subr.mxu0 0.0
    %1711 = vmatpush1.msra.mxu0 0.0
    %1712 = vmatprep.subr.mxu0 0.0
    %1713 = vmatpush1.msra.mxu0 0.0
    %1714 = vmatprep.subr.mxu0 0.0
    %1715 = vmatpush1.msra.mxu0 0.0
    %1716 = vmatprep.subr.mxu0 0.0
    %1717 = vmatpush1.msra.mxu0 0.0
    %1718 = vmatprep.subr.mxu0 0.0
    %1719 = vmatpush1.msra.mxu0 0.0
    %1720 = vmatprep.subr.mxu0 0.0
    %1721 = vmatpush1.msra.mxu0 0.0
    %1722 = vmatprep.subr.mxu0 0.0
    %1723 = vmatpush1.msra.mxu0 0.0
    %1724 = vmatprep.subr.mxu0 0.0
    %1725 = vmatpush1.msra.mxu0 0.0
    %1726 = vmatprep.mubr.f32.mxu0 0.0
    %1727 = vmatmul.mubr.f32.gmra.mrb[0].mxu0 %v1657
    %v1728 = vpop.f32.mrb[0].mxu0
    %v1729 = vadd.f32 0.0, %v1728
    %v1730 = vpop.f32.mrb[0].mxu0
    %1731 = vmatprep.mubr.f32.mxu0 0.0
    %1732 = vmatmul.mubr.f32.gmra.mrb[0].mxu0 %v1660
    %v1733 = vpop.f32.mrb[0].mxu0
    %v1734 = vadd.f32 0.0, %v1733
    %v1735 = vpop.f32.mrb[0].mxu0
    %1736 = vdwg.mxu0
    %v1737 = vadd.f32 %v139, %v1729
    %v1738 = vadd.f32 %v141, %v1734
    %v1739 = vlaneseq
    %v1740 = vshrl.u32 %v1739, 7
    %v1741 = vsub.s32 0, %v1740
    %v1742 = vrot.slane %v147, %v1741
    %v1743 = vadd.f32 %v1737, %v1742
    %v1744 = vadd.f32 %v1738, %v1742
    %v1745 = vsel %vm172, %v1743, 0.0
    %1746 = vadd.xlane.f32.xlu0 %v1745
    %v1747 = vpop.xlane.xlu0 %1746
    %v1748 = vsel %vm172, %v1744, 0.0
    %1749 = vadd.xlane.f32.xlu0 %v1748
    %v1750 = vpop.xlane.xlu0 %1749
    %v1751 = vmul.f32 %v1747, %v179
    %v1752 = vmul.f32 %v1750, %v179
    %v1753 = vsub.f32 %v1743, %v1751
    %v1754 = vsub.f32 %v1744, %v1752
    %v1755 = vmul.f32 %v1753, %v1753
    %v1756 = vmul.f32 %v1754, %v1754
    %v1757 = vsel %vm172, %v1755, 0.0
    %1758 = vadd.xlane.f32.xlu0 %v1757
    %v1759 = vpop.xlane.xlu0 %1758
    %v1760 = vsel %vm172, %v1756, 0.0
    %1761 = vadd.xlane.f32.xlu0 %v1760
    %v1762 = vpop.xlane.xlu0 %1761
    %v1763 = vmul.f32 %v1759, %v179
    %v1764 = vmul.f32 %v1762, %v179
    %v1765 = vadd.f32 %v1763, 1e-12
    %v1766 = vadd.f32 %v1764, 1e-12
    %v1767 = vrsqrt.pop %v1765
    %v1768 = vrsqrt.pop %v1766
    %v1769 = vmul.f32 %v1753, %v1767
    %v1770 = vmul.f32 %v1754, %v1768
    %v1771 = vlaneseq
    %v1772 = vshrl.u32 %v1771, 7
    %v1773 = vsub.s32 0, %v1772
    %v1774 = vrot.slane %v148, %v1773
    %v1775 = vmul.f32 %v1769, %v1774
    %v1776 = vmul.f32 %v1770, %v1774
    %v1777 = vlaneseq
    %v1778 = vshrl.u32 %v1777, 7
    %v1779 = vsub.s32 0, %v1778
    %v1780 = vrot.slane %v149, %v1779
    %v1781 = vadd.f32 %v1775, %v1780
    %v1782 = vadd.f32 %v1776, %v1780
    %v1783 = vlaneseq
    %v1784 = vshrl.u32 %v1783, 7
    %v1785 = vsub.s32 0, %v1784
    %v1786 = vrot.slane %v150, %v1785
    %v1788 = vsel %vm172, %v1781, 0
    %v1791 = vsel %vm172, %v1782, 0
    %1793 = vmatprep.subr.mxu0 0.0
    %1794 = vmatpush1.msra.mxu0 %v160
    %1795 = vmatprep.subr.mxu0 0.0
    %1796 = vmatpush1.msra.mxu0 %v161
    %1797 = vmatprep.subr.mxu0 0.0
    %1798 = vmatpush1.msra.mxu0 %v162
    %1799 = vmatprep.subr.mxu0 0.0
    %1800 = vmatpush1.msra.mxu0 %v163
    %1801 = vmatprep.subr.mxu0 0.0
    %1802 = vmatpush1.msra.mxu0 0.0
    %1803 = vmatprep.subr.mxu0 0.0
    %1804 = vmatpush1.msra.mxu0 0.0
    %1805 = vmatprep.subr.mxu0 0.0
    %1806 = vmatpush1.msra.mxu0 0.0
    %1807 = vmatprep.subr.mxu0 0.0
    %1808 = vmatpush1.msra.mxu0 0.0
    %1809 = vmatprep.subr.mxu0 0.0
    %1810 = vmatpush1.msra.mxu0 0.0
    %1811 = vmatprep.subr.mxu0 0.0
    %1812 = vmatpush1.msra.mxu0 0.0
    %1813 = vmatprep.subr.mxu0 0.0
    %1814 = vmatpush1.msra.mxu0 0.0
    %1815 = vmatprep.subr.mxu0 0.0
    %1816 = vmatpush1.msra.mxu0 0.0
    %1817 = vmatprep.subr.mxu0 0.0
    %1818 = vmatpush1.msra.mxu0 0.0
    %1819 = vmatprep.subr.mxu0 0.0
    %1820 = vmatpush1.msra.mxu0 0.0
    %1821 = vmatprep.subr.mxu0 0.0
    %1822 = vmatpush1.msra.mxu0 0.0
    %1823 = vmatprep.subr.mxu0 0.0
    %1824 = vmatpush1.msra.mxu0 0.0
    %1825 = vmatprep.subr.mxu0 0.0
    %1826 = vmatpush1.msra.mxu0 0.0
    %1827 = vmatprep.subr.mxu0 0.0
    %1828 = vmatpush1.msra.mxu0 0.0
    %1829 = vmatprep.subr.mxu0 0.0
    %1830 = vmatpush1.msra.mxu0 0.0
    %1831 = vmatprep.subr.mxu0 0.0
    %1832 = vmatpush1.msra.mxu0 0.0
    %1833 = vmatprep.subr.mxu0 0.0
    %1834 = vmatpush1.msra.mxu0 0.0
    %1835 = vmatprep.subr.mxu0 0.0
    %1836 = vmatpush1.msra.mxu0 0.0
    %1837 = vmatprep.subr.mxu0 0.0
    %1838 = vmatpush1.msra.mxu0 0.0
    %1839 = vmatprep.subr.mxu0 0.0
    %1840 = vmatpush1.msra.mxu0 0.0
    %1841 = vmatprep.subr.mxu0 0.0
    %1842 = vmatpush1.msra.mxu0 0.0
    %1843 = vmatprep.subr.mxu0 0.0
    %1844 = vmatpush1.msra.mxu0 0.0
    %1845 = vmatprep.subr.mxu0 0.0
    %1846 = vmatpush1.msra.mxu0 0.0
    %1847 = vmatprep.subr.mxu0 0.0
    %1848 = vmatpush1.msra.mxu0 0.0
    %1849 = vmatprep.subr.mxu0 0.0
    %1850 = vmatpush1.msra.mxu0 0.0
    %1851 = vmatprep.subr.mxu0 0.0
    %1852 = vmatpush1.msra.mxu0 0.0
    %1853 = vmatprep.subr.mxu0 0.0
    %1854 = vmatpush1.msra.mxu0 0.0
    %1855 = vmatprep.subr.mxu0 0.0
    %1856 = vmatpush1.msra.mxu0 0.0
    %1857 = vmatprep.mubr.f32.mxu0 0.0
    %1858 = vmatmul.mubr.f32.gmra.mrb[0].mxu0 %v1788
    %v1859 = vpop.f32.mrb[0].mxu0
    %v1860 = vadd.f32 %v1786, %v1859
    %v1861 = vpop.f32.mrb[0].mxu0
    %1862 = vmatprep.mubr.f32.mxu0 0.0
    %1863 = vmatmul.mubr.f32.gmra.mrb[0].mxu0 %v1791
    %v1864 = vpop.f32.mrb[0].mxu0
    %v1865 = vadd.f32 %v1786, %v1864
    %v1866 = vpop.f32.mrb[0].mxu0
    %1867 = vdwg.mxu0
    %v1868 = vmul.f32 %v1860, %v1860
    %v1869 = vmul.f32 %v1865, %v1865
    %v1870 = vmul.f32 %v1860, %v1868
    %v1871 = vmul.f32 %v1865, %v1869
    %v1872 = vmul.f32 %v1870, 0.044715
    %v1873 = vmul.f32 %v1871, 0.044715
    %v1874 = vadd.f32 %v1860, %v1872
    %v1875 = vadd.f32 %v1865, %v1873
    %v1876 = vmul.f32 %v1874, 0.7978846
    %v1877 = vmul.f32 %v1875, 0.7978846
    %v1878 = vtanh.pop %v1876
    %v1879 = vtanh.pop %v1877
    %v1880 = vadd.f32 %v1878, 1.0
    %v1881 = vadd.f32 %v1879, 1.0
    %v1882 = vmul.f32 %v1880, 0.5
    %v1883 = vmul.f32 %v1881, 0.5
    %v1884 = vmul.f32 %v1860, %v1882
    %v1885 = vmul.f32 %v1865, %v1883
    %v1887 = vsel %vm46, %v1884, 0
    %v1890 = vsel %vm46, %v1885, 0
    %1892 = vmatprep.subr.mxu0 0.0
    %1893 = vmatpush1.msra.mxu0 %v164
    %1894 = vmatprep.subr.mxu0 0.0
    %1895 = vmatpush1.msra.mxu0 %v165
    %1896 = vmatprep.subr.mxu0 0.0
    %1897 = vmatpush1.msra.mxu0 %v166
    %1898 = vmatprep.subr.mxu0 0.0
    %1899 = vmatpush1.msra.mxu0 %v167
    %1900 = vmatprep.subr.mxu0 0.0
    %1901 = vmatpush1.msra.mxu0 %v168
    %1902 = vmatprep.subr.mxu0 0.0
    %1903 = vmatpush1.msra.mxu0 %v169
    %1904 = vmatprep.subr.mxu0 0.0
    %1905 = vmatpush1.msra.mxu0 %v170
    %1906 = vmatprep.subr.mxu0 0.0
    %1907 = vmatpush1.msra.mxu0 %v171
    %1908 = vmatprep.subr.mxu0 0.0
    %1909 = vmatpush1.msra.mxu0 0.0
    %1910 = vmatprep.subr.mxu0 0.0
    %1911 = vmatpush1.msra.mxu0 0.0
    %1912 = vmatprep.subr.mxu0 0.0
    %1913 = vmatpush1.msra.mxu0 0.0
    %1914 = vmatprep.subr.mxu0 0.0
    %1915 = vmatpush1.msra.mxu0 0.0
    %1916 = vmatprep.subr.mxu0 0.0
    %1917 = vmatpush1.msra.mxu0 0.0
    %1918 = vmatprep.subr.mxu0 0.0
    %1919 = vmatpush1.msra.mxu0 0.0
    %1920 = vmatprep.subr.mxu0 0.0
    %1921 = vmatpush1.msra.mxu0 0.0
    %1922 = vmatprep.subr.mxu0 0.0
    %1923 = vmatpush1.msra.mxu0 0.0
    %1924 = vmatprep.subr.mxu0 0.0
    %1925 = vmatpush1.msra.mxu0 0.0
    %1926 = vmatprep.subr.mxu0 0.0
    %1927 = vmatpush1.msra.mxu0 0.0
    %1928 = vmatprep.subr.mxu0 0.0
    %1929 = vmatpush1.msra.mxu0 0.0
    %1930 = vmatprep.subr.mxu0 0.0
    %1931 = vmatpush1.msra.mxu0 0.0
    %1932 = vmatprep.subr.mxu0 0.0
    %1933 = vmatpush1.msra.mxu0 0.0
    %1934 = vmatprep.subr.mxu0 0.0
    %1935 = vmatpush1.msra.mxu0 0.0
    %1936 = vmatprep.subr.mxu0 0.0
    %1937 = vmatpush1.msra.mxu0 0.0
    %1938 = vmatprep.subr.mxu0 0.0
    %1939 = vmatpush1.msra.mxu0 0.0
    %1940 = vmatprep.subr.mxu0 0.0
    %1941 = vmatpush1.msra.mxu0 0.0
    %1942 = vmatprep.subr.mxu0 0.0
    %1943 = vmatpush1.msra.mxu0 0.0
    %1944 = vmatprep.subr.mxu0 0.0
    %1945 = vmatpush1.msra.mxu0 0.0
    %1946 = vmatprep.subr.mxu0 0.0
    %1947 = vmatpush1.msra.mxu0 0.0
    %1948 = vmatprep.subr.mxu0 0.0
    %1949 = vmatpush1.msra.mxu0 0.0
    %1950 = vmatprep.subr.mxu0 0.0
    %1951 = vmatpush1.msra.mxu0 0.0
    %1952 = vmatprep.subr.mxu0 0.0
    %1953 = vmatpush1.msra.mxu0 0.0
    %1954 = vmatprep.subr.mxu0 0.0
    %1955 = vmatpush1.msra.mxu0 0.0
    %1956 = vmatprep.mubr.f32.mxu0 0.0
    %1957 = vmatmul.mubr.f32.gmra.mrb[0].mxu0 %v1887
    %v1958 = vpop.f32.mrb[0].mxu0
    %v1959 = vadd.f32 0.0, %v1958
    %v1960 = vpop.f32.mrb[0].mxu0
    %1961 = vmatprep.mubr.f32.mxu0 0.0
    %1962 = vmatmul.mubr.f32.gmra.mrb[0].mxu0 %v1890
    %v1963 = vpop.f32.mrb[0].mxu0
    %v1964 = vadd.f32 0.0, %v1963
    %v1965 = vpop.f32.mrb[0].mxu0
    %1966 = vdwg.mxu0
    %v1967 = vadd.f32 %v1743, %v1959
    %v1968 = vadd.f32 %v1744, %v1964
    %v1969 = vlaneseq
    %v1970 = vshrl.u32 %v1969, 7
    %v1971 = vsub.s32 0, %v1970
    %v1972 = vrot.slane %v151, %v1971
    %v1973 = vadd.f32 %v1967, %v1972
    %v1974 = vadd.f32 %v1968, %v1972
    %v1975 = vld [vmem:[%s2 + $0x18] sm:$0x1]
    %v1976 = vld [vmem:[%s2 + $0x19] sm:$0x1]
    %v1977 = vld [vmem:[%s2 + $0x1a] sm:$0x1]
    %v1978 = vld [vmem:[%s2 + $0x1b] sm:$0x1]
    %v1979 = vld [vmem:[%s2 + $0x1c] sm:$0x1]
    %v1980 = vld [vmem:[%s2 + $0x1d] sm:$0x1]
    %v1981 = vld [vmem:[%s2 + $0x1e] sm:$0x1]
    %v1982 = vld [vmem:[%s2 + $0x1f] sm:$0x1]
    %v1983 = vld [vmem:[%s1 + $0x160] sm:$0xff]
    %v1984 = vld [vmem:[%s1 + $0x168] sm:$0xff]
    %v1985 = vld [vmem:[%s1 + $0x170] sm:$0xff]
    %v1986 = vld [vmem:[%s1 + $0x178] sm:$0xff]
    %v1987 = vld [vmem:[%s1 + $0x180] sm:$0xff]
    %v1988 = vld [vmem:[%s1 + $0x188] sm:$0xff]
    %v1989 = vld [vmem:[%s1 + $0x190] sm:$0xff]
    %v1990 = vld [vmem:[%s1 + $0x198] sm:$0xff]
    %v1991 = vld [vmem:[%s1 + $0x1a0] sm:$0xff]
    %v1992 = vld [vmem:[%s1 + $0x1a8] sm:$0xff]
    %v1993 = vld [vmem:[%s1 + $0x1b0] sm:$0xff]
    %v1994 = vld [vmem:[%s1 + $0x1b8] sm:$0xff]
    %v1995 = vld [vmem:[%s1 + $0x1c0] sm:$0xff]
    %v1996 = vld [vmem:[%s1 + $0x1c8] sm:$0xff]
    %v1997 = vld [vmem:[%s1 + $0x1d0] sm:$0xff]
    %v1998 = vld [vmem:[%s1 + $0x1d8] sm:$0xff]
    %v1999 = vld [vmem:[%s1 + $0x1e0] sm:$0xff]
    %v2000 = vld [vmem:[%s1 + $0x1e8] sm:$0xff]
    %v2001 = vld [vmem:[%s1 + $0x1f0] sm:$0xff]
    %v2002 = vld [vmem:[%s1 + $0x1f8] sm:$0xff]
    %v2003 = vsel %vm172, %v1973, 0.0
    %2004 = vadd.xlane.f32.xlu0 %v2003
    %v2005 = vpop.xlane.xlu0 %2004
    %v2006 = vsel %vm172, %v1974, 0.0
    %2007 = vadd.xlane.f32.xlu0 %v2006
    %v2008 = vpop.xlane.xlu0 %2007
    %v2009 = vmul.f32 %v2005, %v179
    %v2010 = vmul.f32 %v2008, %v179
    %v2011 = vsub.f32 %v1973, %v2009
    %v2012 = vsub.f32 %v1974, %v2010
    %v2013 = vmul.f32 %v2011, %v2011
    %v2014 = vmul.f32 %v2012, %v2012
    %v2015 = vsel %vm172, %v2013, 0.0
    %2016 = vadd.xlane.f32.xlu0 %v2015
    %v2017 = vpop.xlane.xlu0 %2016
    %v2018 = vsel %vm172, %v2014, 0.0
    %2019 = vadd.xlane.f32.xlu0 %v2018
    %v2020 = vpop.xlane.xlu0 %2019
    %v2021 = vmul.f32 %v2017, %v179
    %v2022 = vmul.f32 %v2020, %v179
    %v2023 = vadd.f32 %v2021, 1e-12
    %v2024 = vadd.f32 %v2022, 1e-12
    %v2025 = vrsqrt.pop %v2023
    %v2026 = vrsqrt.pop %v2024
    %v2027 = vmul.f32 %v2011, %v2025
    %v2028 = vmul.f32 %v2012, %v2026
    %v2029 = vlaneseq
    %v2030 = vshrl.u32 %v2029, 7
    %v2031 = vsub.s32 0, %v2030
    %v2032 = vrot.slane %v1975, %v2031
    %v2033 = vmul.f32 %v2027, %v2032
    %v2034 = vmul.f32 %v2028, %v2032
    %v2035 = vlaneseq
    %v2036 = vshrl.u32 %v2035, 7
    %v2037 = vsub.s32 0, %v2036
    %v2038 = vrot.slane %v1976, %v2037
    %v2039 = vadd.f32 %v2033, %v2038
    %v2040 = vadd.f32 %v2034, %v2038
    %v2041 = vlaneseq
    %v2042 = vshrl.u32 %v2041, 7
    %v2043 = vsub.s32 0, %v2042
    %v2044 = vrot.slane %v1977, %v2043
    %v2046 = vsel %vm172, %v2039, 0
    %v2049 = vsel %vm172, %v2040, 0
    %2051 = vmatprep.subr.mxu0 0.0
    %2052 = vmatpush1.msra.mxu0 %v1983
    %2053 = vmatprep.subr.mxu0 0.0
    %2054 = vmatpush1.msra.mxu0 %v1984
    %2055 = vmatprep.subr.mxu0 0.0
    %2056 = vmatpush1.msra.mxu0 %v1985
    %2057 = vmatprep.subr.mxu0 0.0
    %2058 = vmatpush1.msra.mxu0 %v1986
    %2059 = vmatprep.subr.mxu0 0.0
    %2060 = vmatpush1.msra.mxu0 0.0
    %2061 = vmatprep.subr.mxu0 0.0
    %2062 = vmatpush1.msra.mxu0 0.0
    %2063 = vmatprep.subr.mxu0 0.0
    %2064 = vmatpush1.msra.mxu0 0.0
    %2065 = vmatprep.subr.mxu0 0.0
    %2066 = vmatpush1.msra.mxu0 0.0
    %2067 = vmatprep.subr.mxu0 0.0
    %2068 = vmatpush1.msra.mxu0 0.0
    %2069 = vmatprep.subr.mxu0 0.0
    %2070 = vmatpush1.msra.mxu0 0.0
    %2071 = vmatprep.subr.mxu0 0.0
    %2072 = vmatpush1.msra.mxu0 0.0
    %2073 = vmatprep.subr.mxu0 0.0
    %2074 = vmatpush1.msra.mxu0 0.0
    %2075 = vmatprep.subr.mxu0 0.0
    %2076 = vmatpush1.msra.mxu0 0.0
    %2077 = vmatprep.subr.mxu0 0.0
    %2078 = vmatpush1.msra.mxu0 0.0
    %2079 = vmatprep.subr.mxu0 0.0
    %2080 = vmatpush1.msra.mxu0 0.0
    %2081 = vmatprep.subr.mxu0 0.0
    %2082 = vmatpush1.msra.mxu0 0.0
    %2083 = vmatprep.subr.mxu0 0.0
    %2084 = vmatpush1.msra.mxu0 0.0
    %2085 = vmatprep.subr.mxu0 0.0
    %2086 = vmatpush1.msra.mxu0 0.0
    %2087 = vmatprep.subr.mxu0 0.0
    %2088 = vmatpush1.msra.mxu0 0.0
    %2089 = vmatprep.subr.mxu0 0.0
    %2090 = vmatpush1.msra.mxu0 0.0
    %2091 = vmatprep.subr.mxu0 0.0
    %2092 = vmatpush1.msra.mxu0 0.0
    %2093 = vmatprep.subr.mxu0 0.0
    %2094 = vmatpush1.msra.mxu0 0.0
    %2095 = vmatprep.subr.mxu0 0.0
    %2096 = vmatpush1.msra.mxu0 0.0
    %2097 = vmatprep.subr.mxu0 0.0
    %2098 = vmatpush1.msra.mxu0 0.0
    %2099 = vmatprep.subr.mxu0 0.0
    %2100 = vmatpush1.msra.mxu0 0.0
    %2101 = vmatprep.subr.mxu0 0.0
    %2102 = vmatpush1.msra.mxu0 0.0
    %2103 = vmatprep.subr.mxu0 0.0
    %2104 = vmatpush1.msra.mxu0 0.0
    %2105 = vmatprep.subr.mxu0 0.0
    %2106 = vmatpush1.msra.mxu0 0.0
    %2107 = vmatprep.subr.mxu0 0.0
    %2108 = vmatpush1.msra.mxu0 0.0
    %2109 = vmatprep.subr.mxu0 0.0
    %2110 = vmatpush1.msra.mxu0 0.0
    %2111 = vmatprep.subr.mxu0 0.0
    %2112 = vmatpush1.msra.mxu0 0.0
    %2113 = vmatprep.subr.mxu0 0.0
    %2114 = vmatpush1.msra.mxu0 0.0
    %2115 = vmatprep.mubr.f32.mxu0 0.0
    %2116 = vmatmul.mubr.f32.gmra.mrb[0].mxu0 %v2046
    %v2117 = vpop.f32.mrb[0].mxu0
    %v2118 = vadd.f32 %v2044, %v2117
    %v2119 = vpop.f32.mrb[0].mxu0
    %2120 = vmatprep.mubr.f32.mxu0 0.0
    %2121 = vmatmul.mubr.f32.gmra.mrb[0].mxu0 %v2049
    %v2122 = vpop.f32.mrb[0].mxu0
    %v2123 = vadd.f32 %v2044, %v2122
    %v2124 = vpop.f32.mrb[0].mxu0
    %2125 = vdwg.mxu0
    %v2126 = vmul.f32 %v2118, 0.35355338
    %v2127 = vmul.f32 %v2123, 0.35355338
    %2129 = vrot.lane.b32.xlu0 %v2118, 96
    %v2130 = vpop.permute.xlu0 %2129
    %v2132 = vsel %vm306, %v2126, 0
    %v2134 = vsel %vm306, %v2130, 0
    %2136 = vmatprep.subr.mxu0 0.0
    %2137 = vmatpush1.xpose.msra.mxu0 %v2134
    %2138 = vmatprep.subr.mxu0 0.0
    %2139 = vmatpush1.xpose.msra.mxu0 0.0
    %2140 = vmatprep.subr.mxu0 0.0
    %2141 = vmatpush1.xpose.msra.mxu0 0.0
    %2142 = vmatprep.subr.mxu0 0.0
    %2143 = vmatpush1.xpose.msra.mxu0 0.0
    %2144 = vmatprep.subr.mxu0 0.0
    %2145 = vmatpush1.xpose.msra.mxu0 0.0
    %2146 = vmatprep.subr.mxu0 0.0
    %2147 = vmatpush1.xpose.msra.mxu0 0.0
    %2148 = vmatprep.subr.mxu0 0.0
    %2149 = vmatpush1.xpose.msra.mxu0 0.0
    %2150 = vmatprep.subr.mxu0 0.0
    %2151 = vmatpush1.xpose.msra.mxu0 0.0
    %2152 = vmatprep.subr.mxu0 0.0
    %2153 = vmatpush1.xpose.msra.mxu0 0.0
    %2154 = vmatprep.subr.mxu0 0.0
    %2155 = vmatpush1.xpose.msra.mxu0 0.0
    %2156 = vmatprep.subr.mxu0 0.0
    %2157 = vmatpush1.xpose.msra.mxu0 0.0
    %2158 = vmatprep.subr.mxu0 0.0
    %2159 = vmatpush1.xpose.msra.mxu0 0.0
    %2160 = vmatprep.subr.mxu0 0.0
    %2161 = vmatpush1.xpose.msra.mxu0 0.0
    %2162 = vmatprep.subr.mxu0 0.0
    %2163 = vmatpush1.xpose.msra.mxu0 0.0
    %2164 = vmatprep.subr.mxu0 0.0
    %2165 = vmatpush1.xpose.msra.mxu0 0.0
    %2166 = vmatprep.subr.mxu0 0.0
    %2167 = vmatpush1.xpose.msra.mxu0 0.0
    %2168 = vmatprep.subr.mxu0 0.0
    %2169 = vmatpush1.xpose.msra.mxu0 0.0
    %2170 = vmatprep.subr.mxu0 0.0
    %2171 = vmatpush1.xpose.msra.mxu0 0.0
    %2172 = vmatprep.subr.mxu0 0.0
    %2173 = vmatpush1.xpose.msra.mxu0 0.0
    %2174 = vmatprep.subr.mxu0 0.0
    %2175 = vmatpush1.xpose.msra.mxu0 0.0
    %2176 = vmatprep.subr.mxu0 0.0
    %2177 = vmatpush1.xpose.msra.mxu0 0.0
    %2178 = vmatprep.subr.mxu0 0.0
    %2179 = vmatpush1.xpose.msra.mxu0 0.0
    %2180 = vmatprep.subr.mxu0 0.0
    %2181 = vmatpush1.xpose.msra.mxu0 0.0
    %2182 = vmatprep.subr.mxu0 0.0
    %2183 = vmatpush1.xpose.msra.mxu0 0.0
    %2184 = vmatprep.subr.mxu0 0.0
    %2185 = vmatpush1.xpose.msra.mxu0 0.0
    %2186 = vmatprep.subr.mxu0 0.0
    %2187 = vmatpush1.xpose.msra.mxu0 0.0
    %2188 = vmatprep.subr.mxu0 0.0
    %2189 = vmatpush1.xpose.msra.mxu0 0.0
    %2190 = vmatprep.subr.mxu0 0.0
    %2191 = vmatpush1.xpose.msra.mxu0 0.0
    %2192 = vmatprep.subr.mxu0 0.0
    %2193 = vmatpush1.xpose.msra.mxu0 0.0
    %2194 = vmatprep.subr.mxu0 0.0
    %2195 = vmatpush1.xpose.msra.mxu0 0.0
    %2196 = vmatprep.subr.mxu0 0.0
    %2197 = vmatpush1.xpose.msra.mxu0 0.0
    %2198 = vmatprep.subr.mxu0 0.0
    %2199 = vmatpush1.xpose.msra.mxu0 0.0
    %2200 = vmatprep.mubr.f32.mxu0 0.0
    %2201 = vmatmul.mubr.f32.gmra.mrb[0].mxu0 %v2132
    %v2202 = vpop.f32.mrb[0].mxu0
    %v2203 = vadd.f32 %v302, %v2202
    %v2204 = vpop.f32.mrb[0].mxu0
    %2205 = vdwg.mxu0
    %2207 = vrot.lane.b32.xlu0 %v2123, 96
    %v2208 = vpop.permute.xlu0 %2207
    %v2210 = vsel %vm306, %v2127, 0
    %v2212 = vsel %vm306, %v2208, 0
    %2214 = vmatprep.subr.mxu0 0.0
    %2215 = vmatpush1.xpose.msra.mxu0 %v2212
    %2216 = vmatprep.subr.mxu0 0.0
    %2217 = vmatpush1.xpose.msra.mxu0 0.0
    %2218 = vmatprep.subr.mxu0 0.0
    %2219 = vmatpush1.xpose.msra.mxu0 0.0
    %2220 = vmatprep.subr.mxu0 0.0
    %2221 = vmatpush1.xpose.msra.mxu0 0.0
    %2222 = vmatprep.subr.mxu0 0.0
    %2223 = vmatpush1.xpose.msra.mxu0 0.0
    %2224 = vmatprep.subr.mxu0 0.0
    %2225 = vmatpush1.xpose.msra.mxu0 0.0
    %2226 = vmatprep.subr.mxu0 0.0
    %2227 = vmatpush1.xpose.msra.mxu0 0.0
    %2228 = vmatprep.subr.mxu0 0.0
    %2229 = vmatpush1.xpose.msra.mxu0 0.0
    %2230 = vmatprep.subr.mxu0 0.0
    %2231 = vmatpush1.xpose.msra.mxu0 0.0
    %2232 = vmatprep.subr.mxu0 0.0
    %2233 = vmatpush1.xpose.msra.mxu0 0.0
    %2234 = vmatprep.subr.mxu0 0.0
    %2235 = vmatpush1.xpose.msra.mxu0 0.0
    %2236 = vmatprep.subr.mxu0 0.0
    %2237 = vmatpush1.xpose.msra.mxu0 0.0
    %2238 = vmatprep.subr.mxu0 0.0
    %2239 = vmatpush1.xpose.msra.mxu0 0.0
    %2240 = vmatprep.subr.mxu0 0.0
    %2241 = vmatpush1.xpose.msra.mxu0 0.0
    %2242 = vmatprep.subr.mxu0 0.0
    %2243 = vmatpush1.xpose.msra.mxu0 0.0
    %2244 = vmatprep.subr.mxu0 0.0
    %2245 = vmatpush1.xpose.msra.mxu0 0.0
    %2246 = vmatprep.subr.mxu0 0.0
    %2247 = vmatpush1.xpose.msra.mxu0 0.0
    %2248 = vmatprep.subr.mxu0 0.0
    %2249 = vmatpush1.xpose.msra.mxu0 0.0
    %2250 = vmatprep.subr.mxu0 0.0
    %2251 = vmatpush1.xpose.msra.mxu0 0.0
    %2252 = vmatprep.subr.mxu0 0.0
    %2253 = vmatpush1.xpose.msra.mxu0 0.0
    %2254 = vmatprep.subr.mxu0 0.0
    %2255 = vmatpush1.xpose.msra.mxu0 0.0
    %2256 = vmatprep.subr.mxu0 0.0
    %2257 = vmatpush1.xpose.msra.mxu0 0.0
    %2258 = vmatprep.subr.mxu0 0.0
    %2259 = vmatpush1.xpose.msra.mxu0 0.0
    %2260 = vmatprep.subr.mxu0 0.0
    %2261 = vmatpush1.xpose.msra.mxu0 0.0
    %2262 = vmatprep.subr.mxu0 0.0
    %2263 = vmatpush1.xpose.msra.mxu0 0.0
    %2264 = vmatprep.subr.mxu0 0.0
    %2265 = vmatpush1.xpose.msra.mxu0 0.0
    %2266 = vmatprep.subr.mxu0 0.0
    %2267 = vmatpush1.xpose.msra.mxu0 0.0
    %2268 = vmatprep.subr.mxu0 0.0
    %2269 = vmatpush1.xpose.msra.mxu0 0.0
    %2270 = vmatprep.subr.mxu0 0.0
    %2271 = vmatpush1.xpose.msra.mxu0 0.0
    %2272 = vmatprep.subr.mxu0 0.0
    %2273 = vmatpush1.xpose.msra.mxu0 0.0
    %2274 = vmatprep.subr.mxu0 0.0
    %2275 = vmatpush1.xpose.msra.mxu0 0.0
    %2276 = vmatprep.subr.mxu0 0.0
    %2277 = vmatpush1.xpose.msra.mxu0 0.0
    %2278 = vmatprep.mubr.f32.mxu0 0.0
    %2279 = vmatmul.mubr.f32.gmra.mrb[0].mxu0 %v2210
    %v2280 = vpop.f32.mrb[0].mxu0
    %v2281 = vadd.f32 %v302, %v2280
    %v2282 = vpop.f32.mrb[0].mxu0
    %2283 = vdwg.mxu0
    %v2284 = vsel %vm306, %v2203, -inf
    %2285 = vmax.xlane.f32.xlu0 %v2284
    %v2286 = vpop.xlane.xlu0 %2285
    %v2287 = vsel %vm306, %v2281, -inf
    %2288 = vmax.xlane.f32.xlu0 %v2287
    %v2289 = vpop.xlane.xlu0 %2288
    %v2290 = vsub.f32 %v2203, %v2286
    %v2291 = vsub.f32 %v2281, %v2289
    %v2292 = vmul.f32 %v2290, 1.442695
    %v2293 = vpow.pop %v2292
    %v2294 = vmul.f32 %v2291, 1.442695
    %v2295 = vpow.pop %v2294
    %v2296 = vsel %vm306, %v2293, 0.0
    %2297 = vadd.xlane.f32.xlu0 %v2296
    %v2298 = vpop.xlane.xlu0 %2297
    %v2299 = vsel %vm306, %v2295, 0.0
    %2300 = vadd.xlane.f32.xlu0 %v2299
    %v2301 = vpop.xlane.xlu0 %2300
    %v2302 = vrcp.pop %v2298
    %v2303 = vmul.f32 %v2293, %v2302
    %v2304 = vrcp.pop %v2301
    %v2305 = vmul.f32 %v2295, %v2304
    %2306 = vrot.lane.b32.xlu0 %v2118, 64
    %v2307 = vpop.permute.xlu0 %2306
    %v2310 = vsel %vm306, %v2303, 0
    %2312 = vmatprep.subr.mxu0 0.0
    %2313 = vmatpush1.msra.mxu0 %v2307
    %2314 = vmatprep.subr.mxu0 0.0
    %2315 = vmatpush1.msra.mxu0 0.0
    %2316 = vmatprep.subr.mxu0 0.0
    %2317 = vmatpush1.msra.mxu0 0.0
    %2318 = vmatprep.subr.mxu0 0.0
    %2319 = vmatpush1.msra.mxu0 0.0
    %2320 = vmatprep.subr.mxu0 0.0
    %2321 = vmatpush1.msra.mxu0 0.0
    %2322 = vmatprep.subr.mxu0 0.0
    %2323 = vmatpush1.msra.mxu0 0.0
    %2324 = vmatprep.subr.mxu0 0.0
    %2325 = vmatpush1.msra.mxu0 0.0
    %2326 = vmatprep.subr.mxu0 0.0
    %2327 = vmatpush1.msra.mxu0 0.0
    %2328 = vmatprep.subr.mxu0 0.0
    %2329 = vmatpush1.msra.mxu0 0.0
    %2330 = vmatprep.subr.mxu0 0.0
    %2331 = vmatpush1.msra.mxu0 0.0
    %2332 = vmatprep.subr.mxu0 0.0
    %2333 = vmatpush1.msra.mxu0 0.0
    %2334 = vmatprep.subr.mxu0 0.0
    %2335 = vmatpush1.msra.mxu0 0.0
    %2336 = vmatprep.subr.mxu0 0.0
    %2337 = vmatpush1.msra.mxu0 0.0
    %2338 = vmatprep.subr.mxu0 0.0
    %2339 = vmatpush1.msra.mxu0 0.0
    %2340 = vmatprep.subr.mxu0 0.0
    %2341 = vmatpush1.msra.mxu0 0.0
    %2342 = vmatprep.subr.mxu0 0.0
    %2343 = vmatpush1.msra.mxu0 0.0
    %2344 = vmatprep.subr.mxu0 0.0
    %2345 = vmatpush1.msra.mxu0 0.0
    %2346 = vmatprep.subr.mxu0 0.0
    %2347 = vmatpush1.msra.mxu0 0.0
    %2348 = vmatprep.subr.mxu0 0.0
    %2349 = vmatpush1.msra.mxu0 0.0
    %2350 = vmatprep.subr.mxu0 0.0
    %2351 = vmatpush1.msra.mxu0 0.0
    %2352 = vmatprep.subr.mxu0 0.0
    %2353 = vmatpush1.msra.mxu0 0.0
    %2354 = vmatprep.subr.mxu0 0.0
    %2355 = vmatpush1.msra.mxu0 0.0
    %2356 = vmatprep.subr.mxu0 0.0
    %2357 = vmatpush1.msra.mxu0 0.0
    %2358 = vmatprep.subr.mxu0 0.0
    %2359 = vmatpush1.msra.mxu0 0.0
    %2360 = vmatprep.subr.mxu0 0.0
    %2361 = vmatpush1.msra.mxu0 0.0
    %2362 = vmatprep.subr.mxu0 0.0
    %2363 = vmatpush1.msra.mxu0 0.0
    %2364 = vmatprep.subr.mxu0 0.0
    %2365 = vmatpush1.msra.mxu0 0.0
    %2366 = vmatprep.subr.mxu0 0.0
    %2367 = vmatpush1.msra.mxu0 0.0
    %2368 = vmatprep.subr.mxu0 0.0
    %2369 = vmatpush1.msra.mxu0 0.0
    %2370 = vmatprep.subr.mxu0 0.0
    %2371 = vmatpush1.msra.mxu0 0.0
    %2372 = vmatprep.subr.mxu0 0.0
    %2373 = vmatpush1.msra.mxu0 0.0
    %2374 = vmatprep.subr.mxu0 0.0
    %2375 = vmatpush1.msra.mxu0 0.0
    %2376 = vmatprep.mubr.f32.mxu0 0.0
    %2377 = vmatmul.mubr.f32.gmra.mrb[0].mxu0 %v2310
    %v2378 = vpop.f32.mrb[0].mxu0
    %v2379 = vadd.f32 0.0, %v2378
    %v2380 = vpop.f32.mrb[0].mxu0
    %2381 = vdwg.mxu0
    %2382 = vrot.lane.b32.xlu0 %v2123, 64
    %v2383 = vpop.permute.xlu0 %2382
    %v2386 = vsel %vm306, %v2305, 0
    %2388 = vmatprep.subr.mxu0 0.0
    %2389 = vmatpush1.msra.mxu0 %v2383
    %2390 = vmatprep.subr.mxu0 0.0
    %2391 = vmatpush1.msra.mxu0 0.0
    %2392 = vmatprep.subr.mxu0 0.0
    %2393 = vmatpush1.msra.mxu0 0.0
    %2394 = vmatprep.subr.mxu0 0.0
    %2395 = vmatpush1.msra.mxu0 0.0
    %2396 = vmatprep.subr.mxu0 0.0
    %2397 = vmatpush1.msra.mxu0 0.0
    %2398 = vmatprep.subr.mxu0 0.0
    %2399 = vmatpush1.msra.mxu0 0.0
    %2400 = vmatprep.subr.mxu0 0.0
    %2401 = vmatpush1.msra.mxu0 0.0
    %2402 = vmatprep.subr.mxu0 0.0
    %2403 = vmatpush1.msra.mxu0 0.0
    %2404 = vmatprep.subr.mxu0 0.0
    %2405 = vmatpush1.msra.mxu0 0.0
    %2406 = vmatprep.subr.mxu0 0.0
    %2407 = vmatpush1.msra.mxu0 0.0
    %2408 = vmatprep.subr.mxu0 0.0
    %2409 = vmatpush1.msra.mxu0 0.0
    %2410 = vmatprep.subr.mxu0 0.0
    %2411 = vmatpush1.msra.mxu0 0.0
    %2412 = vmatprep.subr.mxu0 0.0
    %2413 = vmatpush1.msra.mxu0 0.0
    %2414 = vmatprep.subr.mxu0 0.0
    %2415 = vmatpush1.msra.mxu0 0.0
    %2416 = vmatprep.subr.mxu0 0.0
    %2417 = vmatpush1.msra.mxu0 0.0
    %2418 = vmatprep.subr.mxu0 0.0
    %2419 = vmatpush1.msra.mxu0 0.0
    %2420 = vmatprep.subr.mxu0 0.0
    %2421 = vmatpush1.msra.mxu0 0.0
    %2422 = vmatprep.subr.mxu0 0.0
    %2423 = vmatpush1.msra.mxu0 0.0
    %2424 = vmatprep.subr.mxu0 0.0
    %2425 = vmatpush1.msra.mxu0 0.0
    %2426 = vmatprep.subr.mxu0 0.0
    %2427 = vmatpush1.msra.mxu0 0.0
    %2428 = vmatprep.subr.mxu0 0.0
    %2429 = vmatpush1.msra.mxu0 0.0
    %2430 = vmatprep.subr.mxu0 0.0
    %2431 = vmatpush1.msra.mxu0 0.0
    %2432 = vmatprep.subr.mxu0 0.0
    %2433 = vmatpush1.msra.mxu0 0.0
    %2434 = vmatprep.subr.mxu0 0.0
    %2435 = vmatpush1.msra.mxu0 0.0
    %2436 = vmatprep.subr.mxu0 0.0
    %2437 = vmatpush1.msra.mxu0 0.0
    %2438 = vmatprep.subr.mxu0 0.0
    %2439 = vmatpush1.msra.mxu0 0.0
    %2440 = vmatprep.subr.mxu0 0.0
    %2441 = vmatpush1.msra.mxu0 0.0
    %2442 = vmatprep.subr.mxu0 0.0
    %2443 = vmatpush1.msra.mxu0 0.0
    %2444 = vmatprep.subr.mxu0 0.0
    %2445 = vmatpush1.msra.mxu0 0.0
    %2446 = vmatprep.subr.mxu0 0.0
    %2447 = vmatpush1.msra.mxu0 0.0
    %2448 = vmatprep.subr.mxu0 0.0
    %2449 = vmatpush1.msra.mxu0 0.0
    %2450 = vmatprep.subr.mxu0 0.0
    %2451 = vmatpush1.msra.mxu0 0.0
    %2452 = vmatprep.mubr.f32.mxu0 0.0
    %2453 = vmatmul.mubr.f32.gmra.mrb[0].mxu0 %v2386
    %v2454 = vpop.f32.mrb[0].mxu0
    %v2455 = vadd.f32 0.0, %v2454
    %v2456 = vpop.f32.mrb[0].mxu0
    %2457 = vdwg.mxu0
    %2458 = vrot.lane.b32.xlu0 %v2126, 120
    %v2459 = vpop.permute.xlu0 %2458
    %2460 = vrot.lane.b32.xlu0 %v2118, 88
    %v2461 = vpop.permute.xlu0 %2460
    %v2462 = vsel %vm306, %v2459, 0
    %v2464 = vsel %vm306, %v2461, 0
    %2466 = vmatprep.subr.mxu0 0.0
    %2467 = vmatpush1.xpose.msra.mxu0 %v2464
    %2468 = vmatprep.subr.mxu0 0.0
    %2469 = vmatpush1.xpose.msra.mxu0 0.0
    %2470 = vmatprep.subr.mxu0 0.0
    %2471 = vmatpush1.xpose.msra.mxu0 0.0
    %2472 = vmatprep.subr.mxu0 0.0
    %2473 = vmatpush1.xpose.msra.mxu0 0.0
    %2474 = vmatprep.subr.mxu0 0.0
    %2475 = vmatpush1.xpose.msra.mxu0 0.0
    %2476 = vmatprep.subr.mxu0 0.0
    %2477 = vmatpush1.xpose.msra.mxu0 0.0
    %2478 = vmatprep.subr.mxu0 0.0
    %2479 = vmatpush1.xpose.msra.mxu0 0.0
    %2480 = vmatprep.subr.mxu0 0.0
    %2481 = vmatpush1.xpose.msra.mxu0 0.0
    %2482 = vmatprep.subr.mxu0 0.0
    %2483 = vmatpush1.xpose.msra.mxu0 0.0
    %2484 = vmatprep.subr.mxu0 0.0
    %2485 = vmatpush1.xpose.msra.mxu0 0.0
    %2486 = vmatprep.subr.mxu0 0.0
    %2487 = vmatpush1.xpose.msra.mxu0 0.0
    %2488 = vmatprep.subr.mxu0 0.0
    %2489 = vmatpush1.xpose.msra.mxu0 0.0
    %2490 = vmatprep.subr.mxu0 0.0
    %2491 = vmatpush1.xpose.msra.mxu0 0.0
    %2492 = vmatprep.subr.mxu0 0.0
    %2493 = vmatpush1.xpose.msra.mxu0 0.0
    %2494 = vmatprep.subr.mxu0 0.0
    %2495 = vmatpush1.xpose.msra.mxu0 0.0
    %2496 = vmatprep.subr.mxu0 0.0
    %2497 = vmatpush1.xpose.msra.mxu0 0.0
    %2498 = vmatprep.subr.mxu0 0.0
    %2499 = vmatpush1.xpose.msra.mxu0 0.0
    %2500 = vmatprep.subr.mxu0 0.0
    %2501 = vmatpush1.xpose.msra.mxu0 0.0
    %2502 = vmatprep.subr.mxu0 0.0
    %2503 = vmatpush1.xpose.msra.mxu0 0.0
    %2504 = vmatprep.subr.mxu0 0.0
    %2505 = vmatpush1.xpose.msra.mxu0 0.0
    %2506 = vmatprep.subr.mxu0 0.0
    %2507 = vmatpush1.xpose.msra.mxu0 0.0
    %2508 = vmatprep.subr.mxu0 0.0
    %2509 = vmatpush1.xpose.msra.mxu0 0.0
    %2510 = vmatprep.subr.mxu0 0.0
    %2511 = vmatpush1.xpose.msra.mxu0 0.0
    %2512 = vmatprep.subr.mxu0 0.0
    %2513 = vmatpush1.xpose.msra.mxu0 0.0
    %2514 = vmatprep.subr.mxu0 0.0
    %2515 = vmatpush1.xpose.msra.mxu0 0.0
    %2516 = vmatprep.subr.mxu0 0.0
    %2517 = vmatpush1.xpose.msra.mxu0 0.0
    %2518 = vmatprep.subr.mxu0 0.0
    %2519 = vmatpush1.xpose.msra.mxu0 0.0
    %2520 = vmatprep.subr.mxu0 0.0
    %2521 = vmatpush1.xpose.msra.mxu0 0.0
    %2522 = vmatprep.subr.mxu0 0.0
    %2523 = vmatpush1.xpose.msra.mxu0 0.0
    %2524 = vmatprep.subr.mxu0 0.0
    %2525 = vmatpush1.xpose.msra.mxu0 0.0
    %2526 = vmatprep.subr.mxu0 0.0
    %2527 = vmatpush1.xpose.msra.mxu0 0.0
    %2528 = vmatprep.subr.mxu0 0.0
    %2529 = vmatpush1.xpose.msra.mxu0 0.0
    %2530 = vmatprep.mubr.f32.mxu0 0.0
    %2531 = vmatmul.mubr.f32.gmra.mrb[0].mxu0 %v2462
    %v2532 = vpop.f32.mrb[0].mxu0
    %v2533 = vadd.f32 %v302, %v2532
    %v2534 = vpop.f32.mrb[0].mxu0
    %2535 = vdwg.mxu0
    %2536 = vrot.lane.b32.xlu0 %v2127, 120
    %v2537 = vpop.permute.xlu0 %2536
    %2538 = vrot.lane.b32.xlu0 %v2123, 88
    %v2539 = vpop.permute.xlu0 %2538
    %v2540 = vsel %vm306, %v2537, 0
    %v2542 = vsel %vm306, %v2539, 0
    %2544 = vmatprep.subr.mxu0 0.0
    %2545 = vmatpush1.xpose.msra.mxu0 %v2542
    %2546 = vmatprep.subr.mxu0 0.0
    %2547 = vmatpush1.xpose.msra.mxu0 0.0
    %2548 = vmatprep.subr.mxu0 0.0
    %2549 = vmatpush1.xpose.msra.mxu0 0.0
    %2550 = vmatprep.subr.mxu0 0.0
    %2551 = vmatpush1.xpose.msra.mxu0 0.0
    %2552 = vmatprep.subr.mxu0 0.0
    %2553 = vmatpush1.xpose.msra.mxu0 0.0
    %2554 = vmatprep.subr.mxu0 0.0
    %2555 = vmatpush1.xpose.msra.mxu0 0.0
    %2556 = vmatprep.subr.mxu0 0.0
    %2557 = vmatpush1.xpose.msra.mxu0 0.0
    %2558 = vmatprep.subr.mxu0 0.0
    %2559 = vmatpush1.xpose.msra.mxu0 0.0
    %2560 = vmatprep.subr.mxu0 0.0
    %2561 = vmatpush1.xpose.msra.mxu0 0.0
    %2562 = vmatprep.subr.mxu0 0.0
    %2563 = vmatpush1.xpose.msra.mxu0 0.0
    %2564 = vmatprep.subr.mxu0 0.0
    %2565 = vmatpush1.xpose.msra.mxu0 0.0
    %2566 = vmatprep.subr.mxu0 0.0
    %2567 = vmatpush1.xpose.msra.mxu0 0.0
    %2568 = vmatprep.subr.mxu0 0.0
    %2569 = vmatpush1.xpose.msra.mxu0 0.0
    %2570 = vmatprep.subr.mxu0 0.0
    %2571 = vmatpush1.xpose.msra.mxu0 0.0
    %2572 = vmatprep.subr.mxu0 0.0
    %2573 = vmatpush1.xpose.msra.mxu0 0.0
    %2574 = vmatprep.subr.mxu0 0.0
    %2575 = vmatpush1.xpose.msra.mxu0 0.0
    %2576 = vmatprep.subr.mxu0 0.0
    %2577 = vmatpush1.xpose.msra.mxu0 0.0
    %2578 = vmatprep.subr.mxu0 0.0
    %2579 = vmatpush1.xpose.msra.mxu0 0.0
    %2580 = vmatprep.subr.mxu0 0.0
    %2581 = vmatpush1.xpose.msra.mxu0 0.0
    %2582 = vmatprep.subr.mxu0 0.0
    %2583 = vmatpush1.xpose.msra.mxu0 0.0
    %2584 = vmatprep.subr.mxu0 0.0
    %2585 = vmatpush1.xpose.msra.mxu0 0.0
    %2586 = vmatprep.subr.mxu0 0.0
    %2587 = vmatpush1.xpose.msra.mxu0 0.0
    %2588 = vmatprep.subr.mxu0 0.0
    %2589 = vmatpush1.xpose.msra.mxu0 0.0
    %2590 = vmatprep.subr.mxu0 0.0
    %2591 = vmatpush1.xpose.msra.mxu0 0.0
    %2592 = vmatprep.subr.mxu0 0.0
    %2593 = vmatpush1.xpose.msra.mxu0 0.0
    %2594 = vmatprep.subr.mxu0 0.0
    %2595 = vmatpush1.xpose.msra.mxu0 0.0
    %2596 = vmatprep.subr.mxu0 0.0
    %2597 = vmatpush1.xpose.msra.mxu0 0.0
    %2598 = vmatprep.subr.mxu0 0.0
    %2599 = vmatpush1.xpose.msra.mxu0 0.0
    %2600 = vmatprep.subr.mxu0 0.0
    %2601 = vmatpush1.xpose.msra.mxu0 0.0
    %2602 = vmatprep.subr.mxu0 0.0
    %2603 = vmatpush1.xpose.msra.mxu0 0.0
    %2604 = vmatprep.subr.mxu0 0.0
    %2605 = vmatpush1.xpose.msra.mxu0 0.0
    %2606 = vmatprep.subr.mxu0 0.0
    %2607 = vmatpush1.xpose.msra.mxu0 0.0
    %2608 = vmatprep.mubr.f32.mxu0 0.0
    %2609 = vmatmul.mubr.f32.gmra.mrb[0].mxu0 %v2540
    %v2610 = vpop.f32.mrb[0].mxu0
    %v2611 = vadd.f32 %v302, %v2610
    %v2612 = vpop.f32.mrb[0].mxu0
    %2613 = vdwg.mxu0
    %v2614 = vsel %vm306, %v2533, -inf
    %2615 = vmax.xlane.f32.xlu0 %v2614
    %v2616 = vpop.xlane.xlu0 %2615
    %v2617 = vsel %vm306, %v2611, -inf
    %2618 = vmax.xlane.f32.xlu0 %v2617
    %v2619 = vpop.xlane.xlu0 %2618
    %v2620 = vsub.f32 %v2533, %v2616
    %v2621 = vsub.f32 %v2611, %v2619
    %v2622 = vmul.f32 %v2620, 1.442695
    %v2623 = vpow.pop %v2622
    %v2624 = vmul.f32 %v2621, 1.442695
    %v2625 = vpow.pop %v2624
    %v2626 = vsel %vm306, %v2623, 0.0
    %2627 = vadd.xlane.f32.xlu0 %v2626
    %v2628 = vpop.xlane.xlu0 %2627
    %v2629 = vsel %vm306, %v2625, 0.0
    %2630 = vadd.xlane.f32.xlu0 %v2629
    %v2631 = vpop.xlane.xlu0 %2630
    %v2632 = vrcp.pop %v2628
    %v2633 = vmul.f32 %v2623, %v2632
    %v2634 = vrcp.pop %v2631
    %v2635 = vmul.f32 %v2625, %v2634
    %2636 = vrot.lane.b32.xlu0 %v2118, 56
    %v2637 = vpop.permute.xlu0 %2636
    %v2640 = vsel %vm306, %v2633, 0
    %2642 = vmatprep.subr.mxu0 0.0
    %2643 = vmatpush1.msra.mxu0 %v2637
    %2644 = vmatprep.subr.mxu0 0.0
    %2645 = vmatpush1.msra.mxu0 0.0
    %2646 = vmatprep.subr.mxu0 0.0
    %2647 = vmatpush1.msra.mxu0 0.0
    %2648 = vmatprep.subr.mxu0 0.0
    %2649 = vmatpush1.msra.mxu0 0.0
    %2650 = vmatprep.subr.mxu0 0.0
    %2651 = vmatpush1.msra.mxu0 0.0
    %2652 = vmatprep.subr.mxu0 0.0
    %2653 = vmatpush1.msra.mxu0 0.0
    %2654 = vmatprep.subr.mxu0 0.0
    %2655 = vmatpush1.msra.mxu0 0.0
    %2656 = vmatprep.subr.mxu0 0.0
    %2657 = vmatpush1.msra.mxu0 0.0
    %2658 = vmatprep.subr.mxu0 0.0
    %2659 = vmatpush1.msra.mxu0 0.0
    %2660 = vmatprep.subr.mxu0 0.0
    %2661 = vmatpush1.msra.mxu0 0.0
    %2662 = vmatprep.subr.mxu0 0.0
    %2663 = vmatpush1.msra.mxu0 0.0
    %2664 = vmatprep.subr.mxu0 0.0
    %2665 = vmatpush1.msra.mxu0 0.0
    %2666 = vmatprep.subr.mxu0 0.0
    %2667 = vmatpush1.msra.mxu0 0.0
    %2668 = vmatprep.subr.mxu0 0.0
    %2669 = vmatpush1.msra.mxu0 0.0
    %2670 = vmatprep.subr.mxu0 0.0
    %2671 = vmatpush1.msra.mxu0 0.0
    %2672 = vmatprep.subr.mxu0 0.0
    %2673 = vmatpush1.msra.mxu0 0.0
    %2674 = vmatprep.subr.mxu0 0.0
    %2675 = vmatpush1.msra.mxu0 0.0
    %2676 = vmatprep.subr.mxu0 0.0
    %2677 = vmatpush1.msra.mxu0 0.0
    %2678 = vmatprep.subr.mxu0 0.0
    %2679 = vmatpush1.msra.mxu0 0.0
    %2680 = vmatprep.subr.mxu0 0.0
    %2681 = vmatpush1.msra.mxu0 0.0
    %2682 = vmatprep.subr.mxu0 0.0
    %2683 = vmatpush1.msra.mxu0 0.0
    %2684 = vmatprep.subr.mxu0 0.0
    %2685 = vmatpush1.msra.mxu0 0.0
    %2686 = vmatprep.subr.mxu0 0.0
    %2687 = vmatpush1.msra.mxu0 0.0
    %2688 = vmatprep.subr.mxu0 0.0
    %2689 = vmatpush1.msra.mxu0 0.0
    %2690 = vmatprep.subr.mxu0 0.0
    %2691 = vmatpush1.msra.mxu0 0.0
    %2692 = vmatprep.subr.mxu0 0.0
    %2693 = vmatpush1.msra.mxu0 0.0
    %2694 = vmatprep.subr.mxu0 0.0
    %2695 = vmatpush1.msra.mxu0 0.0
    %2696 = vmatprep.subr.mxu0 0.0
    %2697 = vmatpush1.msra.mxu0 0.0
    %2698 = vmatprep.subr.mxu0 0.0
    %2699 = vmatpush1.msra.mxu0 0.0
    %2700 = vmatprep.subr.mxu0 0.0
    %2701 = vmatpush1.msra.mxu0 0.0
    %2702 = vmatprep.subr.mxu0 0.0
    %2703 = vmatpush1.msra.mxu0 0.0
    %2704 = vmatprep.subr.mxu0 0.0
    %2705 = vmatpush1.msra.mxu0 0.0
    %2706 = vmatprep.mubr.f32.mxu0 0.0
    %2707 = vmatmul.mubr.f32.gmra.mrb[0].mxu0 %v2640
    %v2708 = vpop.f32.mrb[0].mxu0
    %v2709 = vadd.f32 0.0, %v2708
    %v2710 = vpop.f32.mrb[0].mxu0
    %2711 = vdwg.mxu0
    %2712 = vrot.lane.b32.xlu0 %v2123, 56
    %v2713 = vpop.permute.xlu0 %2712
    %v2716 = vsel %vm306, %v2635, 0
    %2718 = vmatprep.subr.mxu0 0.0
    %2719 = vmatpush1.msra.mxu0 %v2713
    %2720 = vmatprep.subr.mxu0 0.0
    %2721 = vmatpush1.msra.mxu0 0.0
    %2722 = vmatprep.subr.mxu0 0.0
    %2723 = vmatpush1.msra.mxu0 0.0
    %2724 = vmatprep.subr.mxu0 0.0
    %2725 = vmatpush1.msra.mxu0 0.0
    %2726 = vmatprep.subr.mxu0 0.0
    %2727 = vmatpush1.msra.mxu0 0.0
    %2728 = vmatprep.subr.mxu0 0.0
    %2729 = vmatpush1.msra.mxu0 0.0
    %2730 = vmatprep.subr.mxu0 0.0
    %2731 = vmatpush1.msra.mxu0 0.0
    %2732 = vmatprep.subr.mxu0 0.0
    %2733 = vmatpush1.msra.mxu0 0.0
    %2734 = vmatprep.subr.mxu0 0.0
    %2735 = vmatpush1.msra.mxu0 0.0
    %2736 = vmatprep.subr.mxu0 0.0
    %2737 = vmatpush1.msra.mxu0 0.0
    %2738 = vmatprep.subr.mxu0 0.0
    %2739 = vmatpush1.msra.mxu0 0.0
    %2740 = vmatprep.subr.mxu0 0.0
    %2741 = vmatpush1.msra.mxu0 0.0
    %2742 = vmatprep.subr.mxu0 0.0
    %2743 = vmatpush1.msra.mxu0 0.0
    %2744 = vmatprep.subr.mxu0 0.0
    %2745 = vmatpush1.msra.mxu0 0.0
    %2746 = vmatprep.subr.mxu0 0.0
    %2747 = vmatpush1.msra.mxu0 0.0
    %2748 = vmatprep.subr.mxu0 0.0
    %2749 = vmatpush1.msra.mxu0 0.0
    %2750 = vmatprep.subr.mxu0 0.0
    %2751 = vmatpush1.msra.mxu0 0.0
    %2752 = vmatprep.subr.mxu0 0.0
    %2753 = vmatpush1.msra.mxu0 0.0
    %2754 = vmatprep.subr.mxu0 0.0
    %2755 = vmatpush1.msra.mxu0 0.0
    %2756 = vmatprep.subr.mxu0 0.0
    %2757 = vmatpush1.msra.mxu0 0.0
    %2758 = vmatprep.subr.mxu0 0.0
    %2759 = vmatpush1.msra.mxu0 0.0
    %2760 = vmatprep.subr.mxu0 0.0
    %2761 = vmatpush1.msra.mxu0 0.0
    %2762 = vmatprep.subr.mxu0 0.0
    %2763 = vmatpush1.msra.mxu0 0.0
    %2764 = vmatprep.subr.mxu0 0.0
    %2765 = vmatpush1.msra.mxu0 0.0
    %2766 = vmatprep.subr.mxu0 0.0
    %2767 = vmatpush1.msra.mxu0 0.0
    %2768 = vmatprep.subr.mxu0 0.0
    %2769 = vmatpush1.msra.mxu0 0.0
    %2770 = vmatprep.subr.mxu0 0.0
    %2771 = vmatpush1.msra.mxu0 0.0
    %2772 = vmatprep.subr.mxu0 0.0
    %2773 = vmatpush1.msra.mxu0 0.0
    %2774 = vmatprep.subr.mxu0 0.0
    %2775 = vmatpush1.msra.mxu0 0.0
    %2776 = vmatprep.subr.mxu0 0.0
    %2777 = vmatpush1.msra.mxu0 0.0
    %2778 = vmatprep.subr.mxu0 0.0
    %2779 = vmatpush1.msra.mxu0 0.0
    %2780 = vmatprep.subr.mxu0 0.0
    %2781 = vmatpush1.msra.mxu0 0.0
    %2782 = vmatprep.mubr.f32.mxu0 0.0
    %2783 = vmatmul.mubr.f32.gmra.mrb[0].mxu0 %v2716
    %v2784 = vpop.f32.mrb[0].mxu0
    %v2785 = vadd.f32 0.0, %v2784
    %v2786 = vpop.f32.mrb[0].mxu0
    %2787 = vdwg.mxu0
    %2788 = vrot.lane.b32.xlu0 %v2126, 112
    %v2789 = vpop.permute.xlu0 %2788
    %2790 = vrot.lane.b32.xlu0 %v2118, 80
    %v2791 = vpop.permute.xlu0 %2790
    %v2792 = vsel %vm306, %v2789, 0
    %v2794 = vsel %vm306, %v2791, 0
    %2796 = vmatprep.subr.mxu0 0.0
    %2797 = vmatpush1.xpose.msra.mxu0 %v2794
    %2798 = vmatprep.subr.mxu0 0.0
    %2799 = vmatpush1.xpose.msra.mxu0 0.0
    %2800 = vmatprep.subr.mxu0 0.0
    %2801 = vmatpush1.xpose.msra.mxu0 0.0
    %2802 = vmatprep.subr.mxu0 0.0
    %2803 = vmatpush1.xpose.msra.mxu0 0.0
    %2804 = vmatprep.subr.mxu0 0.0
    %2805 = vmatpush1.xpose.msra.mxu0 0.0
    %2806 = vmatprep.subr.mxu0 0.0
    %2807 = vmatpush1.xpose.msra.mxu0 0.0
    %2808 = vmatprep.subr.mxu0 0.0
    %2809 = vmatpush1.xpose.msra.mxu0 0.0
    %2810 = vmatprep.subr.mxu0 0.0
    %2811 = vmatpush1.xpose.msra.mxu0 0.0
    %2812 = vmatprep.subr.mxu0 0.0
    %2813 = vmatpush1.xpose.msra.mxu0 0.0
    %2814 = vmatprep.subr.mxu0 0.0
    %2815 = vmatpush1.xpose.msra.mxu0 0.0
    %2816 = vmatprep.subr.mxu0 0.0
    %2817 = vmatpush1.xpose.msra.mxu0 0.0
    %2818 = vmatprep.subr.mxu0 0.0
    %2819 = vmatpush1.xpose.msra.mxu0 0.0
    %2820 = vmatprep.subr.mxu0 0.0
    %2821 = vmatpush1.xpose.msra.mxu0 0.0
    %2822 = vmatprep.subr.mxu0 0.0
    %2823 = vmatpush1.xpose.msra.mxu0 0.0
    %2824 = vmatprep.subr.mxu0 0.0
    %2825 = vmatpush1.xpose.msra.mxu0 0.0
    %2826 = vmatprep.subr.mxu0 0.0
    %2827 = vmatpush1.xpose.msra.mxu0 0.0
    %2828 = vmatprep.subr.mxu0 0.0
    %2829 = vmatpush1.xpose.msra.mxu0 0.0
    %2830 = vmatprep.subr.mxu0 0.0
    %2831 = vmatpush1.xpose.msra.mxu0 0.0
    %2832 = vmatprep.subr.mxu0 0.0
    %2833 = vmatpush1.xpose.msra.mxu0 0.0
    %2834 = vmatprep.subr.mxu0 0.0
    %2835 = vmatpush1.xpose.msra.mxu0 0.0
    %2836 = vmatprep.subr.mxu0 0.0
    %2837 = vmatpush1.xpose.msra.mxu0 0.0
    %2838 = vmatprep.subr.mxu0 0.0
    %2839 = vmatpush1.xpose.msra.mxu0 0.0
    %2840 = vmatprep.subr.mxu0 0.0
    %2841 = vmatpush1.xpose.msra.mxu0 0.0
    %2842 = vmatprep.subr.mxu0 0.0
    %2843 = vmatpush1.xpose.msra.mxu0 0.0
    %2844 = vmatprep.subr.mxu0 0.0
    %2845 = vmatpush1.xpose.msra.mxu0 0.0
    %2846 = vmatprep.subr.mxu0 0.0
    %2847 = vmatpush1.xpose.msra.mxu0 0.0
    %2848 = vmatprep.subr.mxu0 0.0
    %2849 = vmatpush1.xpose.msra.mxu0 0.0
    %2850 = vmatprep.subr.mxu0 0.0
    %2851 = vmatpush1.xpose.msra.mxu0 0.0
    %2852 = vmatprep.subr.mxu0 0.0
    %2853 = vmatpush1.xpose.msra.mxu0 0.0
    %2854 = vmatprep.subr.mxu0 0.0
    %2855 = vmatpush1.xpose.msra.mxu0 0.0
    %2856 = vmatprep.subr.mxu0 0.0
    %2857 = vmatpush1.xpose.msra.mxu0 0.0
    %2858 = vmatprep.subr.mxu0 0.0
    %2859 = vmatpush1.xpose.msra.mxu0 0.0
    %2860 = vmatprep.mubr.f32.mxu0 0.0
    %2861 = vmatmul.mubr.f32.gmra.mrb[0].mxu0 %v2792
    %v2862 = vpop.f32.mrb[0].mxu0
    %v2863 = vadd.f32 %v302, %v2862
    %v2864 = vpop.f32.mrb[0].mxu0
    %2865 = vdwg.mxu0
    %2866 = vrot.lane.b32.xlu0 %v2127, 112
    %v2867 = vpop.permute.xlu0 %2866
    %2868 = vrot.lane.b32.xlu0 %v2123, 80
    %v2869 = vpop.permute.xlu0 %2868
    %v2870 = vsel %vm306, %v2867, 0
    %v2872 = vsel %vm306, %v2869, 0
    %2874 = vmatprep.subr.mxu0 0.0
    %2875 = vmatpush1.xpose.msra.mxu0 %v2872
    %2876 = vmatprep.subr.mxu0 0.0
    %2877 = vmatpush1.xpose.msra.mxu0 0.0
    %2878 = vmatprep.subr.mxu0 0.0
    %2879 = vmatpush1.xpose.msra.mxu0 0.0
    %2880 = vmatprep.subr.mxu0 0.0
    %2881 = vmatpush1.xpose.msra.mxu0 0.0
    %2882 = vmatprep.subr.mxu0 0.0
    %2883 = vmatpush1.xpose.msra.mxu0 0.0
    %2884 = vmatprep.subr.mxu0 0.0
    %2885 = vmatpush1.xpose.msra.mxu0 0.0
    %2886 = vmatprep.subr.mxu0 0.0
    %2887 = vmatpush1.xpose.msra.mxu0 0.0
    %2888 = vmatprep.subr.mxu0 0.0
    %2889 = vmatpush1.xpose.msra.mxu0 0.0
    %2890 = vmatprep.subr.mxu0 0.0
    %2891 = vmatpush1.xpose.msra.mxu0 0.0
    %2892 = vmatprep.subr.mxu0 0.0
    %2893 = vmatpush1.xpose.msra.mxu0 0.0
    %2894 = vmatprep.subr.mxu0 0.0
    %2895 = vmatpush1.xpose.msra.mxu0 0.0
    %2896 = vmatprep.subr.mxu0 0.0
    %2897 = vmatpush1.xpose.msra.mxu0 0.0
    %2898 = vmatprep.subr.mxu0 0.0
    %2899 = vmatpush1.xpose.msra.mxu0 0.0
    %2900 = vmatprep.subr.mxu0 0.0
    %2901 = vmatpush1.xpose.msra.mxu0 0.0
    %2902 = vmatprep.subr.mxu0 0.0
    %2903 = vmatpush1.xpose.msra.mxu0 0.0
    %2904 = vmatprep.subr.mxu0 0.0
    %2905 = vmatpush1.xpose.msra.mxu0 0.0
    %2906 = vmatprep.subr.mxu0 0.0
    %2907 = vmatpush1.xpose.msra.mxu0 0.0
    %2908 = vmatprep.subr.mxu0 0.0
    %2909 = vmatpush1.xpose.msra.mxu0 0.0
    %2910 = vmatprep.subr.mxu0 0.0
    %2911 = vmatpush1.xpose.msra.mxu0 0.0
    %2912 = vmatprep.subr.mxu0 0.0
    %2913 = vmatpush1.xpose.msra.mxu0 0.0
    %2914 = vmatprep.subr.mxu0 0.0
    %2915 = vmatpush1.xpose.msra.mxu0 0.0
    %2916 = vmatprep.subr.mxu0 0.0
    %2917 = vmatpush1.xpose.msra.mxu0 0.0
    %2918 = vmatprep.subr.mxu0 0.0
    %2919 = vmatpush1.xpose.msra.mxu0 0.0
    %2920 = vmatprep.subr.mxu0 0.0
    %2921 = vmatpush1.xpose.msra.mxu0 0.0
    %2922 = vmatprep.subr.mxu0 0.0
    %2923 = vmatpush1.xpose.msra.mxu0 0.0
    %2924 = vmatprep.subr.mxu0 0.0
    %2925 = vmatpush1.xpose.msra.mxu0 0.0
    %2926 = vmatprep.subr.mxu0 0.0
    %2927 = vmatpush1.xpose.msra.mxu0 0.0
    %2928 = vmatprep.subr.mxu0 0.0
    %2929 = vmatpush1.xpose.msra.mxu0 0.0
    %2930 = vmatprep.subr.mxu0 0.0
    %2931 = vmatpush1.xpose.msra.mxu0 0.0
    %2932 = vmatprep.subr.mxu0 0.0
    %2933 = vmatpush1.xpose.msra.mxu0 0.0
    %2934 = vmatprep.subr.mxu0 0.0
    %2935 = vmatpush1.xpose.msra.mxu0 0.0
    %2936 = vmatprep.subr.mxu0 0.0
    %2937 = vmatpush1.xpose.msra.mxu0 0.0
    %2938 = vmatprep.mubr.f32.mxu0 0.0
    %2939 = vmatmul.mubr.f32.gmra.mrb[0].mxu0 %v2870
    %v2940 = vpop.f32.mrb[0].mxu0
    %v2941 = vadd.f32 %v302, %v2940
    %v2942 = vpop.f32.mrb[0].mxu0
    %2943 = vdwg.mxu0
    %v2944 = vsel %vm306, %v2863, -inf
    %2945 = vmax.xlane.f32.xlu0 %v2944
    %v2946 = vpop.xlane.xlu0 %2945
    %v2947 = vsel %vm306, %v2941, -inf
    %2948 = vmax.xlane.f32.xlu0 %v2947
    %v2949 = vpop.xlane.xlu0 %2948
    %v2950 = vsub.f32 %v2863, %v2946
    %v2951 = vsub.f32 %v2941, %v2949
    %v2952 = vmul.f32 %v2950, 1.442695
    %v2953 = vpow.pop %v2952
    %v2954 = vmul.f32 %v2951, 1.442695
    %v2955 = vpow.pop %v2954
    %v2956 = vsel %vm306, %v2953, 0.0
    %2957 = vadd.xlane.f32.xlu0 %v2956
    %v2958 = vpop.xlane.xlu0 %2957
    %v2959 = vsel %vm306, %v2955, 0.0
    %2960 = vadd.xlane.f32.xlu0 %v2959
    %v2961 = vpop.xlane.xlu0 %2960
    %v2962 = vrcp.pop %v2958
    %v2963 = vmul.f32 %v2953, %v2962
    %v2964 = vrcp.pop %v2961
    %v2965 = vmul.f32 %v2955, %v2964
    %2966 = vrot.lane.b32.xlu0 %v2118, 48
    %v2967 = vpop.permute.xlu0 %2966
    %v2970 = vsel %vm306, %v2963, 0
    %2972 = vmatprep.subr.mxu0 0.0
    %2973 = vmatpush1.msra.mxu0 %v2967
    %2974 = vmatprep.subr.mxu0 0.0
    %2975 = vmatpush1.msra.mxu0 0.0
    %2976 = vmatprep.subr.mxu0 0.0
    %2977 = vmatpush1.msra.mxu0 0.0
    %2978 = vmatprep.subr.mxu0 0.0
    %2979 = vmatpush1.msra.mxu0 0.0
    %2980 = vmatprep.subr.mxu0 0.0
    %2981 = vmatpush1.msra.mxu0 0.0
    %2982 = vmatprep.subr.mxu0 0.0
    %2983 = vmatpush1.msra.mxu0 0.0
    %2984 = vmatprep.subr.mxu0 0.0
    %2985 = vmatpush1.msra.mxu0 0.0
    %2986 = vmatprep.subr.mxu0 0.0
    %2987 = vmatpush1.msra.mxu0 0.0
    %2988 = vmatprep.subr.mxu0 0.0
    %2989 = vmatpush1.msra.mxu0 0.0
    %2990 = vmatprep.subr.mxu0 0.0
    %2991 = vmatpush1.msra.mxu0 0.0
    %2992 = vmatprep.subr.mxu0 0.0
    %2993 = vmatpush1.msra.mxu0 0.0
    %2994 = vmatprep.subr.mxu0 0.0
    %2995 = vmatpush1.msra.mxu0 0.0
    %2996 = vmatprep.subr.mxu0 0.0
    %2997 = vmatpush1.msra.mxu0 0.0
    %2998 = vmatprep.subr.mxu0 0.0
    %2999 = vmatpush1.msra.mxu0 0.0
    %3000 = vmatprep.subr.mxu0 0.0
    %3001 = vmatpush1.msra.mxu0 0.0
    %3002 = vmatprep.subr.mxu0 0.0
    %3003 = vmatpush1.msra.mxu0 0.0
    %3004 = vmatprep.subr.mxu0 0.0
    %3005 = vmatpush1.msra.mxu0 0.0
    %3006 = vmatprep.subr.mxu0 0.0
    %3007 = vmatpush1.msra.mxu0 0.0
    %3008 = vmatprep.subr.mxu0 0.0
    %3009 = vmatpush1.msra.mxu0 0.0
    %3010 = vmatprep.subr.mxu0 0.0
    %3011 = vmatpush1.msra.mxu0 0.0
    %3012 = vmatprep.subr.mxu0 0.0
    %3013 = vmatpush1.msra.mxu0 0.0
    %3014 = vmatprep.subr.mxu0 0.0
    %3015 = vmatpush1.msra.mxu0 0.0
    %3016 = vmatprep.subr.mxu0 0.0
    %3017 = vmatpush1.msra.mxu0 0.0
    %3018 = vmatprep.subr.mxu0 0.0
    %3019 = vmatpush1.msra.mxu0 0.0
    %3020 = vmatprep.subr.mxu0 0.0
    %3021 = vmatpush1.msra.mxu0 0.0
    %3022 = vmatprep.subr.mxu0 0.0
    %3023 = vmatpush1.msra.mxu0 0.0
    %3024 = vmatprep.subr.mxu0 0.0
    %3025 = vmatpush1.msra.mxu0 0.0
    %3026 = vmatprep.subr.mxu0 0.0
    %3027 = vmatpush1.msra.mxu0 0.0
    %3028 = vmatprep.subr.mxu0 0.0
    %3029 = vmatpush1.msra.mxu0 0.0
    %3030 = vmatprep.subr.mxu0 0.0
    %3031 = vmatpush1.msra.mxu0 0.0
    %3032 = vmatprep.subr.mxu0 0.0
    %3033 = vmatpush1.msra.mxu0 0.0
    %3034 = vmatprep.subr.mxu0 0.0
    %3035 = vmatpush1.msra.mxu0 0.0
    %3036 = vmatprep.mubr.f32.mxu0 0.0
    %3037 = vmatmul.mubr.f32.gmra.mrb[0].mxu0 %v2970
    %v3038 = vpop.f32.mrb[0].mxu0
    %v3039 = vadd.f32 0.0, %v3038
    %v3040 = vpop.f32.mrb[0].mxu0
    %3041 = vdwg.mxu0
    %3042 = vrot.lane.b32.xlu0 %v2123, 48
    %v3043 = vpop.permute.xlu0 %3042
    %v3046 = vsel %vm306, %v2965, 0
    %3048 = vmatprep.subr.mxu0 0.0
    %3049 = vmatpush1.msra.mxu0 %v3043
    %3050 = vmatprep.subr.mxu0 0.0
    %3051 = vmatpush1.msra.mxu0 0.0
    %3052 = vmatprep.subr.mxu0 0.0
    %3053 = vmatpush1.msra.mxu0 0.0
    %3054 = vmatprep.subr.mxu0 0.0
    %3055 = vmatpush1.msra.mxu0 0.0
    %3056 = vmatprep.subr.mxu0 0.0
    %3057 = vmatpush1.msra.mxu0 0.0
    %3058 = vmatprep.subr.mxu0 0.0
    %3059 = vmatpush1.msra.mxu0 0.0
    %3060 = vmatprep.subr.mxu0 0.0
    %3061 = vmatpush1.msra.mxu0 0.0
    %3062 = vmatprep.subr.mxu0 0.0
    %3063 = vmatpush1.msra.mxu0 0.0
    %3064 = vmatprep.subr.mxu0 0.0
    %3065 = vmatpush1.msra.mxu0 0.0
    %3066 = vmatprep.subr.mxu0 0.0
    %3067 = vmatpush1.msra.mxu0 0.0
    %3068 = vmatprep.subr.mxu0 0.0
    %3069 = vmatpush1.msra.mxu0 0.0
    %3070 = vmatprep.subr.mxu0 0.0
    %3071 = vmatpush1.msra.mxu0 0.0
    %3072 = vmatprep.subr.mxu0 0.0
    %3073 = vmatpush1.msra.mxu0 0.0
    %3074 = vmatprep.subr.mxu0 0.0
    %3075 = vmatpush1.msra.mxu0 0.0
    %3076 = vmatprep.subr.mxu0 0.0
    %3077 = vmatpush1.msra.mxu0 0.0
    %3078 = vmatprep.subr.mxu0 0.0
    %3079 = vmatpush1.msra.mxu0 0.0
    %3080 = vmatprep.subr.mxu0 0.0
    %3081 = vmatpush1.msra.mxu0 0.0
    %3082 = vmatprep.subr.mxu0 0.0
    %3083 = vmatpush1.msra.mxu0 0.0
    %3084 = vmatprep.subr.mxu0 0.0
    %3085 = vmatpush1.msra.mxu0 0.0
    %3086 = vmatprep.subr.mxu0 0.0
    %3087 = vmatpush1.msra.mxu0 0.0
    %3088 = vmatprep.subr.mxu0 0.0
    %3089 = vmatpush1.msra.mxu0 0.0
    %3090 = vmatprep.subr.mxu0 0.0
    %3091 = vmatpush1.msra.mxu0 0.0
    %3092 = vmatprep.subr.mxu0 0.0
    %3093 = vmatpush1.msra.mxu0 0.0
    %3094 = vmatprep.subr.mxu0 0.0
    %3095 = vmatpush1.msra.mxu0 0.0
    %3096 = vmatprep.subr.mxu0 0.0
    %3097 = vmatpush1.msra.mxu0 0.0
    %3098 = vmatprep.subr.mxu0 0.0
    %3099 = vmatpush1.msra.mxu0 0.0
    %3100 = vmatprep.subr.mxu0 0.0
    %3101 = vmatpush1.msra.mxu0 0.0
    %3102 = vmatprep.subr.mxu0 0.0
    %3103 = vmatpush1.msra.mxu0 0.0
    %3104 = vmatprep.subr.mxu0 0.0
    %3105 = vmatpush1.msra.mxu0 0.0
    %3106 = vmatprep.subr.mxu0 0.0
    %3107 = vmatpush1.msra.mxu0 0.0
    %3108 = vmatprep.subr.mxu0 0.0
    %3109 = vmatpush1.msra.mxu0 0.0
    %3110 = vmatprep.subr.mxu0 0.0
    %3111 = vmatpush1.msra.mxu0 0.0
    %3112 = vmatprep.mubr.f32.mxu0 0.0
    %3113 = vmatmul.mubr.f32.gmra.mrb[0].mxu0 %v3046
    %v3114 = vpop.f32.mrb[0].mxu0
    %v3115 = vadd.f32 0.0, %v3114
    %v3116 = vpop.f32.mrb[0].mxu0
    %3117 = vdwg.mxu0
    %3118 = vrot.lane.b32.xlu0 %v2126, 104
    %v3119 = vpop.permute.xlu0 %3118
    %3120 = vrot.lane.b32.xlu0 %v2118, 72
    %v3121 = vpop.permute.xlu0 %3120
    %v3122 = vsel %vm306, %v3119, 0
    %v3124 = vsel %vm306, %v3121, 0
    %3126 = vmatprep.subr.mxu0 0.0
    %3127 = vmatpush1.xpose.msra.mxu0 %v3124
    %3128 = vmatprep.subr.mxu0 0.0
    %3129 = vmatpush1.xpose.msra.mxu0 0.0
    %3130 = vmatprep.subr.mxu0 0.0
    %3131 = vmatpush1.xpose.msra.mxu0 0.0
    %3132 = vmatprep.subr.mxu0 0.0
    %3133 = vmatpush1.xpose.msra.mxu0 0.0
    %3134 = vmatprep.subr.mxu0 0.0
    %3135 = vmatpush1.xpose.msra.mxu0 0.0
    %3136 = vmatprep.subr.mxu0 0.0
    %3137 = vmatpush1.xpose.msra.mxu0 0.0
    %3138 = vmatprep.subr.mxu0 0.0
    %3139 = vmatpush1.xpose.msra.mxu0 0.0
    %3140 = vmatprep.subr.mxu0 0.0
    %3141 = vmatpush1.xpose.msra.mxu0 0.0
    %3142 = vmatprep.subr.mxu0 0.0
    %3143 = vmatpush1.xpose.msra.mxu0 0.0
    %3144 = vmatprep.subr.mxu0 0.0
    %3145 = vmatpush1.xpose.msra.mxu0 0.0
    %3146 = vmatprep.subr.mxu0 0.0
    %3147 = vmatpush1.xpose.msra.mxu0 0.0
    %3148 = vmatprep.subr.mxu0 0.0
    %3149 = vmatpush1.xpose.msra.mxu0 0.0
    %3150 = vmatprep.subr.mxu0 0.0
    %3151 = vmatpush1.xpose.msra.mxu0 0.0
    %3152 = vmatprep.subr.mxu0 0.0
    %3153 = vmatpush1.xpose.msra.mxu0 0.0
    %3154 = vmatprep.subr.mxu0 0.0
    %3155 = vmatpush1.xpose.msra.mxu0 0.0
    %3156 = vmatprep.subr.mxu0 0.0
    %3157 = vmatpush1.xpose.msra.mxu0 0.0
    %3158 = vmatprep.subr.mxu0 0.0
    %3159 = vmatpush1.xpose.msra.mxu0 0.0
    %3160 = vmatprep.subr.mxu0 0.0
    %3161 = vmatpush1.xpose.msra.mxu0 0.0
    %3162 = vmatprep.subr.mxu0 0.0
    %3163 = vmatpush1.xpose.msra.mxu0 0.0
    %3164 = vmatprep.subr.mxu0 0.0
    %3165 = vmatpush1.xpose.msra.mxu0 0.0
    %3166 = vmatprep.subr.mxu0 0.0
    %3167 = vmatpush1.xpose.msra.mxu0 0.0
    %3168 = vmatprep.subr.mxu0 0.0
    %3169 = vmatpush1.xpose.msra.mxu0 0.0
    %3170 = vmatprep.subr.mxu0 0.0
    %3171 = vmatpush1.xpose.msra.mxu0 0.0
    %3172 = vmatprep.subr.mxu0 0.0
    %3173 = vmatpush1.xpose.msra.mxu0 0.0
    %3174 = vmatprep.subr.mxu0 0.0
    %3175 = vmatpush1.xpose.msra.mxu0 0.0
    %3176 = vmatprep.subr.mxu0 0.0
    %3177 = vmatpush1.xpose.msra.mxu0 0.0
    %3178 = vmatprep.subr.mxu0 0.0
    %3179 = vmatpush1.xpose.msra.mxu0 0.0
    %3180 = vmatprep.subr.mxu0 0.0
    %3181 = vmatpush1.xpose.msra.mxu0 0.0
    %3182 = vmatprep.subr.mxu0 0.0
    %3183 = vmatpush1.xpose.msra.mxu0 0.0
    %3184 = vmatprep.subr.mxu0 0.0
    %3185 = vmatpush1.xpose.msra.mxu0 0.0
    %3186 = vmatprep.subr.mxu0 0.0
    %3187 = vmatpush1.xpose.msra.mxu0 0.0
    %3188 = vmatprep.subr.mxu0 0.0
    %3189 = vmatpush1.xpose.msra.mxu0 0.0
    %3190 = vmatprep.mubr.f32.mxu0 0.0
    %3191 = vmatmul.mubr.f32.gmra.mrb[0].mxu0 %v3122
    %v3192 = vpop.f32.mrb[0].mxu0
    %v3193 = vadd.f32 %v302, %v3192
    %v3194 = vpop.f32.mrb[0].mxu0
    %3195 = vdwg.mxu0
    %3196 = vrot.lane.b32.xlu0 %v2127, 104
    %v3197 = vpop.permute.xlu0 %3196
    %3198 = vrot.lane.b32.xlu0 %v2123, 72
    %v3199 = vpop.permute.xlu0 %3198
    %v3200 = vsel %vm306, %v3197, 0
    %v3202 = vsel %vm306, %v3199, 0
    %3204 = vmatprep.subr.mxu0 0.0
    %3205 = vmatpush1.xpose.msra.mxu0 %v3202
    %3206 = vmatprep.subr.mxu0 0.0
    %3207 = vmatpush1.xpose.msra.mxu0 0.0
    %3208 = vmatprep.subr.mxu0 0.0
    %3209 = vmatpush1.xpose.msra.mxu0 0.0
    %3210 = vmatprep.subr.mxu0 0.0
    %3211 = vmatpush1.xpose.msra.mxu0 0.0
    %3212 = vmatprep.subr.mxu0 0.0
    %3213 = vmatpush1.xpose.msra.mxu0 0.0
    %3214 = vmatprep.subr.mxu0 0.0
    %3215 = vmatpush1.xpose.msra.mxu0 0.0
    %3216 = vmatprep.subr.mxu0 0.0
    %3217 = vmatpush1.xpose.msra.mxu0 0.0
    %3218 = vmatprep.subr.mxu0 0.0
    %3219 = vmatpush1.xpose.msra.mxu0 0.0
    %3220 = vmatprep.subr.mxu0 0.0
    %3221 = vmatpush1.xpose.msra.mxu0 0.0
    %3222 = vmatprep.subr.mxu0 0.0
    %3223 = vmatpush1.xpose.msra.mxu0 0.0
    %3224 = vmatprep.subr.mxu0 0.0
    %3225 = vmatpush1.xpose.msra.mxu0 0.0
    %3226 = vmatprep.subr.mxu0 0.0
    %3227 = vmatpush1.xpose.msra.mxu0 0.0
    %3228 = vmatprep.subr.mxu0 0.0
    %3229 = vmatpush1.xpose.msra.mxu0 0.0
    %3230 = vmatprep.subr.mxu0 0.0
    %3231 = vmatpush1.xpose.msra.mxu0 0.0
    %3232 = vmatprep.subr.mxu0 0.0
    %3233 = vmatpush1.xpose.msra.mxu0 0.0
    %3234 = vmatprep.subr.mxu0 0.0
    %3235 = vmatpush1.xpose.msra.mxu0 0.0
    %3236 = vmatprep.subr.mxu0 0.0
    %3237 = vmatpush1.xpose.msra.mxu0 0.0
    %3238 = vmatprep.subr.mxu0 0.0
    %3239 = vmatpush1.xpose.msra.mxu0 0.0
    %3240 = vmatprep.subr.mxu0 0.0
    %3241 = vmatpush1.xpose.msra.mxu0 0.0
    %3242 = vmatprep.subr.mxu0 0.0
    %3243 = vmatpush1.xpose.msra.mxu0 0.0
    %3244 = vmatprep.subr.mxu0 0.0
    %3245 = vmatpush1.xpose.msra.mxu0 0.0
    %3246 = vmatprep.subr.mxu0 0.0
    %3247 = vmatpush1.xpose.msra.mxu0 0.0
    %3248 = vmatprep.subr.mxu0 0.0
    %3249 = vmatpush1.xpose.msra.mxu0 0.0
    %3250 = vmatprep.subr.mxu0 0.0
    %3251 = vmatpush1.xpose.msra.mxu0 0.0
    %3252 = vmatprep.subr.mxu0 0.0
    %3253 = vmatpush1.xpose.msra.mxu0 0.0
    %3254 = vmatprep.subr.mxu0 0.0
    %3255 = vmatpush1.xpose.msra.mxu0 0.0
    %3256 = vmatprep.subr.mxu0 0.0
    %3257 = vmatpush1.xpose.msra.mxu0 0.0
    %3258 = vmatprep.subr.mxu0 0.0
    %3259 = vmatpush1.xpose.msra.mxu0 0.0
    %3260 = vmatprep.subr.mxu0 0.0
    %3261 = vmatpush1.xpose.msra.mxu0 0.0
    %3262 = vmatprep.subr.mxu0 0.0
    %3263 = vmatpush1.xpose.msra.mxu0 0.0
    %3264 = vmatprep.subr.mxu0 0.0
    %3265 = vmatpush1.xpose.msra.mxu0 0.0
    %3266 = vmatprep.subr.mxu0 0.0
    %3267 = vmatpush1.xpose.msra.mxu0 0.0
    %3268 = vmatprep.mubr.f32.mxu0 0.0
    %3269 = vmatmul.mubr.f32.gmra.mrb[0].mxu0 %v3200
    %v3270 = vpop.f32.mrb[0].mxu0
    %v3271 = vadd.f32 %v302, %v3270
    %v3272 = vpop.f32.mrb[0].mxu0
    %3273 = vdwg.mxu0
    %v3274 = vsel %vm306, %v3193, -inf
    %3275 = vmax.xlane.f32.xlu0 %v3274
    %v3276 = vpop.xlane.xlu0 %3275
    %v3277 = vsel %vm306, %v3271, -inf
    %3278 = vmax.xlane.f32.xlu0 %v3277
    %v3279 = vpop.xlane.xlu0 %3278
    %v3280 = vsub.f32 %v3193, %v3276
    %v3281 = vsub.f32 %v3271, %v3279
    %v3282 = vmul.f32 %v3280, 1.442695
    %v3283 = vpow.pop %v3282
    %v3284 = vmul.f32 %v3281, 1.442695
    %v3285 = vpow.pop %v3284
    %v3286 = vsel %vm306, %v3283, 0.0
    %3287 = vadd.xlane.f32.xlu0 %v3286
    %v3288 = vpop.xlane.xlu0 %3287
    %v3289 = vsel %vm306, %v3285, 0.0
    %3290 = vadd.xlane.f32.xlu0 %v3289
    %v3291 = vpop.xlane.xlu0 %3290
    %v3292 = vrcp.pop %v3288
    %v3293 = vmul.f32 %v3283, %v3292
    %v3294 = vrcp.pop %v3291
    %v3295 = vmul.f32 %v3285, %v3294
    %3296 = vrot.lane.b32.xlu0 %v2118, 40
    %v3297 = vpop.permute.xlu0 %3296
    %v3300 = vsel %vm306, %v3293, 0
    %3302 = vmatprep.subr.mxu0 0.0
    %3303 = vmatpush1.msra.mxu0 %v3297
    %3304 = vmatprep.subr.mxu0 0.0
    %3305 = vmatpush1.msra.mxu0 0.0
    %3306 = vmatprep.subr.mxu0 0.0
    %3307 = vmatpush1.msra.mxu0 0.0
    %3308 = vmatprep.subr.mxu0 0.0
    %3309 = vmatpush1.msra.mxu0 0.0
    %3310 = vmatprep.subr.mxu0 0.0
    %3311 = vmatpush1.msra.mxu0 0.0
    %3312 = vmatprep.subr.mxu0 0.0
    %3313 = vmatpush1.msra.mxu0 0.0
    %3314 = vmatprep.subr.mxu0 0.0
    %3315 = vmatpush1.msra.mxu0 0.0
    %3316 = vmatprep.subr.mxu0 0.0
    %3317 = vmatpush1.msra.mxu0 0.0
    %3318 = vmatprep.subr.mxu0 0.0
    %3319 = vmatpush1.msra.mxu0 0.0
    %3320 = vmatprep.subr.mxu0 0.0
    %3321 = vmatpush1.msra.mxu0 0.0
    %3322 = vmatprep.subr.mxu0 0.0
    %3323 = vmatpush1.msra.mxu0 0.0
    %3324 = vmatprep.subr.mxu0 0.0
    %3325 = vmatpush1.msra.mxu0 0.0
    %3326 = vmatprep.subr.mxu0 0.0
    %3327 = vmatpush1.msra.mxu0 0.0
    %3328 = vmatprep.subr.mxu0 0.0
    %3329 = vmatpush1.msra.mxu0 0.0
    %3330 = vmatprep.subr.mxu0 0.0
    %3331 = vmatpush1.msra.mxu0 0.0
    %3332 = vmatprep.subr.mxu0 0.0
    %3333 = vmatpush1.msra.mxu0 0.0
    %3334 = vmatprep.subr.mxu0 0.0
    %3335 = vmatpush1.msra.mxu0 0.0
    %3336 = vmatprep.subr.mxu0 0.0
    %3337 = vmatpush1.msra.mxu0 0.0
    %3338 = vmatprep.subr.mxu0 0.0
    %3339 = vmatpush1.msra.mxu0 0.0
    %3340 = vmatprep.subr.mxu0 0.0
    %3341 = vmatpush1.msra.mxu0 0.0
    %3342 = vmatprep.subr.mxu0 0.0
    %3343 = vmatpush1.msra.mxu0 0.0
    %3344 = vmatprep.subr.mxu0 0.0
    %3345 = vmatpush1.msra.mxu0 0.0
    %3346 = vmatprep.subr.mxu0 0.0
    %3347 = vmatpush1.msra.mxu0 0.0
    %3348 = vmatprep.subr.mxu0 0.0
    %3349 = vmatpush1.msra.mxu0 0.0
    %3350 = vmatprep.subr.mxu0 0.0
    %3351 = vmatpush1.msra.mxu0 0.0
    %3352 = vmatprep.subr.mxu0 0.0
    %3353 = vmatpush1.msra.mxu0 0.0
    %3354 = vmatprep.subr.mxu0 0.0
    %3355 = vmatpush1.msra.mxu0 0.0
    %3356 = vmatprep.subr.mxu0 0.0
    %3357 = vmatpush1.msra.mxu0 0.0
    %3358 = vmatprep.subr.mxu0 0.0
    %3359 = vmatpush1.msra.mxu0 0.0
    %3360 = vmatprep.subr.mxu0 0.0
    %3361 = vmatpush1.msra.mxu0 0.0
    %3362 = vmatprep.subr.mxu0 0.0
    %3363 = vmatpush1.msra.mxu0 0.0
    %3364 = vmatprep.subr.mxu0 0.0
    %3365 = vmatpush1.msra.mxu0 0.0
    %3366 = vmatprep.mubr.f32.mxu0 0.0
    %3367 = vmatmul.mubr.f32.gmra.mrb[0].mxu0 %v3300
    %v3368 = vpop.f32.mrb[0].mxu0
    %v3369 = vadd.f32 0.0, %v3368
    %v3370 = vpop.f32.mrb[0].mxu0
    %3371 = vdwg.mxu0
    %3372 = vrot.lane.b32.xlu0 %v2123, 40
    %v3373 = vpop.permute.xlu0 %3372
    %v3376 = vsel %vm306, %v3295, 0
    %3378 = vmatprep.subr.mxu0 0.0
    %3379 = vmatpush1.msra.mxu0 %v3373
    %3380 = vmatprep.subr.mxu0 0.0
    %3381 = vmatpush1.msra.mxu0 0.0
    %3382 = vmatprep.subr.mxu0 0.0
    %3383 = vmatpush1.msra.mxu0 0.0
    %3384 = vmatprep.subr.mxu0 0.0
    %3385 = vmatpush1.msra.mxu0 0.0
    %3386 = vmatprep.subr.mxu0 0.0
    %3387 = vmatpush1.msra.mxu0 0.0
    %3388 = vmatprep.subr.mxu0 0.0
    %3389 = vmatpush1.msra.mxu0 0.0
    %3390 = vmatprep.subr.mxu0 0.0
    %3391 = vmatpush1.msra.mxu0 0.0
    %3392 = vmatprep.subr.mxu0 0.0
    %3393 = vmatpush1.msra.mxu0 0.0
    %3394 = vmatprep.subr.mxu0 0.0
    %3395 = vmatpush1.msra.mxu0 0.0
    %3396 = vmatprep.subr.mxu0 0.0
    %3397 = vmatpush1.msra.mxu0 0.0
    %3398 = vmatprep.subr.mxu0 0.0
    %3399 = vmatpush1.msra.mxu0 0.0
    %3400 = vmatprep.subr.mxu0 0.0
    %3401 = vmatpush1.msra.mxu0 0.0
    %3402 = vmatprep.subr.mxu0 0.0
    %3403 = vmatpush1.msra.mxu0 0.0
    %3404 = vmatprep.subr.mxu0 0.0
    %3405 = vmatpush1.msra.mxu0 0.0
    %3406 = vmatprep.subr.mxu0 0.0
    %3407 = vmatpush1.msra.mxu0 0.0
    %3408 = vmatprep.subr.mxu0 0.0
    %3409 = vmatpush1.msra.mxu0 0.0
    %3410 = vmatprep.subr.mxu0 0.0
    %3411 = vmatpush1.msra.mxu0 0.0
    %3412 = vmatprep.subr.mxu0 0.0
    %3413 = vmatpush1.msra.mxu0 0.0
    %3414 = vmatprep.subr.mxu0 0.0
    %3415 = vmatpush1.msra.mxu0 0.0
    %3416 = vmatprep.subr.mxu0 0.0
    %3417 = vmatpush1.msra.mxu0 0.0
    %3418 = vmatprep.subr.mxu0 0.0
    %3419 = vmatpush1.msra.mxu0 0.0
    %3420 = vmatprep.subr.mxu0 0.0
    %3421 = vmatpush1.msra.mxu0 0.0
    %3422 = vmatprep.subr.mxu0 0.0
    %3423 = vmatpush1.msra.mxu0 0.0
    %3424 = vmatprep.subr.mxu0 0.0
    %3425 = vmatpush1.msra.mxu0 0.0
    %3426 = vmatprep.subr.mxu0 0.0
    %3427 = vmatpush1.msra.mxu0 0.0
    %3428 = vmatprep.subr.mxu0 0.0
    %3429 = vmatpush1.msra.mxu0 0.0
    %3430 = vmatprep.subr.mxu0 0.0
    %3431 = vmatpush1.msra.mxu0 0.0
    %3432 = vmatprep.subr.mxu0 0.0
    %3433 = vmatpush1.msra.mxu0 0.0
    %3434 = vmatprep.subr.mxu0 0.0
    %3435 = vmatpush1.msra.mxu0 0.0
    %3436 = vmatprep.subr.mxu0 0.0
    %3437 = vmatpush1.msra.mxu0 0.0
    %3438 = vmatprep.subr.mxu0 0.0
    %3439 = vmatpush1.msra.mxu0 0.0
    %3440 = vmatprep.subr.mxu0 0.0
    %3441 = vmatpush1.msra.mxu0 0.0
    %3442 = vmatprep.mubr.f32.mxu0 0.0
    %3443 = vmatmul.mubr.f32.gmra.mrb[0].mxu0 %v3376
    %v3444 = vpop.f32.mrb[0].mxu0
    %v3445 = vadd.f32 0.0, %v3444
    %v3446 = vpop.f32.mrb[0].mxu0
    %3447 = vdwg.mxu0
    %3450 = vrot.lane.b32.xlu0 %v2709, 8
    %v3451 = vpop.permute.xlu0 %3450
    %3452 = vrot.lane.b32.xlu0 %v2785, 8
    %v3453 = vpop.permute.xlu0 %3452
    %3458 = vrot.lane.b32.xlu0 %v3039, 16
    %v3459 = vpop.permute.xlu0 %3458
    %3460 = vrot.lane.b32.xlu0 %v3115, 16
    %v3461 = vpop.permute.xlu0 %3460
    %3466 = vrot.lane.b32.xlu0 %v3369, 24
    %v3467 = vpop.permute.xlu0 %3466
    %3468 = vrot.lane.b32.xlu0 %v3445, 24
    %v3469 = vpop.permute.xlu0 %3468
    %v3472 = vsel %vm306, %v2379, %v3451
    %v3473 = vsel %vm306, %v2455, %v3453
    %v3474 = vsel %vm1650, %v3472, %v3459
    %v3475 = vsel %vm1650, %v3473, %v3461
    %v3476 = vsel %vm1653, %v3474, %v3467
    %v3477 = vsel %vm1653, %v3475, %v3469
    %v3479 = vsel %vm172, %v3476, 0
    %v3482 = vsel %vm172, %v3477, 0
    %3484 = vmatprep.subr.mxu0 0.0
    %3485 = vmatpush1.msra.mxu0 %v1987
    %3486 = vmatprep.subr.mxu0 0.0
    %3487 = vmatpush1.msra.mxu0 %v1988
    %3488 = vmatprep.subr.mxu0 0.0
    %3489 = vmatpush1.msra.mxu0 %v1989
    %3490 = vmatprep.subr.mxu0 0.0
    %3491 = vmatpush1.msra.mxu0 %v1990
    %3492 = vmatprep.subr.mxu0 0.0
    %3493 = vmatpush1.msra.mxu0 0.0
    %3494 = vmatprep.subr.mxu0 0.0
    %3495 = vmatpush1.msra.mxu0 0.0
    %3496 = vmatprep.subr.mxu0 0.0
    %3497 = vmatpush1.msra.mxu0 0.0
    %3498 = vmatprep.subr.mxu0 0.0
    %3499 = vmatpush1.msra.mxu0 0.0
    %3500 = vmatprep.subr.mxu0 0.0
    %3501 = vmatpush1.msra.mxu0 0.0
    %3502 = vmatprep.subr.mxu0 0.0
    %3503 = vmatpush1.msra.mxu0 0.0
    %3504 = vmatprep.subr.mxu0 0.0
    %3505 = vmatpush1.msra.mxu0 0.0
    %3506 = vmatprep.subr.mxu0 0.0
    %3507 = vmatpush1.msra.mxu0 0.0
    %3508 = vmatprep.subr.mxu0 0.0
    %3509 = vmatpush1.msra.mxu0 0.0
    %3510 = vmatprep.subr.mxu0 0.0
    %3511 = vmatpush1.msra.mxu0 0.0
    %3512 = vmatprep.subr.mxu0 0.0
    %3513 = vmatpush1.msra.mxu0 0.0
    %3514 = vmatprep.subr.mxu0 0.0
    %3515 = vmatpush1.msra.mxu0 0.0
    %3516 = vmatprep.subr.mxu0 0.0
    %3517 = vmatpush1.msra.mxu0 0.0
    %3518 = vmatprep.subr.mxu0 0.0
    %3519 = vmatpush1.msra.mxu0 0.0
    %3520 = vmatprep.subr.mxu0 0.0
    %3521 = vmatpush1.msra.mxu0 0.0
    %3522 = vmatprep.subr.mxu0 0.0
    %3523 = vmatpush1.msra.mxu0 0.0
    %3524 = vmatprep.subr.mxu0 0.0
    %3525 = vmatpush1.msra.mxu0 0.0
    %3526 = vmatprep.subr.mxu0 0.0
    %3527 = vmatpush1.msra.mxu0 0.0
    %3528 = vmatprep.subr.mxu0 0.0
    %3529 = vmatpush1.msra.mxu0 0.0
    %3530 = vmatprep.subr.mxu0 0.0
    %3531 = vmatpush1.msra.mxu0 0.0
    %3532 = vmatprep.subr.mxu0 0.0
    %3533 = vmatpush1.msra.mxu0 0.0
    %3534 = vmatprep.subr.mxu0 0.0
    %3535 = vmatpush1.msra.mxu0 0.0
    %3536 = vmatprep.subr.mxu0 0.0
    %3537 = vmatpush1.msra.mxu0 0.0
    %3538 = vmatprep.subr.mxu0 0.0
    %3539 = vmatpush1.msra.mxu0 0.0
    %3540 = vmatprep.subr.mxu0 0.0
    %3541 = vmatpush1.msra.mxu0 0.0
    %3542 = vmatprep.subr.mxu0 0.0
    %3543 = vmatpush1.msra.mxu0 0.0
    %3544 = vmatprep.subr.mxu0 0.0
    %3545 = vmatpush1.msra.mxu0 0.0
    %3546 = vmatprep.subr.mxu0 0.0
    %3547 = vmatpush1.msra.mxu0 0.0
    %3548 = vmatprep.mubr.f32.mxu0 0.0
    %3549 = vmatmul.mubr.f32.gmra.mrb[0].mxu0 %v3479
    %v3550 = vpop.f32.mrb[0].mxu0
    %v3551 = vadd.f32 0.0, %v3550
    %v3552 = vpop.f32.mrb[0].mxu0
    %3553 = vmatprep.mubr.f32.mxu0 0.0
    %3554 = vmatmul.mubr.f32.gmra.mrb[0].mxu0 %v3482
    %v3555 = vpop.f32.mrb[0].mxu0
    %v3556 = vadd.f32 0.0, %v3555
    %v3557 = vpop.f32.mrb[0].mxu0
    %3558 = vdwg.mxu0
    %v3559 = vadd.f32 %v1973, %v3551
    %v3560 = vadd.f32 %v1974, %v3556
    %v3561 = vlaneseq
    %v3562 = vshrl.u32 %v3561, 7
    %v3563 = vsub.s32 0, %v3562
    %v3564 = vrot.slane %v1978, %v3563
    %v3565 = vadd.f32 %v3559, %v3564
    %v3566 = vadd.f32 %v3560, %v3564
    %v3567 = vsel %vm172, %v3565, 0.0
    %3568 = vadd.xlane.f32.xlu0 %v3567
    %v3569 = vpop.xlane.xlu0 %3568
    %v3570 = vsel %vm172, %v3566, 0.0
    %3571 = vadd.xlane.f32.xlu0 %v3570
    %v3572 = vpop.xlane.xlu0 %3571
    %v3573 = vmul.f32 %v3569, %v179
    %v3574 = vmul.f32 %v3572, %v179
    %v3575 = vsub.f32 %v3565, %v3573
    %v3576 = vsub.f32 %v3566, %v3574
    %v3577 = vmul.f32 %v3575, %v3575
    %v3578 = vmul.f32 %v3576, %v3576
    %v3579 = vsel %vm172, %v3577, 0.0
    %3580 = vadd.xlane.f32.xlu0 %v3579
    %v3581 = vpop.xlane.xlu0 %3580
    %v3582 = vsel %vm172, %v3578, 0.0
    %3583 = vadd.xlane.f32.xlu0 %v3582
    %v3584 = vpop.xlane.xlu0 %3583
    %v3585 = vmul.f32 %v3581, %v179
    %v3586 = vmul.f32 %v3584, %v179
    %v3587 = vadd.f32 %v3585, 1e-12
    %v3588 = vadd.f32 %v3586, 1e-12
    %v3589 = vrsqrt.pop %v3587
    %v3590 = vrsqrt.pop %v3588
    %v3591 = vmul.f32 %v3575, %v3589
    %v3592 = vmul.f32 %v3576, %v3590
    %v3593 = vlaneseq
    %v3594 = vshrl.u32 %v3593, 7
    %v3595 = vsub.s32 0, %v3594
    %v3596 = vrot.slane %v1979, %v3595
    %v3597 = vmul.f32 %v3591, %v3596
    %v3598 = vmul.f32 %v3592, %v3596
    %v3599 = vlaneseq
    %v3600 = vshrl.u32 %v3599, 7
    %v3601 = vsub.s32 0, %v3600
    %v3602 = vrot.slane %v1980, %v3601
    %v3603 = vadd.f32 %v3597, %v3602
    %v3604 = vadd.f32 %v3598, %v3602
    %v3605 = vlaneseq
    %v3606 = vshrl.u32 %v3605, 7
    %v3607 = vsub.s32 0, %v3606
    %v3608 = vrot.slane %v1981, %v3607
    %v3610 = vsel %vm172, %v3603, 0
    %v3613 = vsel %vm172, %v3604, 0
    %3615 = vmatprep.subr.mxu0 0.0
    %3616 = vmatpush1.msra.mxu0 %v1991
    %3617 = vmatprep.subr.mxu0 0.0
    %3618 = vmatpush1.msra.mxu0 %v1992
    %3619 = vmatprep.subr.mxu0 0.0
    %3620 = vmatpush1.msra.mxu0 %v1993
    %3621 = vmatprep.subr.mxu0 0.0
    %3622 = vmatpush1.msra.mxu0 %v1994
    %3623 = vmatprep.subr.mxu0 0.0
    %3624 = vmatpush1.msra.mxu0 0.0
    %3625 = vmatprep.subr.mxu0 0.0
    %3626 = vmatpush1.msra.mxu0 0.0
    %3627 = vmatprep.subr.mxu0 0.0
    %3628 = vmatpush1.msra.mxu0 0.0
    %3629 = vmatprep.subr.mxu0 0.0
    %3630 = vmatpush1.msra.mxu0 0.0
    %3631 = vmatprep.subr.mxu0 0.0
    %3632 = vmatpush1.msra.mxu0 0.0
    %3633 = vmatprep.subr.mxu0 0.0
    %3634 = vmatpush1.msra.mxu0 0.0
    %3635 = vmatprep.subr.mxu0 0.0
    %3636 = vmatpush1.msra.mxu0 0.0
    %3637 = vmatprep.subr.mxu0 0.0
    %3638 = vmatpush1.msra.mxu0 0.0
    %3639 = vmatprep.subr.mxu0 0.0
    %3640 = vmatpush1.msra.mxu0 0.0
    %3641 = vmatprep.subr.mxu0 0.0
    %3642 = vmatpush1.msra.mxu0 0.0
    %3643 = vmatprep.subr.mxu0 0.0
    %3644 = vmatpush1.msra.mxu0 0.0
    %3645 = vmatprep.subr.mxu0 0.0
    %3646 = vmatpush1.msra.mxu0 0.0
    %3647 = vmatprep.subr.mxu0 0.0
    %3648 = vmatpush1.msra.mxu0 0.0
    %3649 = vmatprep.subr.mxu0 0.0
    %3650 = vmatpush1.msra.mxu0 0.0
    %3651 = vmatprep.subr.mxu0 0.0
    %3652 = vmatpush1.msra.mxu0 0.0
    %3653 = vmatprep.subr.mxu0 0.0
    %3654 = vmatpush1.msra.mxu0 0.0
    %3655 = vmatprep.subr.mxu0 0.0
    %3656 = vmatpush1.msra.mxu0 0.0
    %3657 = vmatprep.subr.mxu0 0.0
    %3658 = vmatpush1.msra.mxu0 0.0
    %3659 = vmatprep.subr.mxu0 0.0
    %3660 = vmatpush1.msra.mxu0 0.0
    %3661 = vmatprep.subr.mxu0 0.0
    %3662 = vmatpush1.msra.mxu0 0.0
    %3663 = vmatprep.subr.mxu0 0.0
    %3664 = vmatpush1.msra.mxu0 0.0
    %3665 = vmatprep.subr.mxu0 0.0
    %3666 = vmatpush1.msra.mxu0 0.0
    %3667 = vmatprep.subr.mxu0 0.0
    %3668 = vmatpush1.msra.mxu0 0.0
    %3669 = vmatprep.subr.mxu0 0.0
    %3670 = vmatpush1.msra.mxu0 0.0
    %3671 = vmatprep.subr.mxu0 0.0
    %3672 = vmatpush1.msra.mxu0 0.0
    %3673 = vmatprep.subr.mxu0 0.0
    %3674 = vmatpush1.msra.mxu0 0.0
    %3675 = vmatprep.subr.mxu0 0.0
    %3676 = vmatpush1.msra.mxu0 0.0
    %3677 = vmatprep.subr.mxu0 0.0
    %3678 = vmatpush1.msra.mxu0 0.0
    %3679 = vmatprep.mubr.f32.mxu0 0.0
    %3680 = vmatmul.mubr.f32.gmra.mrb[0].mxu0 %v3610
    %v3681 = vpop.f32.mrb[0].mxu0
    %v3682 = vadd.f32 %v3608, %v3681
    %v3683 = vpop.f32.mrb[0].mxu0
    %3684 = vmatprep.mubr.f32.mxu0 0.0
    %3685 = vmatmul.mubr.f32.gmra.mrb[0].mxu0 %v3613
    %v3686 = vpop.f32.mrb[0].mxu0
    %v3687 = vadd.f32 %v3608, %v3686
    %v3688 = vpop.f32.mrb[0].mxu0
    %3689 = vdwg.mxu0
    %v3690 = vmul.f32 %v3682, %v3682
    %v3691 = vmul.f32 %v3687, %v3687
    %v3692 = vmul.f32 %v3682, %v3690
    %v3693 = vmul.f32 %v3687, %v3691
    %v3694 = vmul.f32 %v3692, 0.044715
    %v3695 = vmul.f32 %v3693, 0.044715
    %v3696 = vadd.f32 %v3682, %v3694
    %v3697 = vadd.f32 %v3687, %v3695
    %v3698 = vmul.f32 %v3696, 0.7978846
    %v3699 = vmul.f32 %v3697, 0.7978846
    %v3700 = vtanh.pop %v3698
    %v3701 = vtanh.pop %v3699
    %v3702 = vadd.f32 %v3700, 1.0
    %v3703 = vadd.f32 %v3701, 1.0
    %v3704 = vmul.f32 %v3702, 0.5
    %v3705 = vmul.f32 %v3703, 0.5
    %v3706 = vmul.f32 %v3682, %v3704
    %v3707 = vmul.f32 %v3687, %v3705
    %v3709 = vsel %vm46, %v3706, 0
    %v3712 = vsel %vm46, %v3707, 0
    %3714 = vmatprep.subr.mxu0 0.0
    %3715 = vmatpush1.msra.mxu0 %v1995
    %3716 = vmatprep.subr.mxu0 0.0
    %3717 = vmatpush1.msra.mxu0 %v1996
    %3718 = vmatprep.subr.mxu0 0.0
    %3719 = vmatpush1.msra.mxu0 %v1997
    %3720 = vmatprep.subr.mxu0 0.0
    %3721 = vmatpush1.msra.mxu0 %v1998
    %3722 = vmatprep.subr.mxu0 0.0
    %3723 = vmatpush1.msra.mxu0 %v1999
    %3724 = vmatprep.subr.mxu0 0.0
    %3725 = vmatpush1.msra.mxu0 %v2000
    %3726 = vmatprep.subr.mxu0 0.0
    %3727 = vmatpush1.msra.mxu0 %v2001
    %3728 = vmatprep.subr.mxu0 0.0
    %3729 = vmatpush1.msra.mxu0 %v2002
    %3730 = vmatprep.subr.mxu0 0.0
    %3731 = vmatpush1.msra.mxu0 0.0
    %3732 = vmatprep.subr.mxu0 0.0
    %3733 = vmatpush1.msra.mxu0 0.0
    %3734 = vmatprep.subr.mxu0 0.0
    %3735 = vmatpush1.msra.mxu0 0.0
    %3736 = vmatprep.subr.mxu0 0.0
    %3737 = vmatpush1.msra.mxu0 0.0
    %3738 = vmatprep.subr.mxu0 0.0
    %3739 = vmatpush1.msra.mxu0 0.0
    %3740 = vmatprep.subr.mxu0 0.0
    %3741 = vmatpush1.msra.mxu0 0.0
    %3742 = vmatprep.subr.mxu0 0.0
    %3743 = vmatpush1.msra.mxu0 0.0
    %3744 = vmatprep.subr.mxu0 0.0
    %3745 = vmatpush1.msra.mxu0 0.0
    %3746 = vmatprep.subr.mxu0 0.0
    %3747 = vmatpush1.msra.mxu0 0.0
    %3748 = vmatprep.subr.mxu0 0.0
    %3749 = vmatpush1.msra.mxu0 0.0
    %3750 = vmatprep.subr.mxu0 0.0
    %3751 = vmatpush1.msra.mxu0 0.0
    %3752 = vmatprep.subr.mxu0 0.0
    %3753 = vmatpush1.msra.mxu0 0.0
    %3754 = vmatprep.subr.mxu0 0.0
    %3755 = vmatpush1.msra.mxu0 0.0
    %3756 = vmatprep.subr.mxu0 0.0
    %3757 = vmatpush1.msra.mxu0 0.0
    %3758 = vmatprep.subr.mxu0 0.0
    %3759 = vmatpush1.msra.mxu0 0.0
    %3760 = vmatprep.subr.mxu0 0.0
    %3761 = vmatpush1.msra.mxu0 0.0
    %3762 = vmatprep.subr.mxu0 0.0
    %3763 = vmatpush1.msra.mxu0 0.0
    %3764 = vmatprep.subr.mxu0 0.0
    %3765 = vmatpush1.msra.mxu0 0.0
    %3766 = vmatprep.subr.mxu0 0.0
    %3767 = vmatpush1.msra.mxu0 0.0
    %3768 = vmatprep.subr.mxu0 0.0
    %3769 = vmatpush1.msra.mxu0 0.0
    %3770 = vmatprep.subr.mxu0 0.0
    %3771 = vmatpush1.msra.mxu0 0.0
    %3772 = vmatprep.subr.mxu0 0.0
    %3773 = vmatpush1.msra.mxu0 0.0
    %3774 = vmatprep.subr.mxu0 0.0
    %3775 = vmatpush1.msra.mxu0 0.0
    %3776 = vmatprep.subr.mxu0 0.0
    %3777 = vmatpush1.msra.mxu0 0.0
    %3778 = vmatprep.mubr.f32.mxu0 0.0
    %3779 = vmatmul.mubr.f32.gmra.mrb[0].mxu0 %v3709
    %v3780 = vpop.f32.mrb[0].mxu0
    %v3781 = vadd.f32 0.0, %v3780
    %v3782 = vpop.f32.mrb[0].mxu0
    %3783 = vmatprep.mubr.f32.mxu0 0.0
    %3784 = vmatmul.mubr.f32.gmra.mrb[0].mxu0 %v3712
    %v3785 = vpop.f32.mrb[0].mxu0
    %v3786 = vadd.f32 0.0, %v3785
    %v3787 = vpop.f32.mrb[0].mxu0
    %3788 = vdwg.mxu0
    %v3789 = vadd.f32 %v3565, %v3781
    %v3790 = vadd.f32 %v3566, %v3786
    %v3791 = vlaneseq
    %v3792 = vshrl.u32 %v3791, 7
    %v3793 = vsub.s32 0, %v3792
    %v3794 = vrot.slane %v1982, %v3793
    %v3795 = vadd.f32 %v3789, %v3794
    %v3796 = vadd.f32 %v3790, %v3794
    %v3797 = vld [vmem:[%s2 + $0x2] sm:$0x1]
    %v3798 = vld [vmem:[%s2 + $0x3] sm:$0x1]
    %v3799 = vsel %vm172, %v3795, 0.0
    %3800 = vadd.xlane.f32.xlu0 %v3799
    %v3801 = vpop.xlane.xlu0 %3800
    %v3802 = vsel %vm172, %v3796, 0.0
    %3803 = vadd.xlane.f32.xlu0 %v3802
    %v3804 = vpop.xlane.xlu0 %3803
    %v3805 = vmul.f32 %v3801, %v179
    %v3806 = vmul.f32 %v3804, %v179
    %v3807 = vsub.f32 %v3795, %v3805
    %v3808 = vsub.f32 %v3796, %v3806
    %v3809 = vmul.f32 %v3807, %v3807
    %v3810 = vmul.f32 %v3808, %v3808
    %v3811 = vsel %vm172, %v3809, 0.0
    %3812 = vadd.xlane.f32.xlu0 %v3811
    %v3813 = vpop.xlane.xlu0 %3812
    %v3814 = vsel %vm172, %v3810, 0.0
    %3815 = vadd.xlane.f32.xlu0 %v3814
    %v3816 = vpop.xlane.xlu0 %3815
    %v3817 = vmul.f32 %v3813, %v179
    %v3818 = vmul.f32 %v3816, %v179
    %v3819 = vadd.f32 %v3817, 1e-12
    %v3820 = vadd.f32 %v3818, 1e-12
    %v3821 = vrsqrt.pop %v3819
    %v3822 = vrsqrt.pop %v3820
    %v3823 = vmul.f32 %v3807, %v3821
    %v3824 = vmul.f32 %v3808, %v3822
    %v3825 = vlaneseq
    %v3826 = vshrl.u32 %v3825, 7
    %v3827 = vsub.s32 0, %v3826
    %v3828 = vrot.slane %v3797, %v3827
    %v3829 = vmul.f32 %v3823, %v3828
    %v3830 = vmul.f32 %v3824, %v3828
    %v3831 = vlaneseq
    %v3832 = vshrl.u32 %v3831, 7
    %v3833 = vsub.s32 0, %v3832
    %v3834 = vrot.slane %v3798, %v3833
    %v3835 = vadd.f32 %v3829, %v3834
    %v3836 = vadd.f32 %v3830, %v3834
    %v3838 = vrot.slane %v3836, 7
    %v3840 = vsel %vm136, %v3835, %v3838
    %v3841 = vld [vmem:[%s1 + $0x200] sm:$0xff]
    %v3842 = vld [vmem:[%s1 + $0x208] sm:$0xff]
    %v3843 = vld [vmem:[%s1 + $0x210] sm:$0xff]
    %v3844 = vld [vmem:[%s1 + $0x218] sm:$0xff]
    %v3845 = vld [vmem:[%s2 + $0x4] sm:$0x1]
    %v3846 = vlaneseq
    %v3847 = vshrl.u32 %v3846, 7
    %v3848 = vsub.s32 0, %v3847
    %v3849 = vrot.slane %v3845, %v3848
    %v3851 = vsel %vm172, %v3840, 0
    %3853 = vmatprep.subr.mxu0 0.0
    %3854 = vmatpush1.msra.mxu0 %v3841
    %3855 = vmatprep.subr.mxu0 0.0
    %3856 = vmatpush1.msra.mxu0 %v3842
    %3857 = vmatprep.subr.mxu0 0.0
    %3858 = vmatpush1.msra.mxu0 %v3843
    %3859 = vmatprep.subr.mxu0 0.0
    %3860 = vmatpush1.msra.mxu0 %v3844
    %3861 = vmatprep.subr.mxu0 0.0
    %3862 = vmatpush1.msra.mxu0 0.0
    %3863 = vmatprep.subr.mxu0 0.0
    %3864 = vmatpush1.msra.mxu0 0.0
    %3865 = vmatprep.subr.mxu0 0.0
    %3866 = vmatpush1.msra.mxu0 0.0
    %3867 = vmatprep.subr.mxu0 0.0
    %3868 = vmatpush1.msra.mxu0 0.0
    %3869 = vmatprep.subr.mxu0 0.0
    %3870 = vmatpush1.msra.mxu0 0.0
    %3871 = vmatprep.subr.mxu0 0.0
    %3872 = vmatpush1.msra.mxu0 0.0
    %3873 = vmatprep.subr.mxu0 0.0
    %3874 = vmatpush1.msra.mxu0 0.0
    %3875 = vmatprep.subr.mxu0 0.0
    %3876 = vmatpush1.msra.mxu0 0.0
    %3877 = vmatprep.subr.mxu0 0.0
    %3878 = vmatpush1.msra.mxu0 0.0
    %3879 = vmatprep.subr.mxu0 0.0
    %3880 = vmatpush1.msra.mxu0 0.0
    %3881 = vmatprep.subr.mxu0 0.0
    %3882 = vmatpush1.msra.mxu0 0.0
    %3883 = vmatprep.subr.mxu0 0.0
    %3884 = vmatpush1.msra.mxu0 0.0
    %3885 = vmatprep.subr.mxu0 0.0
    %3886 = vmatpush1.msra.mxu0 0.0
    %3887 = vmatprep.subr.mxu0 0.0
    %3888 = vmatpush1.msra.mxu0 0.0
    %3889 = vmatprep.subr.mxu0 0.0
    %3890 = vmatpush1.msra.mxu0 0.0
    %3891 = vmatprep.subr.mxu0 0.0
    %3892 = vmatpush1.msra.mxu0 0.0
    %3893 = vmatprep.subr.mxu0 0.0
    %3894 = vmatpush1.msra.mxu0 0.0
    %3895 = vmatprep.subr.mxu0 0.0
    %3896 = vmatpush1.msra.mxu0 0.0
    %3897 = vmatprep.subr.mxu0 0.0
    %3898 = vmatpush1.msra.mxu0 0.0
    %3899 = vmatprep.subr.mxu0 0.0
    %3900 = vmatpush1.msra.mxu0 0.0
    %3901 = vmatprep.subr.mxu0 0.0
    %3902 = vmatpush1.msra.mxu0 0.0
    %3903 = vmatprep.subr.mxu0 0.0
    %3904 = vmatpush1.msra.mxu0 0.0
    %3905 = vmatprep.subr.mxu0 0.0
    %3906 = vmatpush1.msra.mxu0 0.0
    %3907 = vmatprep.subr.mxu0 0.0
    %3908 = vmatpush1.msra.mxu0 0.0
    %3909 = vmatprep.subr.mxu0 0.0
    %3910 = vmatpush1.msra.mxu0 0.0
    %3911 = vmatprep.subr.mxu0 0.0
    %3912 = vmatpush1.msra.mxu0 0.0
    %3913 = vmatprep.subr.mxu0 0.0
    %3914 = vmatpush1.msra.mxu0 0.0
    %3915 = vmatprep.subr.mxu0 0.0
    %3916 = vmatpush1.msra.mxu0 0.0
    %3917 = vmatprep.mubr.f32.mxu0 0.0
    %3918 = vmatmul.mubr.f32.gmra.mrb[0].mxu0 %v3851
    %v3919 = vpop.f32.mrb[0].mxu0
    %v3920 = vadd.f32 %v3849, %v3919
    %v3921 = vpop.f32.mrb[0].mxu0
    %3922 = vdwg.mxu0
    %v3923 = vmax.f32 %v3920, 0.0
    %vm3924 = vcmask 254976
    %3925 = vst.msk [vmem:[#allocation2] sm:$0x3] %vm3924, %v3923
    // Predicated region
    $region14: #{vit_encoder_forward.1} parent=1 // pred_check
      _
    $region15: #{vit_encoder_forward.1} parent=1 // pred_check_branch
      %3927 = sbr.rel (0) target = $region17
    $region16: #{vit_encoder_forward.1} parent=1 // pred_region
      %s3929 = ssub.s32 32, 32
      %3930 = vsyncadd [#allocation3], %s3929
      %s3932 = sshll.u32 [#allocation2], 4
      %s3933 = int_to_ptr.vmem [resolvable:$true] %s3932
      %3935 = dma.vmem_to_hbm [thread:$0]  %s3933, 32, %s3, [#allocation3]
    $region17: #{vit_encoder_forward.1} parent=1 // pred_fallthru
      _
    // Predicated region
    $region18: #{vit_encoder_forward.1} parent=1 // pred_check
      _
    $region19: #{vit_encoder_forward.1} parent=1 // pred_check_branch
      %3937 = sbr.rel (0) target = $region21
    $region20: #{vit_encoder_forward.1} parent=1 // pred_region
      %3938 = dma.done [#allocation3], 32
    $region21: #{vit_encoder_forward.1} parent=1 // pred_fallthru
      _
    %3939 = vsyncpa [#allocation3], 1

</llo_original>
